<compile_context>
chip_gen: v7x
topology: tpu7x:2x2x1
jax: 0.10.0
libtpu: 0.0.40
codegen_flags: <defaults>
</compile_context>

<pallas_src>
import functools

import jax
import jax.numpy as jnp
from jax import lax
from jax.experimental import pallas as pl
from jax.experimental.pallas import tpu as pltpu

EPS = 1e-5
BF16 = jnp.bfloat16


# ------------------------------------------------------------------
# Generation-aware compiler params (v7x has only 64 MiB physical VMEM).
# ------------------------------------------------------------------
def _vmem_limit_bytes():
    cap = None
    try:
        info = pltpu.get_tpu_info()
        cap = getattr(info, "vmem_capacity_bytes", None)
    except Exception:
        cap = None
    if not cap:
        cap = 64 * 1024 * 1024                     # conservative: v7x physical VMEM
    return max(32 * 1024 * 1024, min(3 * cap // 4, 96 * 1024 * 1024))


_VMEM_LIMIT = _vmem_limit_bytes()


def _cp(dims):
    return pltpu.CompilerParams(dimension_semantics=dims,
                                vmem_limit_bytes=_VMEM_LIMIT)


def _pick_tile(n, target, mult):
    """Largest divisor of n that is <= target and a multiple of `mult`
    (falls back to full-extent residency if none exists)."""
    if n <= target:
        return n
    t = (target // mult) * mult
    while t >= mult:
        if n % t == 0:
            return t
        t -= mult
    return n


# ------------------------------------------------------------------
# K12: fused  (z@W1+b1 -> BN -> *scale+shift -> ReLU) -> (h@W2+b2 -> BN -> ReLU)
#      gridded over N tiles of W2 ("parallel", BN1d stats are tile-local).
# ------------------------------------------------------------------
def fc_stack_kernel(z_ref, w1_ref, b1_ref, sc_ref, sh_ref,
                    w2_ref, b2_ref, g2_ref, be2_ref, o_ref):
    # Layer 1 (tiny: recomputed per N tile so grid steps stay independent).
    h = jnp.dot(z_ref[...], w1_ref[...], preferred_element_type=jnp.float32) + b1_ref[...]
    m = jnp.mean(h, axis=0, keepdims=True)
    v = jnp.mean((h - m) ** 2, axis=0, keepdims=True)           # biased, like PyTorch BN
    h = (h - m) * lax.rsqrt(v + EPS)
    h = jnp.maximum(h * sc_ref[...] + sh_ref[...], 0.0).astype(BF16)
    # Layer 2: this N tile of the big matmul, bf16 operands / f32 accumulation.
    h2 = jnp.dot(h, w2_ref[...], preferred_element_type=jnp.float32) + b2_ref[...]
    m2 = jnp.mean(h2, axis=0, keepdims=True)
    v2 = jnp.mean((h2 - m2) ** 2, axis=0, keepdims=True)
    h2 = (h2 - m2) * lax.rsqrt(v2 + EPS)
    o_ref[...] = jnp.maximum(h2 * g2_ref[...] + be2_ref[...], 0.0).astype(o_ref.dtype)


def fc_stack(z, w1, b1, scale, shift, w2, b2, g2, be2):
    B = z.shape[0]
    f2 = w2.shape[1]
    TN = _pick_tile(f2, 1024, 128)

    def full(a):
        shp = a.shape
        return pl.BlockSpec(shp, lambda j, _n=len(shp): (0,) * _n)

    def col(rows):
        return pl.BlockSpec((rows, TN), lambda j: (0, j))

    return pl.pallas_call(
        fc_stack_kernel,
        out_shape=jax.ShapeDtypeStruct((B, f2), BF16),
        grid=(f2 // TN,),
        in_specs=[full(z), full(w1), full(b1), full(scale), full(shift),
                  col(w2.shape[0]), col(1), col(1), col(1)],
        out_specs=col(B),
        compiler_params=_cp(("parallel",)),
    )(z, w1, b1, scale, shift, w2, b2, g2, be2)


# ------------------------------------------------------------------
# K3: one phase of ConvTranspose2d(Ci->Co,4,2,1): single (TM,4Ci)x(4Ci,Co) matmul
#     + bias.  BN2d is applied later (needs global stats).
# ------------------------------------------------------------------
def deconv_phase_kernel(p_ref, w_ref, b_ref, o_ref):
    acc = jnp.dot(p_ref[0], w_ref[0], preferred_element_type=jnp.float32) + b_ref[...]
    o_ref[0] = acc.astype(o_ref.dtype)


def deconv_phase(patches, w_ph, b):
    # patches: (4, M, 4*Ci) bf16 ; w_ph: (4, 4*Ci, Co) bf16 ; b: (1, Co) f32
    _, M, KC = patches.shape
    Co = w_ph.shape[2]
    TM = _pick_tile(M, 1024, 8)
    return pl.pallas_call(
        deconv_phase_kernel,
        out_shape=jax.ShapeDtypeStruct((4, M, Co), BF16),
        grid=(4, M // TM),
        in_specs=[pl.BlockSpec((1, TM, KC), lambda p, m: (p, m, 0)),
                  pl.BlockSpec((1, KC, Co), lambda p, m: (p, 0, 0)),
                  pl.BlockSpec((1, Co), lambda p, m: (0, 0))],
        out_specs=pl.BlockSpec((1, TM, Co), lambda p, m: (p, m, 0)),
        compiler_params=_cp(("parallel", "parallel")),
    )(patches, w_ph, b)


# ------------------------------------------------------------------
# K4: one phase of ConvTranspose2d(Ci->Co,4,2,1) + Tanh, channel-first layout so
#     the Co=output_dim output is lane-dense: out block = (Co, TM) with the
#     spatial/batch axis on the 128-lane axis (no masked partial stores).
# ------------------------------------------------------------------
def deconv_tanh_T_kernel(p_ref, w_ref, b_ref, o_ref):
    acc = jnp.dot(w_ref[0], p_ref[0], preferred_element_type=jnp.float32) + b_ref[...]
    o_ref[0] = jnp.tanh(acc)


def deconv_tanh_T(patches_t, w_t, b):
    # patches_t: (4, 4*Ci, M) bf16 ; w_t: (4, Co, 4*Ci) bf16 ; b: (Co, 1) f32
    _, KC, M = patches_t.shape
    Co = w_t.shape[1]
    TM = _pick_tile(M, 2048, 128)
    return pl.pallas_call(
        deconv_tanh_T_kernel,
        out_shape=jax.ShapeDtypeStruct((4, Co, M), jnp.float32),
        grid=(4, M // TM),
        in_specs=[pl.BlockSpec((1, KC, TM), lambda p, m: (p, 0, m)),
                  pl.BlockSpec((1, Co, KC), lambda p, m: (p, 0, 0)),
                  pl.BlockSpec((Co, 1), lambda p, m: (0, 0))],
        out_specs=pl.BlockSpec((1, Co, TM), lambda p, m: (p, 0, m)),
        compiler_params=_cp(("parallel", "parallel")),
    )(patches_t, w_t, b)


# ------------------------------------------------------------------
# Glue: 4-output-phase decomposition of ConvTranspose2d(k=4, s=2, p=1).
# Output pixel (2m+py, 2n+px) only touches a 2x2 input neighbourhood with kernel
# taps (3-py-2dy, 3-px-2dx) -> each phase is a stride-1 2x2 conv (folded to one
# K = 4*Ci contraction).  No zero-upsampled tensor is ever materialized.
# TODO(synk): form the shifted windows inside the kernel (static slices of the
# padded activation) to remove the remaining 4x-tap duplication in HBM.
# ------------------------------------------------------------------
def phase_patches(x):
    """x: (B,H,W,C) -> (4, B*H*W, 4*C), tap-major / channel-minor columns."""
    B, H, W, C = x.shape
    xp = jnp.pad(x, ((0, 0), (1, 1), (1, 1), (0, 0)))
    out = []
    for py in (0, 1):
        for px in (0, 1):
            taps = [xp[:, py + dy:py + dy + H, px + dx:px + dx + W, :]
                    for dy in (0, 1) for dx in (0, 1)]
            out.append(jnp.concatenate(taps, axis=-1).reshape(B * H * W, 4 * C))
    return jnp.stack(out, axis=0)


def phase_patches_T(x):
    """x: (B,H,W,C) -> (4, 4*C, B*H*W) channel-first (lane-dense output layout)."""
    B, H, W, C = x.shape
    xp = jnp.pad(x, ((0, 0), (1, 1), (1, 1), (0, 0)))
    out = []
    for py in (0, 1):
        for px in (0, 1):
            taps = [xp[:, py + dy:py + dy + H, px + dx:px + dx + W, :]
                    for dy in (0, 1) for dx in (0, 1)]
            t = jnp.stack(taps, axis=0)                      # (4, B, H, W, C)
            t = jnp.transpose(t, (0, 4, 1, 2, 3))            # (4, C, B, H, W)
            out.append(t.reshape(4 * C, B * H * W))
    return jnp.stack(out, axis=0)


def prep_phase_weight(w_t):
    """PyTorch ConvTranspose2d weight (Ci, Co, 4, 4) -> (4 phases, 4*Ci, Co)."""
    Ci, Co, K, _ = w_t.shape
    assert K == 4
    phases = []
    for py in (0, 1):
        for px in (0, 1):
            taps = [w_t[:, :, 3 - py - 2 * dy, 3 - px - 2 * dx]
                    for dy in (0, 1) for dx in (0, 1)]        # each (Ci, Co)
            phases.append(jnp.concatenate(taps, axis=0))      # (4*Ci, Co)
    return jnp.stack(phases, axis=0)


def assemble_phases_nhwc(y_ph, B, H, W, C):
    """(4, B*H*W, C) per-phase outputs -> (B, 2H, 2W, C)."""
    y = y_ph.reshape(2, 2, B, H, W, C)
    y = jnp.transpose(y, (2, 3, 0, 4, 1, 5))
    return y.reshape(B, 2 * H, 2 * W, C)


def assemble_phases_nchw_T(o_ph, B, H, W, C):
    """(4, C, B*H*W) channel-first per-phase outputs -> (B, C, 2H, 2W) (NCHW)."""
    o = o_ph.reshape(2, 2, C, B, H, W)
    o = jnp.transpose(o, (3, 2, 4, 0, 5, 1))
    return o.reshape(B, C, 2 * H, 2 * W)


# ------------------------------------------------------------------
# Generator forward
# ------------------------------------------------------------------
def generator_forward(kp, z, label, *, input_size, output_dim):
    B = z.shape[0]
    S4 = input_size // 4

    # Embedding lookups (glue).
    scale = jnp.take(kp["emb_scale"], label, axis=0)
    shift = jnp.take(kp["emb_shift"], label, axis=0)

    # K12: Linear+CBN+ReLU fused with Linear+BN1d+ReLU, N-tiled over f2.
    h2 = fc_stack(z.astype(BF16), kp["w1"], kp["b1"], scale, shift,
                  kp["w2"], kp["b2"], kp["g2"], kp["be2"])            # (B, f2) bf16

    # x.view(-1, 128, S4, S4) (NCHW) -> NHWC for the conv kernels.
    x = h2.reshape(B, 128, S4, S4).transpose(0, 2, 3, 1)              # (B,S4,S4,128)

    # deconv1: 4-phase transposed conv (pre-BN output in bf16).
    p1 = phase_patches(x)                                             # (4, B*S4*S4, 512)
    y_ph = deconv_phase(p1, kp["wt1"], kp["bt1"])                     # (4, B*S4*S4, 64)
    y = assemble_phases_nhwc(y_ph, B, S4, S4, 64)                     # (B, 2S4, 2S4, 64)

    # BatchNorm2d(64) training-mode stats + affine + ReLU (tiny elementwise glue).
    yf = y.astype(jnp.float32)
    mu = jnp.mean(yf, axis=(0, 1, 2))
    var = jnp.mean((yf - mu) ** 2, axis=(0, 1, 2))
    y = jnp.maximum((yf - mu) * lax.rsqrt(var + EPS) * kp["g3"] + kp["be3"], 0.0)
    y = y.astype(BF16)

    # deconv2 + Tanh, channel-first / lane-dense layout.
    p2 = phase_patches_T(y)                                           # (4, 256, M2)
    o_ph = deconv_tanh_T(p2, kp["wt2"], kp["bt2"])                    # (4, Co, M2) f32
    H2 = 2 * S4
    return assemble_phases_nchw_T(o_ph, B, H2, H2, output_dim)        # (B, Co, 4S4, 4S4)


# ------------------------------------------------------------------
# Parameters: raw (f32, PyTorch layout) + kernel-layout (bf16, phase-folded).
# ------------------------------------------------------------------
def init_raw_params(key, input_dim, output_dim, input_size, class_num):
    ks = jax.random.split(key, 8)
    S4 = input_size // 4
    f2 = 128 * S4 * S4
    r = {}
    r["w1"] = 0.02 * jax.random.normal(ks[0], (input_dim, 1024), jnp.float32)
    r["b1"] = jnp.zeros((1024,), jnp.float32)
    r["emb_scale"] = jax.random.normal(ks[1], (class_num, 1024), jnp.float32)
    r["emb_shift"] = 0.1 * jax.random.normal(ks[2], (class_num, 1024), jnp.float32)
    r["w2"] = 0.02 * jax.random.normal(ks[3], (1024, f2), jnp.float32)
    r["b2"] = jnp.zeros((f2,), jnp.float32)
    r["g2"] = 1.0 + 0.02 * jax.random.normal(ks[4], (f2,), jnp.float32)
    r["be2"] = jnp.zeros((f2,), jnp.float32)
    r["wt1"] = 0.02 * jax.random.normal(ks[5], (128, 64, 4, 4), jnp.float32)   # (Ci,Co,K,K)
    r["bt1"] = jnp.zeros((64,), jnp.float32)
    r["g3"] = 1.0 + 0.02 * jax.random.normal(ks[6], (64,), jnp.float32)
    r["be3"] = jnp.zeros((64,), jnp.float32)
    r["wt2"] = 0.02 * jax.random.normal(ks[7], (64, output_dim, 4, 4), jnp.float32)
    r["bt2"] = jnp.zeros((output_dim,), jnp.float32)
    return r


def prepare_kernel_params(r):
    kp = {}
    kp["w1"] = r["w1"].astype(BF16)
    kp["b1"] = r["b1"].reshape(1, -1)
    kp["emb_scale"] = r["emb_scale"]
    kp["emb_shift"] = r["emb_shift"]
    kp["w2"] = r["w2"].astype(BF16)
    kp["b2"] = r["b2"].reshape(1, -1)
    kp["g2"] = r["g2"].reshape(1, -1)
    kp["be2"] = r["be2"].reshape(1, -1)
    kp["wt1"] = prep_phase_weight(r["wt1"]).astype(BF16)                       # (4, 512, 64)
    kp["bt1"] = r["bt1"].reshape(1, -1)
    kp["g3"] = r["g3"]
    kp["be3"] = r["be3"]
    kp["wt2"] = jnp.transpose(prep_phase_weight(r["wt2"]), (0, 2, 1)).astype(BF16)  # (4, Co, 256)
    kp["bt2"] = r["bt2"].reshape(-1, 1)                                        # (Co, 1)
    return kp


# ------------------------------------------------------------------
# Pure-JAX reference with the same bf16/f32 mixed precision (numerical self-check).
# ------------------------------------------------------------------
def reference_forward(raw, z, label, *, input_size, output_dim):
    def bn_cols(h):
        m = h.mean(0)
        v = ((h - m) ** 2).mean(0)
        return (h - m) * lax.rsqrt(v + EPS)

    scale = raw["emb_scale"][label]
    shift = raw["emb_shift"][label]
    h = jnp.dot(z.astype(BF16), raw["w1"].astype(BF16),
                preferred_element_type=jnp.float32) + raw["b1"]
    h = jnp.maximum(bn_cols(h) * scale + shift, 0.0).astype(BF16)
    h2 = jnp.dot(h, raw["w2"].astype(BF16),
                 preferred_element_type=jnp.float32) + raw["b2"]
    h2 = jnp.maximum(bn_cols(h2) * raw["g2"] + raw["be2"], 0.0).astype(BF16)

    S4 = input_size // 4
    x = h2.reshape(-1, 128, S4, S4).transpose(0, 2, 3, 1)

    def convT(x_nhwc, w_t, b):
        wf = jnp.transpose(jnp.flip(w_t, (2, 3)), (2, 3, 0, 1)).astype(BF16)   # HWIO
        y = lax.conv_general_dilated(
            x_nhwc, wf, window_strides=(1, 1), padding=[(2, 2), (2, 2)],
            lhs_dilation=(2, 2), dimension_numbers=("NHWC", "HWIO", "NHWC"),
            preferred_element_type=jnp.float32)
        return y + b

    y = convT(x, raw["wt1"], raw["bt1"]).astype(BF16)
    yf = y.astype(jnp.float32)
    m = yf.mean((0, 1, 2))
    v = ((yf - m) ** 2).mean((0, 1, 2))
    y = jnp.maximum((yf - m) * lax.rsqrt(v + EPS) * raw["g3"] + raw["be3"], 0.0).astype(BF16)
    o = jnp.tanh(convT(y, raw["wt2"], raw["bt2"]))
    return o.transpose(0, 3, 1, 2)


if __name__ == "__main__":
    # Generator(input_dim=32, output_dim=1, input_size=16, class_num=10); batch=4.
    INPUT_DIM, OUTPUT_DIM, INPUT_SIZE, CLASS_NUM, BATCH = 32, 1, 16, 10, 4

    key = jax.random.PRNGKey(0)
    k_p, k_z, k_l = jax.random.split(key, 3)
    raw = init_raw_params(k_p, INPUT_DIM, OUTPUT_DIM, INPUT_SIZE, CLASS_NUM)
    kparams = prepare_kernel_params(raw)
    z = jax.random.normal(k_z, (BATCH, INPUT_DIM), jnp.float32)
    label = jax.random.randint(k_l, (BATCH,), 0, CLASS_NUM, jnp.int32)

    fwd = jax.jit(functools.partial(generator_forward,
                                    input_size=INPUT_SIZE, output_dim=OUTPUT_DIM))
    out = jax.block_until_ready(fwd(kparams, z, label))
    assert out.shape == (BATCH, OUTPUT_DIM, INPUT_SIZE, INPUT_SIZE), out.shape

    ref = reference_forward(raw, z, label, input_size=INPUT_SIZE, output_dim=OUTPUT_DIM)
    err = float(jnp.max(jnp.abs(out - ref.astype(jnp.float32))))
    assert err < 1e-2, f"max abs error too large: {err}"

    print("KERNEL_OK")
</pallas_src>

<mosaic_0001>
module attributes {stable_mosaic.version = 11 : i64} {
  func.func @fc_stack_kernel(%arg0: i32, %arg1: memref<4x32xbf16, #tpu.memory_space<vmem>>, %arg2: memref<32x1024xbf16, #tpu.memory_space<vmem>>, %arg3: memref<1x1024xf32, #tpu.memory_space<vmem>>, %arg4: memref<4x1024xf32, #tpu.memory_space<vmem>>, %arg5: memref<4x1024xf32, #tpu.memory_space<vmem>>, %arg6: memref<1024x1024xbf16, #tpu.memory_space<vmem>>, %arg7: memref<1x1024xf32, #tpu.memory_space<vmem>>, %arg8: memref<1x1024xf32, #tpu.memory_space<vmem>>, %arg9: memref<1x1024xf32, #tpu.memory_space<vmem>>, %arg10: memref<4x1024xbf16, #tpu.memory_space<vmem>>) attributes {dimension_semantics = [#tpu.dimension_semantics<parallel>], iteration_bounds = array<i64: 2>, scalar_prefetch = 0 : i64, scratch_operands = 0 : i64, tpu.core_type = #tpu.core_type<tc>, window_params = [{pipeline_mode = #tpu.pipeline_mode<synchronous>, transform_indices = @transform_0, window_bounds = array<i64: 4, 32>}, {pipeline_mode = #tpu.pipeline_mode<synchronous>, transform_indices = @transform_1, window_bounds = array<i64: 32, 1024>}, {pipeline_mode = #tpu.pipeline_mode<synchronous>, transform_indices = @transform_2, window_bounds = array<i64: 1, 1024>}, {pipeline_mode = #tpu.pipeline_mode<synchronous>, transform_indices = @transform_3, window_bounds = array<i64: 4, 1024>}, {pipeline_mode = #tpu.pipeline_mode<synchronous>, transform_indices = @transform_4, window_bounds = array<i64: 4, 1024>}, {transform_indices = @transform_5, window_bounds = array<i64: 1024, 1024>}, {transform_indices = @transform_6, window_bounds = array<i64: 1, 1024>}, {transform_indices = @transform_7, window_bounds = array<i64: 1, 1024>}, {transform_indices = @transform_8, window_bounds = array<i64: 1, 1024>}, {transform_indices = @transform_9, window_bounds = array<i64: 4, 1024>}]} {
    %c0 = arith.constant 0 : index
    %c0_0 = arith.constant 0 : index
    %0 = vector.load %arg1[%c0, %c0_0] : memref<4x32xbf16, #tpu.memory_space<vmem>>, vector<4x32xbf16>
    %c0_1 = arith.constant 0 : index
    %c0_2 = arith.constant 0 : index
    %1 = vector.load %arg2[%c0_1, %c0_2] : memref<32x1024xbf16, #tpu.memory_space<vmem>>, vector<32x1024xbf16>
    %cst = arith.constant dense<0.000000e+00> : vector<4x1024xf32>
    %2 = tpu.matmul %0, %1, %cst {dimension_numbers = #tpu.dot_dimension_numbers<[1], [0], [0], [1], [0, 0, 1, 1], [], []>} : vector<4x32xbf16>, vector<32x1024xbf16>, vector<4x1024xf32> -> vector<4x1024xf32>
    %c0_3 = arith.constant 0 : index
    %c0_4 = arith.constant 0 : index
    %3 = vector.load %arg3[%c0_3, %c0_4] : memref<1x1024xf32, #tpu.memory_space<vmem>>, vector<1x1024xf32>
    %4 = vector.broadcast %3 : vector<1x1024xf32> to vector<4x1024xf32>
    %5 = arith.addf %2, %4 : vector<4x1024xf32>
    %cst_5 = arith.constant dense<0.000000e+00> : vector<1024xf32>
    %6 = vector.multi_reduction <add>, %5, %cst_5 [0] : vector<4x1024xf32> to vector<1024xf32>
    %7 = vector.shape_cast %6 : vector<1024xf32> to vector<1x1024xf32>
    %cst_6 = arith.constant 4.000000e+00 : f32
    %8 = vector.broadcast %cst_6 : f32 to vector<1x1024xf32>
    %9 = arith.divf %7, %8 : vector<1x1024xf32>
    %10 = vector.broadcast %9 : vector<1x1024xf32> to vector<4x1024xf32>
    %11 = arith.subf %5, %10 : vector<4x1024xf32>
    %12 = arith.mulf %11, %11 : vector<4x1024xf32>
    %cst_7 = arith.constant dense<0.000000e+00> : vector<1024xf32>
    %13 = vector.multi_reduction <add>, %12, %cst_7 [0] : vector<4x1024xf32> to vector<1024xf32>
    %14 = vector.shape_cast %13 : vector<1024xf32> to vector<1x1024xf32>
    %cst_8 = arith.constant 4.000000e+00 : f32
    %15 = vector.broadcast %cst_8 : f32 to vector<1x1024xf32>
    %16 = arith.divf %14, %15 : vector<1x1024xf32>
    %17 = vector.broadcast %9 : vector<1x1024xf32> to vector<4x1024xf32>
    %18 = arith.subf %5, %17 : vector<4x1024xf32>
    %cst_9 = arith.constant 9.99999974E-6 : f32
    %19 = vector.broadcast %cst_9 : f32 to vector<1x1024xf32>
    %20 = arith.addf %16, %19 : vector<1x1024xf32>
    %21 = math.rsqrt %20 : vector<1x1024xf32>
    %22 = vector.broadcast %21 : vector<1x1024xf32> to vector<4x1024xf32>
    %23 = arith.mulf %18, %22 : vector<4x1024xf32>
    %c0_10 = arith.constant 0 : index
    %c0_11 = arith.constant 0 : index
    %24 = vector.load %arg4[%c0_10, %c0_11] : memref<4x1024xf32, #tpu.memory_space<vmem>>, vector<4x1024xf32>
    %25 = arith.mulf %23, %24 : vector<4x1024xf32>
    %c0_12 = arith.constant 0 : index
    %c0_13 = arith.constant 0 : index
    %26 = vector.load %arg5[%c0_12, %c0_13] : memref<4x1024xf32, #tpu.memory_space<vmem>>, vector<4x1024xf32>
    %27 = arith.addf %25, %26 : vector<4x1024xf32>
    %cst_14 = arith.constant 0.000000e+00 : f32
    %28 = vector.broadcast %cst_14 : f32 to vector<4x1024xf32>
    %29 = arith.maximumf %27, %28 : vector<4x1024xf32>
    %30 = arith.truncf %29 : vector<4x1024xf32> to vector<4x1024xbf16>
    %c0_15 = arith.constant 0 : index
    %c0_16 = arith.constant 0 : index
    %31 = vector.load %arg6[%c0_15, %c0_16] : memref<1024x1024xbf16, #tpu.memory_space<vmem>>, vector<1024x1024xbf16>
    %cst_17 = arith.constant dense<0.000000e+00> : vector<4x1024xf32>
    %32 = tpu.matmul %30, %31, %cst_17 {dimension_numbers = #tpu.dot_dimension_numbers<[1], [0], [0], [1], [0, 0, 1, 1], [], []>} : vector<4x1024xbf16>, vector<1024x1024xbf16>, vector<4x1024xf32> -> vector<4x1024xf32>
    %c0_18 = arith.constant 0 : index
    %c0_19 = arith.constant 0 : index
    %33 = vector.load %arg7[%c0_18, %c0_19] : memref<1x1024xf32, #tpu.memory_space<vmem>>, vector<1x1024xf32>
    %34 = vector.broadcast %33 : vector<1x1024xf32> to vector<4x1024xf32>
    %35 = arith.addf %32, %34 : vector<4x1024xf32>
    %cst_20 = arith.constant dense<0.000000e+00> : vector<1024xf32>
    %36 = vector.multi_reduction <add>, %35, %cst_20 [0] : vector<4x1024xf32> to vector<1024xf32>
    %37 = vector.shape_cast %36 : vector<1024xf32> to vector<1x1024xf32>
    %cst_21 = arith.constant 4.000000e+00 : f32
    %38 = vector.broadcast %cst_21 : f32 to vector<1x1024xf32>
    %39 = arith.divf %37, %38 : vector<1x1024xf32>
    %40 = vector.broadcast %39 : vector<1x1024xf32> to vector<4x1024xf32>
    %41 = arith.subf %35, %40 : vector<4x1024xf32>
    %42 = arith.mulf %41, %41 : vector<4x1024xf32>
    %cst_22 = arith.constant dense<0.000000e+00> : vector<1024xf32>
    %43 = vector.multi_reduction <add>, %42, %cst_22 [0] : vector<4x1024xf32> to vector<1024xf32>
    %44 = vector.shape_cast %43 : vector<1024xf32> to vector<1x1024xf32>
    %cst_23 = arith.constant 4.000000e+00 : f32
    %45 = vector.broadcast %cst_23 : f32 to vector<1x1024xf32>
    %46 = arith.divf %44, %45 : vector<1x1024xf32>
    %47 = vector.broadcast %39 : vector<1x1024xf32> to vector<4x1024xf32>
    %48 = arith.subf %35, %47 : vector<4x1024xf32>
    %cst_24 = arith.constant 9.99999974E-6 : f32
    %49 = vector.broadcast %cst_24 : f32 to vector<1x1024xf32>
    %50 = arith.addf %46, %49 : vector<1x1024xf32>
    %51 = math.rsqrt %50 : vector<1x1024xf32>
    %52 = vector.broadcast %51 : vector<1x1024xf32> to vector<4x1024xf32>
    %53 = arith.mulf %48, %52 : vector<4x1024xf32>
    %c0_25 = arith.constant 0 : index
    %c0_26 = arith.constant 0 : index
    %54 = vector.load %arg8[%c0_25, %c0_26] : memref<1x1024xf32, #tpu.memory_space<vmem>>, vector<1x1024xf32>
    %55 = vector.broadcast %54 : vector<1x1024xf32> to vector<4x1024xf32>
    %56 = arith.mulf %53, %55 : vector<4x1024xf32>
    %c0_27 = arith.constant 0 : index
    %c0_28 = arith.constant 0 : index
    %57 = vector.load %arg9[%c0_27, %c0_28] : memref<1x1024xf32, #tpu.memory_space<vmem>>, vector<1x1024xf32>
    %58 = vector.broadcast %57 : vector<1x1024xf32> to vector<4x1024xf32>
    %59 = arith.addf %56, %58 : vector<4x1024xf32>
    %cst_29 = arith.constant 0.000000e+00 : f32
    %60 = vector.broadcast %cst_29 : f32 to vector<4x1024xf32>
    %61 = arith.maximumf %59, %60 : vector<4x1024xf32>
    %62 = arith.truncf %61 : vector<4x1024xf32> to vector<4x1024xbf16>
    %c0_30 = arith.constant 0 : index
    %c0_31 = arith.constant 0 : index
    %63 = vector.load %arg10[%c0_30, %c0_31] : memref<4x1024xbf16, #tpu.memory_space<vmem>>, vector<4x1024xbf16>
    tpu.vector_store %arg10[%c0_30, %c0_31], %62 {strides = array<i32>} : memref<4x1024xbf16, #tpu.memory_space<vmem>>, vector<4x1024xbf16>,
    return
  }
  func.func @transform_0(%arg0: i32) -> (i32, i32) {
    %c0_i32 = arith.constant 0 : i32
    %c0_i32_0 = arith.constant 0 : i32
    %c0_i32_1 = arith.constant 0 : i32
    return %c0_i32, %c0_i32_0 : i32, i32
  }
  func.func @transform_1(%arg0: i32) -> (i32, i32) {
    %c0_i32 = arith.constant 0 : i32
    %c0_i32_0 = arith.constant 0 : i32
    %c0_i32_1 = arith.constant 0 : i32
    return %c0_i32, %c0_i32_0 : i32, i32
  }
  func.func @transform_2(%arg0: i32) -> (i32, i32) {
    %c0_i32 = arith.constant 0 : i32
    %c0_i32_0 = arith.constant 0 : i32
    %c0_i32_1 = arith.constant 0 : i32
    return %c0_i32, %c0_i32_0 : i32, i32
  }
  func.func @transform_3(%arg0: i32) -> (i32, i32) {
    %c0_i32 = arith.constant 0 : i32
    %c0_i32_0 = arith.constant 0 : i32
    %c0_i32_1 = arith.constant 0 : i32
    return %c0_i32, %c0_i32_0 : i32, i32
  }
  func.func @transform_4(%arg0: i32) -> (i32, i32) {
    %c0_i32 = arith.constant 0 : i32
    %c0_i32_0 = arith.constant 0 : i32
    %c0_i32_1 = arith.constant 0 : i32
    return %c0_i32, %c0_i32_0 : i32, i32
  }
  func.func @transform_5(%arg0: i32) -> (i32, i32) {
    %c0_i32 = arith.constant 0 : i32
    %c0_i32_0 = arith.constant 0 : i32
    return %c0_i32, %arg0 : i32, i32
  }
  func.func @transform_6(%arg0: i32) -> (i32, i32) {
    %c0_i32 = arith.constant 0 : i32
    %c0_i32_0 = arith.constant 0 : i32
    return %c0_i32, %arg0 : i32, i32
  }
  func.func @transform_7(%arg0: i32) -> (i32, i32) {
    %c0_i32 = arith.constant 0 : i32
    %c0_i32_0 = arith.constant 0 : i32
    return %c0_i32, %arg0 : i32, i32
  }
  func.func @transform_8(%arg0: i32) -> (i32, i32) {
    %c0_i32 = arith.constant 0 : i32
    %c0_i32_0 = arith.constant 0 : i32
    return %c0_i32, %arg0 : i32, i32
  }
  func.func @transform_9(%arg0: i32) -> (i32, i32) {
    %c0_i32 = arith.constant 0 : i32
    %c0_i32_0 = arith.constant 0 : i32
    return %c0_i32, %arg0 : i32, i32
  }
}

module attributes {stable_mosaic.version = 11 : i64} {
  func.func @deconv_phase_kernel(%arg0: i32, %arg1: i32, %arg2: memref<1x64x512xbf16, #tpu.memory_space<vmem>>, %arg3: memref<1x512x64xbf16, #tpu.memory_space<vmem>>, %arg4: memref<1x64xf32, #tpu.memory_space<vmem>>, %arg5: memref<1x64x64xbf16, #tpu.memory_space<vmem>>) attributes {dimension_semantics = [#tpu.dimension_semantics<parallel>, #tpu.dimension_semantics<parallel>], iteration_bounds = array<i64: 4, 1>, scalar_prefetch = 0 : i64, scratch_operands = 0 : i64, tpu.core_type = #tpu.core_type<tc>, window_params = [{transform_indices = @transform_0, window_bounds = array<i64: 1, 64, 512>}, {transform_indices = @transform_1, window_bounds = array<i64: 1, 512, 64>}, {pipeline_mode = #tpu.pipeline_mode<synchronous>, transform_indices = @transform_2, window_bounds = array<i64: 1, 64>}, {transform_indices = @transform_3, window_bounds = array<i64: 1, 64, 64>}]} {
    %c0 = arith.constant 0 : index
    %c0_0 = arith.constant 0 : index
    %c0_1 = arith.constant 0 : index
    %0 = vector.load %arg2[%c0, %c0_0, %c0_1] : memref<1x64x512xbf16, #tpu.memory_space<vmem>>, vector<1x64x512xbf16>
    %1 = vector.shape_cast %0 : vector<1x64x512xbf16> to vector<64x512xbf16>
    %c0_2 = arith.constant 0 : index
    %c0_3 = arith.constant 0 : index
    %c0_4 = arith.constant 0 : index
    %2 = vector.load %arg3[%c0_2, %c0_3, %c0_4] : memref<1x512x64xbf16, #tpu.memory_space<vmem>>, vector<1x512x64xbf16>
    %3 = vector.shape_cast %2 : vector<1x512x64xbf16> to vector<512x64xbf16>
    %cst = arith.constant dense<0.000000e+00> : vector<64x64xf32>
    %4 = tpu.matmul %1, %3, %cst {dimension_numbers = #tpu.dot_dimension_numbers<[1], [0], [0], [1], [0, 0, 1, 1], [], []>} : vector<64x512xbf16>, vector<512x64xbf16>, vector<64x64xf32> -> vector<64x64xf32>
    %c0_5 = arith.constant 0 : index
    %c0_6 = arith.constant 0 : index
    %5 = vector.load %arg4[%c0_5, %c0_6] : memref<1x64xf32, #tpu.memory_space<vmem>>, vector<1x64xf32>
    %6 = vector.broadcast %5 : vector<1x64xf32> to vector<64x64xf32>
    %7 = arith.addf %4, %6 : vector<64x64xf32>
    %8 = arith.truncf %7 : vector<64x64xf32> to vector<64x64xbf16>
    %c0_7 = arith.constant 0 : index
    %c0_8 = arith.constant 0 : index
    %c0_9 = arith.constant 0 : index
    %9 = vector.load %arg5[%c0_7, %c0_8, %c0_9] : memref<1x64x64xbf16, #tpu.memory_space<vmem>>, vector<1x64x64xbf16>
    %10 = vector.shape_cast %9 : vector<1x64x64xbf16> to vector<64x64xbf16>
    %11 = vector.shape_cast %8 : vector<64x64xbf16> to vector<1x64x64xbf16>
    tpu.vector_store %arg5[%c0_7, %c0_8, %c0_9], %11 {strides = array<i32>} : memref<1x64x64xbf16, #tpu.memory_space<vmem>>, vector<1x64x64xbf16>,
    return
  }
  func.func @transform_0(%arg0: i32, %arg1: i32) -> (i32, i32, i32) {
    %c0_i32 = arith.constant 0 : i32
    %c0_i32_0 = arith.constant 0 : i32
    return %arg0, %arg1, %c0_i32 : i32, i32, i32
  }
  func.func @transform_1(%arg0: i32, %arg1: i32) -> (i32, i32, i32) {
    %c0_i32 = arith.constant 0 : i32
    %c0_i32_0 = arith.constant 0 : i32
    %c0_i32_1 = arith.constant 0 : i32
    return %arg0, %c0_i32, %c0_i32_0 : i32, i32, i32
  }
  func.func @transform_2(%arg0: i32, %arg1: i32) -> (i32, i32) {
    %c0_i32 = arith.constant 0 : i32
    %c0_i32_0 = arith.constant 0 : i32
    %c0_i32_1 = arith.constant 0 : i32
    return %c0_i32, %c0_i32_0 : i32, i32
  }
  func.func @transform_3(%arg0: i32, %arg1: i32) -> (i32, i32, i32) {
    %c0_i32 = arith.constant 0 : i32
    %c0_i32_0 = arith.constant 0 : i32
    return %arg0, %arg1, %c0_i32 : i32, i32, i32
  }
}

module attributes {stable_mosaic.version = 11 : i64} {
  func.func @deconv_tanh_T_kernel(%arg0: i32, %arg1: i32, %arg2: memref<1x256x256xbf16, #tpu.memory_space<vmem>>, %arg3: memref<1x1x256xbf16, #tpu.memory_space<vmem>>, %arg4: memref<1x1xf32, #tpu.memory_space<vmem>>, %arg5: memref<1x1x256xf32, #tpu.memory_space<vmem>>) attributes {dimension_semantics = [#tpu.dimension_semantics<parallel>, #tpu.dimension_semantics<parallel>], iteration_bounds = array<i64: 4, 1>, scalar_prefetch = 0 : i64, scratch_operands = 0 : i64, tpu.core_type = #tpu.core_type<tc>, window_params = [{transform_indices = @transform_0, window_bounds = array<i64: 1, 256, 256>}, {transform_indices = @transform_1, window_bounds = array<i64: 1, 1, 256>}, {pipeline_mode = #tpu.pipeline_mode<synchronous>, transform_indices = @transform_2, window_bounds = array<i64: 1, 1>}, {transform_indices = @transform_3, window_bounds = array<i64: 1, 1, 256>}]} {
    %c0 = arith.constant 0 : index
    %c0_0 = arith.constant 0 : index
    %c0_1 = arith.constant 0 : index
    %0 = vector.load %arg3[%c0, %c0_0, %c0_1] : memref<1x1x256xbf16, #tpu.memory_space<vmem>>, vector<1x1x256xbf16>
    %1 = vector.shape_cast %0 : vector<1x1x256xbf16> to vector<1x256xbf16>
    %c0_2 = arith.constant 0 : index
    %c0_3 = arith.constant 0 : index
    %c0_4 = arith.constant 0 : index
    %2 = vector.load %arg2[%c0_2, %c0_3, %c0_4] : memref<1x256x256xbf16, #tpu.memory_space<vmem>>, vector<1x256x256xbf16>
    %3 = vector.shape_cast %2 : vector<1x256x256xbf16> to vector<256x256xbf16>
    %cst = arith.constant dense<0.000000e+00> : vector<1x256xf32>
    %4 = tpu.matmul %1, %3, %cst {dimension_numbers = #tpu.dot_dimension_numbers<[1], [0], [0], [1], [0, 0, 1, 1], [], []>} : vector<1x256xbf16>, vector<256x256xbf16>, vector<1x256xf32> -> vector<1x256xf32>
    %c0_5 = arith.constant 0 : index
    %c0_6 = arith.constant 0 : index
    %5 = vector.load %arg4[%c0_5, %c0_6] : memref<1x1xf32, #tpu.memory_space<vmem>>, vector<1x1xf32>
    %6 = vector.broadcast %5 : vector<1x1xf32> to vector<1x256xf32>
    %7 = arith.addf %4, %6 : vector<1x256xf32>
    %8 = math.tanh %7 : vector<1x256xf32>
    %c0_7 = arith.constant 0 : index
    %c0_8 = arith.constant 0 : index
    %c0_9 = arith.constant 0 : index
    %9 = vector.load %arg5[%c0_7, %c0_8, %c0_9] : memref<1x1x256xf32, #tpu.memory_space<vmem>>, vector<1x1x256xf32>
    %10 = vector.shape_cast %9 : vector<1x1x256xf32> to vector<1x256xf32>
    %11 = vector.shape_cast %8 : vector<1x256xf32> to vector<1x1x256xf32>
    tpu.vector_store %arg5[%c0_7, %c0_8, %c0_9], %11 {strides = array<i32>} : memref<1x1x256xf32, #tpu.memory_space<vmem>>, vector<1x1x256xf32>,
    return
  }
  func.func @transform_0(%arg0: i32, %arg1: i32) -> (i32, i32, i32) {
    %c0_i32 = arith.constant 0 : i32
    %c0_i32_0 = arith.constant 0 : i32
    return %arg0, %c0_i32, %arg1 : i32, i32, i32
  }
  func.func @transform_1(%arg0: i32, %arg1: i32) -> (i32, i32, i32) {
    %c0_i32 = arith.constant 0 : i32
    %c0_i32_0 = arith.constant 0 : i32
    %c0_i32_1 = arith.constant 0 : i32
    return %arg0, %c0_i32, %c0_i32_0 : i32, i32, i32
  }
  func.func @transform_2(%arg0: i32, %arg1: i32) -> (i32, i32) {
    %c0_i32 = arith.constant 0 : i32
    %c0_i32_0 = arith.constant 0 : i32
    %c0_i32_1 = arith.constant 0 : i32
    return %c0_i32, %c0_i32_0 : i32, i32
  }
  func.func @transform_3(%arg0: i32, %arg1: i32) -> (i32, i32, i32) {
    %c0_i32 = arith.constant 0 : i32
    %c0_i32_0 = arith.constant 0 : i32
    return %arg0, %c0_i32, %arg1 : i32, i32, i32
  }
}

</mosaic_0001>

<llo_original>
// kernel: generator_forward.3
$region0: #{generator_forward.3}
  #allocation0 [shape = 'u32[]', space=smem, size = 0x4, offset = 0x4, fixed_abs, tag = 'smem constant byte address 0x4 - core index']
  #allocation1 [shape = 'u32[144,128]{1,0:T(1,128)}', space=vmem, size = 0x12000, scoped, tag = 'internal scratch']
  %s0 = inlined_call_operand.vmem [shape: bf16[4,32], index: 0, kind: input, shape index: {}]
  %s1 = inlined_call_operand.hbm [shape: bf16[32,1024], index: 1, kind: input, shape index: {}]
  %s2 = inlined_call_operand.hbm [shape: f32[1,1024], index: 2, kind: input, shape index: {}]
  %s3 = inlined_call_operand.vmem [shape: f32[4,1024], index: 3, kind: input, shape index: {}]
  %s4 = inlined_call_operand.vmem [shape: f32[4,1024], index: 4, kind: input, shape index: {}]
  %s5 = inlined_call_operand.hbm [shape: bf16[1024,2048], index: 5, kind: input, shape index: {}]
  %s6 = inlined_call_operand.hbm [shape: f32[1,2048], index: 6, kind: input, shape index: {}]
  %s7 = inlined_call_operand.hbm [shape: f32[1,2048], index: 7, kind: input, shape index: {}]
  %s8 = inlined_call_operand.hbm [shape: f32[1,2048], index: 8, kind: input, shape index: {}]
  %s9 = inlined_call_operand.vmem [shape: bf16[4,2048], index: 9, kind: output, shape index: {}]
  %s10 = sld [smem:[#allocation0]]
  $region93: #{generator_forward.3} parent=0
    _
  %s12 = ssub.s32 1, %s10
  %s13 = scalar_select 0, %s12, %s10
  $region1: #{generator_forward.3} parent=0
    #allocation2 [shape = 'u8[65536]{0}', space=vmem, size = 0x10000, scoped, tag = 'input window, operand 1, single buffered']
    #allocation3 [shape = 's32[2]{0}', space=sflag, size = 0x8, scoped, tag = 'scoped memory for generator_forward.3']
    #allocation4 [shape = 'u8[4096]{0}', space=vmem, size = 0x1000, scoped, tag = 'input window, operand 2, single buffered']
    #allocation5 [shape = 's32[1]{0}', space=sflag, size = 0x4, scoped, tag = 'scoped memory for generator_forward.3']
    #allocation6 [shape = 'u8[4194304]{0}', space=vmem, size = 0x400000, scoped, tag = 'input window, operand 5']
    #allocation7 [shape = 'u8[8192]{0}', space=vmem, size = 0x2000, scoped, tag = 'input window, operand 6']
    #allocation8 [shape = 'u8[8192]{0}', space=vmem, size = 0x2000, scoped, tag = 'input window, operand 7']
    #allocation9 [shape = 'u8[8192]{0}', space=vmem, size = 0x2000, scoped, tag = 'input window, operand 8']
    %14 = vsyncpa [#allocation3], 0
    %15 = vsyncpa [#allocation5], 0
    loop: start=0, step=1, limit=4
    $region2: #{generator_forward.3} parent=1 // loop_pre_header
      _
    $region3: #{generator_forward.3} parent=1 // loop_header
      %s17 = sphi 0, %s21
      %p18 = scmp.ge.s32.totalorder %s17, 4
      %s25 = sphi 0, %s25
      %s27 = sphi 0, %s25
      %s28 = sphi 0, %s27
      %s42 = sphi 0, %s28
      %s46 = sphi 0, %s46
      %s48 = sphi 0, %s46
      %s49 = sphi 0, %s48
      %s63 = sphi 0, %s49
      %s67 = sphi 0, %s67
      %s69 = sphi 0, %s67
      %s70 = sphi 0, %s69
      %s84 = sphi 0, %s70
      %s88 = sphi 0, %s88
      %s90 = sphi 0, %s88
      %s91 = sphi 0, %s90
      %s105 = sphi 0, %s91
      %s109 = sphi 0, %s109
      %s111 = sphi 0, %s109
      %s112 = sphi 0, %s111
      %s126 = sphi 0, %s112
      %s132 = sphi 0, %s134
      %s135 = sphi 0, %s132
      %s136 = sphi 0, %s135
      %s152 = sphi 0, %s136
      %s158 = sphi 0, %s160
      %s161 = sphi 0, %s158
      %s162 = sphi 0, %s161
      %s178 = sphi 0, %s162
      %s184 = sphi 0, %s186
      %s187 = sphi 0, %s184
      %s188 = sphi 0, %s187
      %s204 = sphi 0, %s188
      %s210 = sphi 0, %s212
      %s213 = sphi 0, %s210
      %s214 = sphi 0, %s213
      %s230 = sphi 0, %s214
      %s236 = sphi 0, %s238
      %s239 = sphi 0, %s236
      %s240 = sphi 0, %s239
      %s256 = sphi 0, %s240
    $region4: #{generator_forward.3} parent=1 // loop_header_branch
      %20 = sbr.rel (%p18) target = $region8
    $region5: #{generator_forward.3} parent=1 // loop_body
      %s22 = ssub.s32 %s17, 1
      %s23 = ssub.s32 %s17, 2
      %s24 = sadd.s32 %s17, 1
      %s26 = sadd.s32 %s25, 1
      %p29 = scmp.eq.s32.totalorder %s17, 1
      %p30 = scmp.ne.s32.totalorder %s25, %s27
      %p31 = scmp.eq.s32.totalorder %s17, 0
      %p32 = por %p30, %p31
      %p33 = scmp.ne.s32.totalorder %s25, %s27
      %p34 = scmp.eq.s32.totalorder %s22, 1
      %p35 = por %p33, %p34
      %p36 = scmp.ne.s32.totalorder %s27, %s28
      %p37 = scmp.eq.s32.totalorder %s22, 0
      %p38 = por %p36, %p37
      %p39 = scmp.ne.s32.totalorder %s27, %s28
      %p40 = scmp.eq.s32.totalorder %s23, 1
      %p41 = por %p39, %p40
      %p43 = scmp.ne.s32.totalorder %s28, %s42
      %p44 = scmp.eq.s32.totalorder %s23, 0
      %p45 = por %p43, %p44
      %s47 = sadd.s32 %s46, 1
      %p50 = scmp.eq.s32.totalorder %s17, 1
      %p51 = scmp.ne.s32.totalorder %s46, %s48
      %p52 = scmp.eq.s32.totalorder %s17, 0
      %p53 = por %p51, %p52
      %p54 = scmp.ne.s32.totalorder %s46, %s48
      %p55 = scmp.eq.s32.totalorder %s22, 1
      %p56 = por %p54, %p55
      %p57 = scmp.ne.s32.totalorder %s48, %s49
      %p58 = scmp.eq.s32.totalorder %s22, 0
      %p59 = por %p57, %p58
      %p60 = scmp.ne.s32.totalorder %s48, %s49
      %p61 = scmp.eq.s32.totalorder %s23, 1
      %p62 = por %p60, %p61
      %p64 = scmp.ne.s32.totalorder %s49, %s63
      %p65 = scmp.eq.s32.totalorder %s23, 0
      %p66 = por %p64, %p65
      %s68 = sadd.s32 %s67, 1
      %p71 = scmp.eq.s32.totalorder %s17, 1
      %p72 = scmp.ne.s32.totalorder %s67, %s69
      %p73 = scmp.eq.s32.totalorder %s17, 0
      %p74 = por %p72, %p73
      %p75 = scmp.ne.s32.totalorder %s67, %s69
      %p76 = scmp.eq.s32.totalorder %s22, 1
      %p77 = por %p75, %p76
      %p78 = scmp.ne.s32.totalorder %s69, %s70
      %p79 = scmp.eq.s32.totalorder %s22, 0
      %p80 = por %p78, %p79
      %p81 = scmp.ne.s32.totalorder %s69, %s70
      %p82 = scmp.eq.s32.totalorder %s23, 1
      %p83 = por %p81, %p82
      %p85 = scmp.ne.s32.totalorder %s70, %s84
      %p86 = scmp.eq.s32.totalorder %s23, 0
      %p87 = por %p85, %p86
      %s89 = sadd.s32 %s88, 1
      %p92 = scmp.eq.s32.totalorder %s17, 1
      %p93 = scmp.ne.s32.totalorder %s88, %s90
      %p94 = scmp.eq.s32.totalorder %s17, 0
      %p95 = por %p93, %p94
      %p96 = scmp.ne.s32.totalorder %s88, %s90
      %p97 = scmp.eq.s32.totalorder %s22, 1
      %p98 = por %p96, %p97
      %p99 = scmp.ne.s32.totalorder %s90, %s91
      %p100 = scmp.eq.s32.totalorder %s22, 0
      %p101 = por %p99, %p100
      %p102 = scmp.ne.s32.totalorder %s90, %s91
      %p103 = scmp.eq.s32.totalorder %s23, 1
      %p104 = por %p102, %p103
      %p106 = scmp.ne.s32.totalorder %s91, %s105
      %p107 = scmp.eq.s32.totalorder %s23, 0
      %p108 = por %p106, %p107
      %s110 = sadd.s32 %s109, 1
      %p113 = scmp.eq.s32.totalorder %s17, 1
      %p114 = scmp.ne.s32.totalorder %s109, %s111
      %p115 = scmp.eq.s32.totalorder %s17, 0
      %p116 = por %p114, %p115
      %p117 = scmp.ne.s32.totalorder %s109, %s111
      %p118 = scmp.eq.s32.totalorder %s22, 1
      %p119 = por %p117, %p118
      %p120 = scmp.ne.s32.totalorder %s111, %s112
      %p121 = scmp.eq.s32.totalorder %s22, 0
      %p122 = por %p120, %p121
      %p123 = scmp.ne.s32.totalorder %s111, %s112
      %p124 = scmp.eq.s32.totalorder %s23, 1
      %p125 = por %p123, %p124
      %p127 = scmp.ne.s32.totalorder %s112, %s126
      %p128 = scmp.eq.s32.totalorder %s23, 0
      %p129 = por %p127, %p128
      %s130 = ssub.s32 %s17, %s24
      %p131 = scmp.eq.s32.totalorder %s130, 0
      %s133 = sadd.s32 %s132, 1
      %s134 = scalar_select %p131, %s132, %s133
      %p137 = pneg %p131
      %p138 = scmp.eq.s32.totalorder %s17, 1
      %p139 = por %p137, %p138
      %p140 = scmp.ne.s32.totalorder %s132, %s135
      %p141 = scmp.eq.s32.totalorder %s17, 0
      %p142 = por %p140, %p141
      %p143 = scmp.ne.s32.totalorder %s132, %s135
      %p144 = scmp.eq.s32.totalorder %s22, 1
      %p145 = por %p143, %p144
      %p146 = scmp.ne.s32.totalorder %s135, %s136
      %p147 = scmp.eq.s32.totalorder %s22, 0
      %p148 = por %p146, %p147
      %p149 = scmp.ne.s32.totalorder %s135, %s136
      %p150 = scmp.eq.s32.totalorder %s23, 1
      %p151 = por %p149, %p150
      %p153 = scmp.ne.s32.totalorder %s136, %s152
      %p154 = scmp.eq.s32.totalorder %s23, 0
      %p155 = por %p153, %p154
      %s156 = ssub.s32 %s17, %s24
      %p157 = scmp.eq.s32.totalorder %s156, 0
      %s159 = sadd.s32 %s158, 1
      %s160 = scalar_select %p157, %s158, %s159
      %p163 = pneg %p157
      %p164 = scmp.eq.s32.totalorder %s17, 1
      %p165 = por %p163, %p164
      %p166 = scmp.ne.s32.totalorder %s158, %s161
      %p167 = scmp.eq.s32.totalorder %s17, 0
      %p168 = por %p166, %p167
      %p169 = scmp.ne.s32.totalorder %s158, %s161
      %p170 = scmp.eq.s32.totalorder %s22, 1
      %p171 = por %p169, %p170
      %p172 = scmp.ne.s32.totalorder %s161, %s162
      %p173 = scmp.eq.s32.totalorder %s22, 0
      %p174 = por %p172, %p173
      %p175 = scmp.ne.s32.totalorder %s161, %s162
      %p176 = scmp.eq.s32.totalorder %s23, 1
      %p177 = por %p175, %p176
      %p179 = scmp.ne.s32.totalorder %s162, %s178
      %p180 = scmp.eq.s32.totalorder %s23, 0
      %p181 = por %p179, %p180
      %s182 = ssub.s32 %s17, %s24
      %p183 = scmp.eq.s32.totalorder %s182, 0
      %s185 = sadd.s32 %s184, 1
      %s186 = scalar_select %p183, %s184, %s185
      %p189 = pneg %p183
      %p190 = scmp.eq.s32.totalorder %s17, 1
      %p191 = por %p189, %p190
      %p192 = scmp.ne.s32.totalorder %s184, %s187
      %p193 = scmp.eq.s32.totalorder %s17, 0
      %p194 = por %p192, %p193
      %p195 = scmp.ne.s32.totalorder %s184, %s187
      %p196 = scmp.eq.s32.totalorder %s22, 1
      %p197 = por %p195, %p196
      %p198 = scmp.ne.s32.totalorder %s187, %s188
      %p199 = scmp.eq.s32.totalorder %s22, 0
      %p200 = por %p198, %p199
      %p201 = scmp.ne.s32.totalorder %s187, %s188
      %p202 = scmp.eq.s32.totalorder %s23, 1
      %p203 = por %p201, %p202
      %p205 = scmp.ne.s32.totalorder %s188, %s204
      %p206 = scmp.eq.s32.totalorder %s23, 0
      %p207 = por %p205, %p206
      %s208 = ssub.s32 %s17, %s24
      %p209 = scmp.eq.s32.totalorder %s208, 0
      %s211 = sadd.s32 %s210, 1
      %s212 = scalar_select %p209, %s210, %s211
      %p215 = pneg %p209
      %p216 = scmp.eq.s32.totalorder %s17, 1
      %p217 = por %p215, %p216
      %p218 = scmp.ne.s32.totalorder %s210, %s213
      %p219 = scmp.eq.s32.totalorder %s17, 0
      %p220 = por %p218, %p219
      %p221 = scmp.ne.s32.totalorder %s210, %s213
      %p222 = scmp.eq.s32.totalorder %s22, 1
      %p223 = por %p221, %p222
      %p224 = scmp.ne.s32.totalorder %s213, %s214
      %p225 = scmp.eq.s32.totalorder %s22, 0
      %p226 = por %p224, %p225
      %p227 = scmp.ne.s32.totalorder %s213, %s214
      %p228 = scmp.eq.s32.totalorder %s23, 1
      %p229 = por %p227, %p228
      %p231 = scmp.ne.s32.totalorder %s214, %s230
      %p232 = scmp.eq.s32.totalorder %s23, 0
      %p233 = por %p231, %p232
      %s234 = ssub.s32 %s17, %s24
      %p235 = scmp.eq.s32.totalorder %s234, 0
      %s237 = sadd.s32 %s236, 1
      %s238 = scalar_select %p235, %s236, %s237
      %p241 = pneg %p235
      %p242 = scmp.eq.s32.totalorder %s17, 1
      %p243 = por %p241, %p242
      %p244 = scmp.ne.s32.totalorder %s236, %s239
      %p245 = scmp.eq.s32.totalorder %s17, 0
      %p246 = por %p244, %p245
      %p247 = scmp.ne.s32.totalorder %s236, %s239
      %p248 = scmp.eq.s32.totalorder %s22, 1
      %p249 = por %p247, %p248
      %p250 = scmp.ne.s32.totalorder %s239, %s240
      %p251 = scmp.eq.s32.totalorder %s22, 0
      %p252 = por %p250, %p251
      %p253 = scmp.ne.s32.totalorder %s239, %s240
      %p254 = scmp.eq.s32.totalorder %s23, 1
      %p255 = por %p253, %p254
      %p257 = scmp.ne.s32.totalorder %s240, %s256
      %p258 = scmp.eq.s32.totalorder %s23, 0
      %p259 = por %p257, %p258
      %p260 = scmp.le.s32.totalorder 1, %s17
      %p261 = scmp.lt.s32.totalorder %s17, 3
      %p262 = pnand %p260, %p261
      %p263 = pneg %p262
      // Predicated region
      $region9: #{generator_forward.3} parent=5 // pred_check
        _
      $region10: #{generator_forward.3} parent=5 // pred_check_branch
        %265 = sbr.rel (%p262) target = $region12
      $region11: #{generator_forward.3} parent=5 // pred_region
        %s266 = ssub.s32 %s17, 1
        // Predicated region
        $region13: #{generator_forward.3} parent=11 // pred_check
          %p267 = pneg %p38
        $region14: #{generator_forward.3} parent=11 // pred_check_branch
          %269 = sbr.rel (%p267) target = $region16
        $region15: #{generator_forward.3} parent=11 // pred_region
          _
        $region16: #{generator_forward.3} parent=11 // pred_fallthru
          _
        // Predicated region
        $region17: #{generator_forward.3} parent=11 // pred_check
          %p270 = pneg %p59
        $region18: #{generator_forward.3} parent=11 // pred_check_branch
          %272 = sbr.rel (%p270) target = $region20
        $region19: #{generator_forward.3} parent=11 // pred_region
          %s274 = ssub.s32 2048, 2048
          %275 = vsyncadd [#allocation3], %s274
          %s276 = sshll.u32 [#allocation2], 4
          %s277 = int_to_ptr.vmem [resolvable:$true] %s276
          %282 = dma.hbm_to_vmem [thread:$0]  %s1, 2048, %s277, [#allocation3], 512, 512, 32
        $region20: #{generator_forward.3} parent=11 // pred_fallthru
          _
        // Predicated region
        $region21: #{generator_forward.3} parent=11 // pred_check
          %p283 = pneg %p80
        $region22: #{generator_forward.3} parent=11 // pred_check_branch
          %285 = sbr.rel (%p283) target = $region24
        $region23: #{generator_forward.3} parent=11 // pred_region
          %s287 = ssub.s32 128, 128
          %288 = vsyncadd [#allocation5], %s287
          %s290 = sshll.u32 [#allocation4], 4
          %s291 = int_to_ptr.vmem [resolvable:$true] %s290
          %293 = dma.hbm_to_vmem [thread:$0]  %s2, 128, %s291, [#allocation5]
        $region24: #{generator_forward.3} parent=11 // pred_fallthru
          _
        // Predicated region
        $region25: #{generator_forward.3} parent=11 // pred_check
          %p294 = pneg %p101
        $region26: #{generator_forward.3} parent=11 // pred_check_branch
          %296 = sbr.rel (%p294) target = $region28
        $region27: #{generator_forward.3} parent=11 // pred_region
          _
        $region28: #{generator_forward.3} parent=11 // pred_fallthru
          _
        // Predicated region
        $region29: #{generator_forward.3} parent=11 // pred_check
          %p297 = pneg %p122
        $region30: #{generator_forward.3} parent=11 // pred_check_branch
          %299 = sbr.rel (%p297) target = $region32
        $region31: #{generator_forward.3} parent=11 // pred_region
          _
        $region32: #{generator_forward.3} parent=11 // pred_fallthru
          _
      $region12: #{generator_forward.3} parent=5 // pred_fallthru
        _
      %p300 = scmp.lt.s32.totalorder %s17, 2
      // Predicated region
      $region33: #{generator_forward.3} parent=5 // pred_check
        %p301 = pneg %p300
      $region34: #{generator_forward.3} parent=5 // pred_check_branch
        %303 = sbr.rel (%p301) target = $region36
      $region35: #{generator_forward.3} parent=5 // pred_region
        // Predicated region
        $region37: #{generator_forward.3} parent=35 // pred_check
          %p304 = pneg %p142
        $region38: #{generator_forward.3} parent=35 // pred_check_branch
          %306 = sbr.rel (%p304) target = $region40
        $region39: #{generator_forward.3} parent=35 // pred_region
          %s307 = sand.u32 %s17, 1
          %s308 = scalar_lea.sflag [#allocation3], %s307
          %s309 = sand.u32 %s132, 1
          %s310 = smul.addr %s309, 4096
          %s311 = scalar_lea.vmem [#allocation6], %s310
          %s312 = smul.u32 8, %s17
          %s314 = ssub.s32 65536, 65536
          %315 = vsyncadd %s308, %s314
          %s316 = smul.addr %s312, 64
          %s317 = scalar_lea.hbm %s5, %s316
          %s318 = sshll.u32 %s311, 4
          %s319 = int_to_ptr.vmem [resolvable:$true] %s318
          %324 = dma.hbm_to_vmem [thread:$0]  %s317, 65536, %s319, %s308, 1024, 512, 32
        $region40: #{generator_forward.3} parent=35 // pred_fallthru
          _
        // Predicated region
        $region41: #{generator_forward.3} parent=35 // pred_check
          %p325 = pneg %p168
        $region42: #{generator_forward.3} parent=35 // pred_check_branch
          %327 = sbr.rel (%p325) target = $region44
        $region43: #{generator_forward.3} parent=35 // pred_region
          %s328 = sand.u32 %s17, 1
          %s329 = scalar_lea.sflag [#allocation3], %s328
          %s330 = sand.u32 %s158, 1
          %s331 = smul.addr %s330, 8
          %s332 = scalar_lea.vmem [#allocation7], %s331
          %s333 = smul.u32 8, %s17
          %s335 = ssub.s32 128, 128
          %336 = vsyncadd %s329, %s335
          %s337 = smul.addr %s333, 16
          %s338 = scalar_lea.hbm %s6, %s337
          %s340 = sshll.u32 %s332, 4
          %s341 = int_to_ptr.vmem [resolvable:$true] %s340
          %343 = dma.hbm_to_vmem [thread:$0]  %s338, 128, %s341, %s329
        $region44: #{generator_forward.3} parent=35 // pred_fallthru
          _
        // Predicated region
        $region45: #{generator_forward.3} parent=35 // pred_check
          %p344 = pneg %p194
        $region46: #{generator_forward.3} parent=35 // pred_check_branch
          %346 = sbr.rel (%p344) target = $region48
        $region47: #{generator_forward.3} parent=35 // pred_region
          %s347 = sand.u32 %s17, 1
          %s348 = scalar_lea.sflag [#allocation3], %s347
          %s349 = sand.u32 %s184, 1
          %s350 = smul.addr %s349, 8
          %s351 = scalar_lea.vmem [#allocation8], %s350
          %s352 = smul.u32 8, %s17
          %s354 = ssub.s32 128, 128
          %355 = vsyncadd %s348, %s354
          %s356 = smul.addr %s352, 16
          %s357 = scalar_lea.hbm %s7, %s356
          %s359 = sshll.u32 %s351, 4
          %s360 = int_to_ptr.vmem [resolvable:$true] %s359
          %362 = dma.hbm_to_vmem [thread:$0]  %s357, 128, %s360, %s348
        $region48: #{generator_forward.3} parent=35 // pred_fallthru
          _
        // Predicated region
        $region49: #{generator_forward.3} parent=35 // pred_check
          %p363 = pneg %p220
        $region50: #{generator_forward.3} parent=35 // pred_check_branch
          %365 = sbr.rel (%p363) target = $region52
        $region51: #{generator_forward.3} parent=35 // pred_region
          %s366 = sand.u32 %s17, 1
          %s367 = scalar_lea.sflag [#allocation3], %s366
          %s368 = sand.u32 %s210, 1
          %s369 = smul.addr %s368, 8
          %s370 = scalar_lea.vmem [#allocation9], %s369
          %s371 = smul.u32 8, %s17
          %s373 = ssub.s32 128, 128
          %374 = vsyncadd %s367, %s373
          %s375 = smul.addr %s371, 16
          %s376 = scalar_lea.hbm %s8, %s375
          %s378 = sshll.u32 %s370, 4
          %s379 = int_to_ptr.vmem [resolvable:$true] %s378
          %381 = dma.hbm_to_vmem [thread:$0]  %s376, 128, %s379, %s367
        $region52: #{generator_forward.3} parent=35 // pred_fallthru
          _
      $region36: #{generator_forward.3} parent=5 // pred_fallthru
        _
      %p382 = scmp.le.s32.totalorder 1, %s17
      %p383 = scmp.lt.s32.totalorder %s17, 3
      %p384 = pnand %p382, %p383
      %p385 = pneg %p384
      // Predicated region
      $region53: #{generator_forward.3} parent=5 // pred_check
        _
      $region54: #{generator_forward.3} parent=5 // pred_check_branch
        %387 = sbr.rel (%p384) target = $region56
      $region55: #{generator_forward.3} parent=5 // pred_region
        %s388 = ssub.s32 %s17, 1
        // Predicated region
        $region57: #{generator_forward.3} parent=55 // pred_check
          %p389 = pneg %p59
        $region58: #{generator_forward.3} parent=55 // pred_check_branch
          %391 = sbr.rel (%p389) target = $region60
        $region59: #{generator_forward.3} parent=55 // pred_region
          %392 = dma.done [#allocation3], 2048
        $region60: #{generator_forward.3} parent=55 // pred_fallthru
          _
        // Predicated region
        $region61: #{generator_forward.3} parent=55 // pred_check
          %p393 = pneg %p80
        $region62: #{generator_forward.3} parent=55 // pred_check_branch
          %395 = sbr.rel (%p393) target = $region64
        $region63: #{generator_forward.3} parent=55 // pred_region
          %396 = dma.done [#allocation5], 128
        $region64: #{generator_forward.3} parent=55 // pred_fallthru
          _
        %s397 = sand.u32 %s22, 1
        %s398 = scalar_lea.sflag [#allocation3], %s397
        %s399 = sand.u32 %s135, 1
        %s400 = smul.addr %s399, 4096
        %s401 = scalar_lea.vmem [#allocation6], %s400
        // Predicated region
        $region65: #{generator_forward.3} parent=55 // pred_check
          %p402 = pneg %p148
        $region66: #{generator_forward.3} parent=55 // pred_check_branch
          %404 = sbr.rel (%p402) target = $region68
        $region67: #{generator_forward.3} parent=55 // pred_region
          %405 = dma.done %s398, 65536
        $region68: #{generator_forward.3} parent=55 // pred_fallthru
          _
        %s406 = sand.u32 %s22, 1
        %s407 = scalar_lea.sflag [#allocation3], %s406
        %s408 = sand.u32 %s161, 1
        %s409 = smul.addr %s408, 8
        %s410 = scalar_lea.vmem [#allocation7], %s409
        // Predicated region
        $region69: #{generator_forward.3} parent=55 // pred_check
          %p411 = pneg %p174
        $region70: #{generator_forward.3} parent=55 // pred_check_branch
          %413 = sbr.rel (%p411) target = $region72
        $region71: #{generator_forward.3} parent=55 // pred_region
          %414 = dma.done %s407, 128
        $region72: #{generator_forward.3} parent=55 // pred_fallthru
          _
        %s415 = sand.u32 %s22, 1
        %s416 = scalar_lea.sflag [#allocation3], %s415
        %s417 = sand.u32 %s187, 1
        %s418 = smul.addr %s417, 8
        %s419 = scalar_lea.vmem [#allocation8], %s418
        // Predicated region
        $region73: #{generator_forward.3} parent=55 // pred_check
          %p420 = pneg %p200
        $region74: #{generator_forward.3} parent=55 // pred_check_branch
          %422 = sbr.rel (%p420) target = $region76
        $region75: #{generator_forward.3} parent=55 // pred_region
          %423 = dma.done %s416, 128
        $region76: #{generator_forward.3} parent=55 // pred_fallthru
          _
        %s424 = sand.u32 %s22, 1
        %s425 = scalar_lea.sflag [#allocation3], %s424
        %s426 = sand.u32 %s213, 1
        %s427 = smul.addr %s426, 8
        %s428 = scalar_lea.vmem [#allocation9], %s427
        // Predicated region
        $region77: #{generator_forward.3} parent=55 // pred_check
          %p429 = pneg %p226
        $region78: #{generator_forward.3} parent=55 // pred_check_branch
          %431 = sbr.rel (%p429) target = $region80
        $region79: #{generator_forward.3} parent=55 // pred_region
          %432 = dma.done %s425, 128
        $region80: #{generator_forward.3} parent=55 // pred_fallthru
          _
        %p433 = pneg %p38
        %p434 = pneg %p35
        %p435 = pneg %p59
        %p436 = pneg %p56
        %p437 = pneg %p80
        %p438 = pneg %p77
        %p439 = pneg %p101
        %p440 = pneg %p98
        %p441 = pneg %p122
        %p442 = pneg %p119
        %s443 = sand.u32 %s22, 1
        %s444 = scalar_lea.sflag [#allocation3], %s443
        %s445 = sand.u32 %s135, 1
        %s446 = smul.addr %s445, 4096
        %s447 = scalar_lea.vmem [#allocation6], %s446
        %p448 = pneg %p148
        %p449 = pneg %p145
        %s450 = sand.u32 %s22, 1
        %s451 = scalar_lea.sflag [#allocation3], %s450
        %s452 = sand.u32 %s161, 1
        %s453 = smul.addr %s452, 8
        %s454 = scalar_lea.vmem [#allocation7], %s453
        %p455 = pneg %p174
        %p456 = pneg %p171
        %s457 = sand.u32 %s22, 1
        %s458 = scalar_lea.sflag [#allocation3], %s457
        %s459 = sand.u32 %s187, 1
        %s460 = smul.addr %s459, 8
        %s461 = scalar_lea.vmem [#allocation8], %s460
        %p462 = pneg %p200
        %p463 = pneg %p197
        %s464 = sand.u32 %s22, 1
        %s465 = scalar_lea.sflag [#allocation3], %s464
        %s466 = sand.u32 %s213, 1
        %s467 = smul.addr %s466, 8
        %s468 = scalar_lea.vmem [#allocation9], %s467
        %p469 = pneg %p226
        %p470 = pneg %p223
        %p471 = pneg %p252
        %p472 = pneg %p249
        %s473 = smul.u32 8, %s22
        %p474 = scmp.lt.s32.totalorder %s473, 15
        %s475 = scalar_select %p474, %s473, 15
        %s476 = smul.addr %s475, 2
        %s477 = scalar_lea.vmem %s9, %s476
        %s478 = smul.u32 8, %s22
        %s479 = smul.u32 8, %s22
        %s480 = smul.u32 8, %s22
        %s481 = smul.u32 8, %s22
        %s482 = smul.u32 8, %s22
        %p483 = scmp.lt.s32.totalorder %s482, 15
        %s484 = scalar_select %p483, %s482, 15
        %s485 = smul.addr %s484, 2
        %s486 = scalar_lea.vmem %s9, %s485
        %s487 = smul.u32 8, %s22
        %v489 = vld [vmem:[%s0] sm:$0x3]
        %v490 = vld [vmem:[#allocation2] sm:$0xff]
        %v491 = vld [vmem:[#allocation2 + $0x8] sm:$0xff]
        %v492 = vld [vmem:[#allocation2 + $0x10] sm:$0xff]
        %v493 = vld [vmem:[#allocation2 + $0x18] sm:$0xff]
        %v494 = vld [vmem:[#allocation2 + $0x20] sm:$0xff]
        %v495 = vld [vmem:[#allocation2 + $0x28] sm:$0xff]
        %v496 = vld [vmem:[#allocation2 + $0x30] sm:$0xff]
        %v497 = vld [vmem:[#allocation2 + $0x38] sm:$0xff]
        %v498 = vld [vmem:[#allocation2 + $0x40] sm:$0xff]
        %v499 = vld [vmem:[#allocation2 + $0x48] sm:$0xff]
        %v500 = vld [vmem:[#allocation2 + $0x50] sm:$0xff]
        %v501 = vld [vmem:[#allocation2 + $0x58] sm:$0xff]
        %v502 = vld [vmem:[#allocation2 + $0x60] sm:$0xff]
        %v503 = vld [vmem:[#allocation2 + $0x68] sm:$0xff]
        %v504 = vld [vmem:[#allocation2 + $0x70] sm:$0xff]
        %v505 = vld [vmem:[#allocation2 + $0x78] sm:$0xff]
        %v506 = vld [vmem:[#allocation4] sm:$0xff]
        %v508 = vlaneseq
        %v509 = vshrl.u32 %v508, 7
        %v510 = vsub.s32 0, %v509
        %v511 = vrot.slane %v506, %v510
        %v512 = vlaneseq
        %v513 = vshrl.u32 %v512, 7
        %v514 = vsub.s32 1, %v513
        %v515 = vrot.slane %v506, %v514
        %v516 = vlaneseq
        %v517 = vshrl.u32 %v516, 7
        %v518 = vsub.s32 2, %v517
        %v519 = vrot.slane %v506, %v518
        %v520 = vlaneseq
        %v521 = vshrl.u32 %v520, 7
        %v522 = vsub.s32 3, %v521
        %v523 = vrot.slane %v506, %v522
        %v524 = vlaneseq
        %v525 = vshrl.u32 %v524, 7
        %v526 = vsub.s32 4, %v525
        %v527 = vrot.slane %v506, %v526
        %v528 = vlaneseq
        %v529 = vshrl.u32 %v528, 7
        %v530 = vsub.s32 5, %v529
        %v531 = vrot.slane %v506, %v530
        %v532 = vlaneseq
        %v533 = vshrl.u32 %v532, 7
        %v534 = vsub.s32 6, %v533
        %v535 = vrot.slane %v506, %v534
        %v536 = vlaneseq
        %v537 = vshrl.u32 %v536, 7
        %v538 = vsub.s32 7, %v537
        %v539 = vrot.slane %v506, %v538
        %v564 = vunpack.c.l.b16 %v490
        %v565 = vunpack.c.h.b16 %v490
        %v566 = vunpack.c.l.b16 %v491
        %v567 = vunpack.c.h.b16 %v491
        %v568 = vunpack.c.l.b16 %v492
        %v569 = vunpack.c.h.b16 %v492
        %v570 = vunpack.c.l.b16 %v493
        %v571 = vunpack.c.h.b16 %v493
        %v572 = vunpack.c.l.b16 %v494
        %v573 = vunpack.c.h.b16 %v494
        %v574 = vunpack.c.l.b16 %v495
        %v575 = vunpack.c.h.b16 %v495
        %v576 = vunpack.c.l.b16 %v496
        %v577 = vunpack.c.h.b16 %v496
        %v578 = vunpack.c.l.b16 %v497
        %v579 = vunpack.c.h.b16 %v497
        %v580 = vunpack.c.l.b16 %v498
        %v581 = vunpack.c.h.b16 %v498
        %v582 = vunpack.c.l.b16 %v499
        %v583 = vunpack.c.h.b16 %v499
        %v584 = vunpack.c.l.b16 %v500
        %v585 = vunpack.c.h.b16 %v500
        %v586 = vunpack.c.l.b16 %v501
        %v587 = vunpack.c.h.b16 %v501
        %v588 = vunpack.c.l.b16 %v502
        %v589 = vunpack.c.h.b16 %v502
        %v590 = vunpack.c.l.b16 %v503
        %v591 = vunpack.c.h.b16 %v503
        %v592 = vunpack.c.l.b16 %v504
        %v593 = vunpack.c.h.b16 %v504
        %v594 = vunpack.c.l.b16 %v505
        %v595 = vunpack.c.h.b16 %v505
        %v596 = vpack.c.b16 %v572, %v564
        %v597 = vpack.c.b16 %v573, %v565
        %v598 = vpack.c.b16 %v574, %v566
        %v599 = vpack.c.b16 %v575, %v567
        %v600 = vpack.c.b16 %v576, %v568
        %v601 = vpack.c.b16 %v577, %v569
        %v602 = vpack.c.b16 %v578, %v570
        %v603 = vpack.c.b16 %v579, %v571
        %v604 = vpack.c.b16 %v588, %v580
        %v605 = vpack.c.b16 %v589, %v581
        %v606 = vpack.c.b16 %v590, %v582
        %v607 = vpack.c.b16 %v591, %v583
        %v608 = vpack.c.b16 %v592, %v584
        %v609 = vpack.c.b16 %v593, %v585
        %v610 = vpack.c.b16 %v594, %v586
        %v611 = vpack.c.b16 %v595, %v587
        %vm628 = vcmask 261120
        %v630 = vsel %vm628, %v489, 0
        %632 = vmatprep.subr.bf16.mxu0 %v597
        %633 = vmatpush1.bf16.msra.mxu0 %v596
        %634 = vmatprep.subr.bf16.mxu0 %v605
        %635 = vmatpush1.bf16.msra.mxu0 %v604
        %636 = vmatprep.subr.bf16.mxu0 0
        %637 = vmatpush1.bf16.msra.mxu0 0
        %638 = vmatprep.subr.bf16.mxu0 0
        %639 = vmatpush1.bf16.msra.mxu0 0
        %640 = vmatprep.subr.bf16.mxu0 0
        %641 = vmatpush1.bf16.msra.mxu0 0
        %642 = vmatprep.subr.bf16.mxu0 0
        %643 = vmatpush1.bf16.msra.mxu0 0
        %644 = vmatprep.subr.bf16.mxu0 0
        %645 = vmatpush1.bf16.msra.mxu0 0
        %646 = vmatprep.subr.bf16.mxu0 0
        %647 = vmatpush1.bf16.msra.mxu0 0
        %648 = vmatprep.subr.bf16.mxu0 0
        %649 = vmatpush1.bf16.msra.mxu0 0
        %650 = vmatprep.subr.bf16.mxu0 0
        %651 = vmatpush1.bf16.msra.mxu0 0
        %652 = vmatprep.subr.bf16.mxu0 0
        %653 = vmatpush1.bf16.msra.mxu0 0
        %654 = vmatprep.subr.bf16.mxu0 0
        %655 = vmatpush1.bf16.msra.mxu0 0
        %656 = vmatprep.subr.bf16.mxu0 0
        %657 = vmatpush1.bf16.msra.mxu0 0
        %658 = vmatprep.subr.bf16.mxu0 0
        %659 = vmatpush1.bf16.msra.mxu0 0
        %660 = vmatprep.subr.bf16.mxu0 0
        %661 = vmatpush1.bf16.msra.mxu0 0
        %662 = vmatprep.subr.bf16.mxu0 0
        %663 = vmatpush1.bf16.msra.mxu0 0
        %664 = vmatprep.mubr.bf16.mxu0 0
        %665 = vmatmul.mubr.bf16.gmra.mrb[0].mxu0 %v630
        %v666 = vpop.f32.mrb[0].mxu0
        %v667 = vadd.f32 %v511, %v666
        %v668 = vpop.f32.mrb[0].mxu0
        %v669 = vadd.f32 %v515, %v668
        %v670 = vpop.f32.mrb[0].mxu0
        %v671 = vpop.f32.mrb[0].mxu0
        %672 = vdwg.mxu0
        %673 = vmatprep.subr.bf16.mxu0 %v599
        %674 = vmatpush1.bf16.msra.mxu0 %v598
        %675 = vmatprep.subr.bf16.mxu0 %v607
        %676 = vmatpush1.bf16.msra.mxu0 %v606
        %677 = vmatprep.subr.bf16.mxu0 0
        %678 = vmatpush1.bf16.msra.mxu0 0
        %679 = vmatprep.subr.bf16.mxu0 0
        %680 = vmatpush1.bf16.msra.mxu0 0
        %681 = vmatprep.subr.bf16.mxu0 0
        %682 = vmatpush1.bf16.msra.mxu0 0
        %683 = vmatprep.subr.bf16.mxu0 0
        %684 = vmatpush1.bf16.msra.mxu0 0
        %685 = vmatprep.subr.bf16.mxu0 0
        %686 = vmatpush1.bf16.msra.mxu0 0
        %687 = vmatprep.subr.bf16.mxu0 0
        %688 = vmatpush1.bf16.msra.mxu0 0
        %689 = vmatprep.subr.bf16.mxu0 0
        %690 = vmatpush1.bf16.msra.mxu0 0
        %691 = vmatprep.subr.bf16.mxu0 0
        %692 = vmatpush1.bf16.msra.mxu0 0
        %693 = vmatprep.subr.bf16.mxu0 0
        %694 = vmatpush1.bf16.msra.mxu0 0
        %695 = vmatprep.subr.bf16.mxu0 0
        %696 = vmatpush1.bf16.msra.mxu0 0
        %697 = vmatprep.subr.bf16.mxu0 0
        %698 = vmatpush1.bf16.msra.mxu0 0
        %699 = vmatprep.subr.bf16.mxu0 0
        %700 = vmatpush1.bf16.msra.mxu0 0
        %701 = vmatprep.subr.bf16.mxu0 0
        %702 = vmatpush1.bf16.msra.mxu0 0
        %703 = vmatprep.subr.bf16.mxu0 0
        %704 = vmatpush1.bf16.msra.mxu0 0
        %705 = vmatprep.mubr.bf16.mxu0 0
        %706 = vmatmul.mubr.bf16.gmra.mrb[0].mxu0 %v630
        %v707 = vpop.f32.mrb[0].mxu0
        %v708 = vadd.f32 %v519, %v707
        %v709 = vpop.f32.mrb[0].mxu0
        %v710 = vadd.f32 %v523, %v709
        %v711 = vpop.f32.mrb[0].mxu0
        %v712 = vpop.f32.mrb[0].mxu0
        %713 = vdwg.mxu0
        %714 = vmatprep.subr.bf16.mxu0 %v601
        %715 = vmatpush1.bf16.msra.mxu0 %v600
        %716 = vmatprep.subr.bf16.mxu0 %v609
        %717 = vmatpush1.bf16.msra.mxu0 %v608
        %718 = vmatprep.subr.bf16.mxu0 0
        %719 = vmatpush1.bf16.msra.mxu0 0
        %720 = vmatprep.subr.bf16.mxu0 0
        %721 = vmatpush1.bf16.msra.mxu0 0
        %722 = vmatprep.subr.bf16.mxu0 0
        %723 = vmatpush1.bf16.msra.mxu0 0
        %724 = vmatprep.subr.bf16.mxu0 0
        %725 = vmatpush1.bf16.msra.mxu0 0
        %726 = vmatprep.subr.bf16.mxu0 0
        %727 = vmatpush1.bf16.msra.mxu0 0
        %728 = vmatprep.subr.bf16.mxu0 0
        %729 = vmatpush1.bf16.msra.mxu0 0
        %730 = vmatprep.subr.bf16.mxu0 0
        %731 = vmatpush1.bf16.msra.mxu0 0
        %732 = vmatprep.subr.bf16.mxu0 0
        %733 = vmatpush1.bf16.msra.mxu0 0
        %734 = vmatprep.subr.bf16.mxu0 0
        %735 = vmatpush1.bf16.msra.mxu0 0
        %736 = vmatprep.subr.bf16.mxu0 0
        %737 = vmatpush1.bf16.msra.mxu0 0
        %738 = vmatprep.subr.bf16.mxu0 0
        %739 = vmatpush1.bf16.msra.mxu0 0
        %740 = vmatprep.subr.bf16.mxu0 0
        %741 = vmatpush1.bf16.msra.mxu0 0
        %742 = vmatprep.subr.bf16.mxu0 0
        %743 = vmatpush1.bf16.msra.mxu0 0
        %744 = vmatprep.subr.bf16.mxu0 0
        %745 = vmatpush1.bf16.msra.mxu0 0
        %746 = vmatprep.mubr.bf16.mxu0 0
        %747 = vmatmul.mubr.bf16.gmra.mrb[0].mxu0 %v630
        %v748 = vpop.f32.mrb[0].mxu0
        %v749 = vadd.f32 %v527, %v748
        %v750 = vpop.f32.mrb[0].mxu0
        %v751 = vadd.f32 %v531, %v750
        %v752 = vpop.f32.mrb[0].mxu0
        %v753 = vpop.f32.mrb[0].mxu0
        %754 = vdwg.mxu0
        %755 = vmatprep.subr.bf16.mxu0 %v603
        %756 = vmatpush1.bf16.msra.mxu0 %v602
        %757 = vmatprep.subr.bf16.mxu0 %v611
        %758 = vmatpush1.bf16.msra.mxu0 %v610
        %759 = vmatprep.subr.bf16.mxu0 0
        %760 = vmatpush1.bf16.msra.mxu0 0
        %761 = vmatprep.subr.bf16.mxu0 0
        %762 = vmatpush1.bf16.msra.mxu0 0
        %763 = vmatprep.subr.bf16.mxu0 0
        %764 = vmatpush1.bf16.msra.mxu0 0
        %765 = vmatprep.subr.bf16.mxu0 0
        %766 = vmatpush1.bf16.msra.mxu0 0
        %767 = vmatprep.subr.bf16.mxu0 0
        %768 = vmatpush1.bf16.msra.mxu0 0
        %769 = vmatprep.subr.bf16.mxu0 0
        %770 = vmatpush1.bf16.msra.mxu0 0
        %771 = vmatprep.subr.bf16.mxu0 0
        %772 = vmatpush1.bf16.msra.mxu0 0
        %773 = vmatprep.subr.bf16.mxu0 0
        %774 = vmatpush1.bf16.msra.mxu0 0
        %775 = vmatprep.subr.bf16.mxu0 0
        %776 = vmatpush1.bf16.msra.mxu0 0
        %777 = vmatprep.subr.bf16.mxu0 0
        %778 = vmatpush1.bf16.msra.mxu0 0
        %779 = vmatprep.subr.bf16.mxu0 0
        %780 = vmatpush1.bf16.msra.mxu0 0
        %781 = vmatprep.subr.bf16.mxu0 0
        %782 = vmatpush1.bf16.msra.mxu0 0
        %783 = vmatprep.subr.bf16.mxu0 0
        %784 = vmatpush1.bf16.msra.mxu0 0
        %785 = vmatprep.subr.bf16.mxu0 0
        %786 = vmatpush1.bf16.msra.mxu0 0
        %787 = vmatprep.mubr.bf16.mxu0 0
        %788 = vmatmul.mubr.bf16.gmra.mrb[0].mxu0 %v630
        %v789 = vpop.f32.mrb[0].mxu0
        %v790 = vadd.f32 %v535, %v789
        %v791 = vpop.f32.mrb[0].mxu0
        %v792 = vadd.f32 %v539, %v791
        %v793 = vpop.f32.mrb[0].mxu0
        %v794 = vpop.f32.mrb[0].mxu0
        %795 = vdwg.mxu0
        %vm796 = vcmask 1043456
        %v797 = vsel %vm796, %v667, 0.0
        %v798 = vrot.slane %v797, 4
        %v799 = vadd.f32 %v797, %v798
        %v800 = vrot.slane %v799, 2
        %v801 = vadd.f32 %v799, %v800
        %v802 = vrot.slane %v801, 1
        %v803 = vadd.f32 %v801, %v802
        %v804 = vsel %vm796, %v669, 0.0
        %v805 = vrot.slane %v804, 4
        %v806 = vadd.f32 %v804, %v805
        %v807 = vrot.slane %v806, 2
        %v808 = vadd.f32 %v806, %v807
        %v809 = vrot.slane %v808, 1
        %v810 = vadd.f32 %v808, %v809
        %v811 = vsel %vm796, %v708, 0.0
        %v812 = vrot.slane %v811, 4
        %v813 = vadd.f32 %v811, %v812
        %v814 = vrot.slane %v813, 2
        %v815 = vadd.f32 %v813, %v814
        %v816 = vrot.slane %v815, 1
        %v817 = vadd.f32 %v815, %v816
        %v818 = vsel %vm796, %v710, 0.0
        %v819 = vrot.slane %v818, 4
        %v820 = vadd.f32 %v818, %v819
        %v821 = vrot.slane %v820, 2
        %v822 = vadd.f32 %v820, %v821
        %v823 = vrot.slane %v822, 1
        %v824 = vadd.f32 %v822, %v823
        %v825 = vsel %vm796, %v749, 0.0
        %v826 = vrot.slane %v825, 4
        %v827 = vadd.f32 %v825, %v826
        %v828 = vrot.slane %v827, 2
        %v829 = vadd.f32 %v827, %v828
        %v830 = vrot.slane %v829, 1
        %v831 = vadd.f32 %v829, %v830
        %v832 = vsel %vm796, %v751, 0.0
        %v833 = vrot.slane %v832, 4
        %v834 = vadd.f32 %v832, %v833
        %v835 = vrot.slane %v834, 2
        %v836 = vadd.f32 %v834, %v835
        %v837 = vrot.slane %v836, 1
        %v838 = vadd.f32 %v836, %v837
        %v839 = vsel %vm796, %v790, 0.0
        %v840 = vrot.slane %v839, 4
        %v841 = vadd.f32 %v839, %v840
        %v842 = vrot.slane %v841, 2
        %v843 = vadd.f32 %v841, %v842
        %v844 = vrot.slane %v843, 1
        %v845 = vadd.f32 %v843, %v844
        %v846 = vsel %vm796, %v792, 0.0
        %v847 = vrot.slane %v846, 4
        %v848 = vadd.f32 %v846, %v847
        %v849 = vrot.slane %v848, 2
        %v850 = vadd.f32 %v848, %v849
        %v851 = vrot.slane %v850, 1
        %v852 = vadd.f32 %v850, %v851
        %v853 = vrcp.pop 4.0
        %v854 = vmul.f32 %v803, %v853
        %v855 = vmul.f32 %v810, %v853
        %v856 = vmul.f32 %v817, %v853
        %v857 = vmul.f32 %v824, %v853
        %v858 = vmul.f32 %v831, %v853
        %v859 = vmul.f32 %v838, %v853
        %v860 = vmul.f32 %v845, %v853
        %v861 = vmul.f32 %v852, %v853
        %v862 = vsub.f32 %v667, %v854
        %v863 = vsub.f32 %v669, %v855
        %v864 = vsub.f32 %v708, %v856
        %v865 = vsub.f32 %v710, %v857
        %v866 = vsub.f32 %v749, %v858
        %v867 = vsub.f32 %v751, %v859
        %v868 = vsub.f32 %v790, %v860
        %v869 = vsub.f32 %v792, %v861
        %v870 = vmul.f32 %v862, %v862
        %v871 = vmul.f32 %v863, %v863
        %v872 = vmul.f32 %v864, %v864
        %v873 = vmul.f32 %v865, %v865
        %v874 = vmul.f32 %v866, %v866
        %v875 = vmul.f32 %v867, %v867
        %v876 = vmul.f32 %v868, %v868
        %v877 = vmul.f32 %v869, %v869
        %v878 = vsel %vm796, %v870, 0.0
        %v879 = vrot.slane %v878, 4
        %v880 = vadd.f32 %v878, %v879
        %v881 = vrot.slane %v880, 2
        %v882 = vadd.f32 %v880, %v881
        %v883 = vrot.slane %v882, 1
        %v884 = vadd.f32 %v882, %v883
        %v885 = vsel %vm796, %v871, 0.0
        %v886 = vrot.slane %v885, 4
        %v887 = vadd.f32 %v885, %v886
        %v888 = vrot.slane %v887, 2
        %v889 = vadd.f32 %v887, %v888
        %v890 = vrot.slane %v889, 1
        %v891 = vadd.f32 %v889, %v890
        %v892 = vsel %vm796, %v872, 0.0
        %v893 = vrot.slane %v892, 4
        %v894 = vadd.f32 %v892, %v893
        %v895 = vrot.slane %v894, 2
        %v896 = vadd.f32 %v894, %v895
        %v897 = vrot.slane %v896, 1
        %v898 = vadd.f32 %v896, %v897
        %v899 = vsel %vm796, %v873, 0.0
        %v900 = vrot.slane %v899, 4
        %v901 = vadd.f32 %v899, %v900
        %v902 = vrot.slane %v901, 2
        %v903 = vadd.f32 %v901, %v902
        %v904 = vrot.slane %v903, 1
        %v905 = vadd.f32 %v903, %v904
        %v906 = vsel %vm796, %v874, 0.0
        %v907 = vrot.slane %v906, 4
        %v908 = vadd.f32 %v906, %v907
        %v909 = vrot.slane %v908, 2
        %v910 = vadd.f32 %v908, %v909
        %v911 = vrot.slane %v910, 1
        %v912 = vadd.f32 %v910, %v911
        %v913 = vsel %vm796, %v875, 0.0
        %v914 = vrot.slane %v913, 4
        %v915 = vadd.f32 %v913, %v914
        %v916 = vrot.slane %v915, 2
        %v917 = vadd.f32 %v915, %v916
        %v918 = vrot.slane %v917, 1
        %v919 = vadd.f32 %v917, %v918
        %v920 = vsel %vm796, %v876, 0.0
        %v921 = vrot.slane %v920, 4
        %v922 = vadd.f32 %v920, %v921
        %v923 = vrot.slane %v922, 2
        %v924 = vadd.f32 %v922, %v923
        %v925 = vrot.slane %v924, 1
        %v926 = vadd.f32 %v924, %v925
        %v927 = vsel %vm796, %v877, 0.0
        %v928 = vrot.slane %v927, 4
        %v929 = vadd.f32 %v927, %v928
        %v930 = vrot.slane %v929, 2
        %v931 = vadd.f32 %v929, %v930
        %v932 = vrot.slane %v931, 1
        %v933 = vadd.f32 %v931, %v932
        %v934 = vmul.f32 %v884, %v853
        %v935 = vmul.f32 %v891, %v853
        %v936 = vmul.f32 %v898, %v853
        %v937 = vmul.f32 %v905, %v853
        %v938 = vmul.f32 %v912, %v853
        %v939 = vmul.f32 %v919, %v853
        %v940 = vmul.f32 %v926, %v853
        %v941 = vmul.f32 %v933, %v853
        %v942 = vadd.f32 %v934, 1e-05
        %v943 = vadd.f32 %v935, 1e-05
        %v944 = vadd.f32 %v936, 1e-05
        %v945 = vadd.f32 %v937, 1e-05
        %v946 = vadd.f32 %v938, 1e-05
        %v947 = vadd.f32 %v939, 1e-05
        %v948 = vadd.f32 %v940, 1e-05
        %v949 = vadd.f32 %v941, 1e-05
        %v950 = vrsqrt.pop %v942
        %v951 = vrsqrt.pop %v943
        %v952 = vrsqrt.pop %v944
        %v953 = vrsqrt.pop %v945
        %v954 = vrsqrt.pop %v946
        %v955 = vrsqrt.pop %v947
        %v956 = vrsqrt.pop %v948
        %v957 = vrsqrt.pop %v949
        %v958 = vmul.f32 %v862, %v950
        %v959 = vmul.f32 %v863, %v951
        %v960 = vmul.f32 %v864, %v952
        %v961 = vmul.f32 %v865, %v953
        %v962 = vmul.f32 %v866, %v954
        %v963 = vmul.f32 %v867, %v955
        %v964 = vmul.f32 %v868, %v956
        %v965 = vmul.f32 %v869, %v957
        %v966 = vld [vmem:[%s3] sm:$0xff]
        %v967 = vld [vmem:[%s3 + $0x8] sm:$0xff]
        %v968 = vld [vmem:[%s3 + $0x10] sm:$0xff]
        %v969 = vld [vmem:[%s3 + $0x18] sm:$0xff]
        %v974 = vcombine.high %v966, %v966
        %v975 = vcombine.high %v967, %v967
        %v976 = vcombine.high %v968, %v968
        %v977 = vcombine.high %v969, %v969
        %v982 = vmul.f32 %v958, %v966
        %v983 = vmul.f32 %v959, %v974
        %v984 = vmul.f32 %v960, %v967
        %v985 = vmul.f32 %v961, %v975
        %v986 = vmul.f32 %v962, %v968
        %v987 = vmul.f32 %v963, %v976
        %v988 = vmul.f32 %v964, %v969
        %v989 = vmul.f32 %v965, %v977
        %v990 = vld [vmem:[%s4] sm:$0xff]
        %v991 = vld [vmem:[%s4 + $0x8] sm:$0xff]
        %v992 = vld [vmem:[%s4 + $0x10] sm:$0xff]
        %v993 = vld [vmem:[%s4 + $0x18] sm:$0xff]
        %v998 = vcombine.high %v990, %v990
        %v999 = vcombine.high %v991, %v991
        %v1000 = vcombine.high %v992, %v992
        %v1001 = vcombine.high %v993, %v993
        %v1006 = vadd.f32 %v982, %v990
        %v1007 = vadd.f32 %v983, %v998
        %v1008 = vadd.f32 %v984, %v991
        %v1009 = vadd.f32 %v985, %v999
        %v1010 = vadd.f32 %v986, %v992
        %v1011 = vadd.f32 %v987, %v1000
        %v1012 = vadd.f32 %v988, %v993
        %v1013 = vadd.f32 %v989, %v1001
        %v1014 = vmax.f32 %v1006, 0.0
        %v1015 = vmax.f32 %v1007, 0.0
        %v1016 = vmax.f32 %v1008, 0.0
        %v1017 = vmax.f32 %v1009, 0.0
        %v1018 = vmax.f32 %v1010, 0.0
        %v1019 = vmax.f32 %v1011, 0.0
        %v1020 = vmax.f32 %v1012, 0.0
        %v1021 = vmax.f32 %v1013, 0.0
        %v1022 = vpack.c.bf16 %v1014, %v1014
        %v1023 = vpack.c.bf16 %v1015, %v1015
        %v1024 = vpack.c.bf16 %v1016, %v1016
        %v1025 = vpack.c.bf16 %v1017, %v1017
        %v1026 = vpack.c.bf16 %v1018, %v1018
        %v1027 = vpack.c.bf16 %v1019, %v1019
        %v1028 = vpack.c.bf16 %v1020, %v1020
        %v1029 = vpack.c.bf16 %v1021, %v1021
        %v1030 = vld [vmem:[%s401] sm:$0xff]
        %v1031 = vld [vmem:[%s401 + $0x8] sm:$0xff]
        %v1032 = vld [vmem:[%s401 + $0x10] sm:$0xff]
        %v1033 = vld [vmem:[%s401 + $0x18] sm:$0xff]
        %v1034 = vld [vmem:[%s401 + $0x20] sm:$0xff]
        %v1035 = vld [vmem:[%s401 + $0x28] sm:$0xff]
        %v1036 = vld [vmem:[%s401 + $0x30] sm:$0xff]
        %v1037 = vld [vmem:[%s401 + $0x38] sm:$0xff]
        %v1038 = vld [vmem:[%s401 + $0x40] sm:$0xff]
        %v1039 = vld [vmem:[%s401 + $0x48] sm:$0xff]
        %v1040 = vld [vmem:[%s401 + $0x50] sm:$0xff]
        %v1041 = vld [vmem:[%s401 + $0x58] sm:$0xff]
        %v1042 = vld [vmem:[%s401 + $0x60] sm:$0xff]
        %v1043 = vld [vmem:[%s401 + $0x68] sm:$0xff]
        %v1044 = vld [vmem:[%s401 + $0x70] sm:$0xff]
        %v1045 = vld [vmem:[%s401 + $0x78] sm:$0xff]
        %v1046 = vld [vmem:[%s401 + $0x80] sm:$0xff]
        %v1047 = vld [vmem:[%s401 + $0x88] sm:$0xff]
        %v1048 = vld [vmem:[%s401 + $0x90] sm:$0xff]
        %v1049 = vld [vmem:[%s401 + $0x98] sm:$0xff]
        %v1050 = vld [vmem:[%s401 + $0xa0] sm:$0xff]
        %v1051 = vld [vmem:[%s401 + $0xa8] sm:$0xff]
        %v1052 = vld [vmem:[%s401 + $0xb0] sm:$0xff]
        %v1053 = vld [vmem:[%s401 + $0xb8] sm:$0xff]
        %v1054 = vld [vmem:[%s401 + $0xc0] sm:$0xff]
        %v1055 = vld [vmem:[%s401 + $0xc8] sm:$0xff]
        %v1056 = vld [vmem:[%s401 + $0xd0] sm:$0xff]
        %v1057 = vld [vmem:[%s401 + $0xd8] sm:$0xff]
        %v1058 = vld [vmem:[%s401 + $0xe0] sm:$0xff]
        %v1059 = vld [vmem:[%s401 + $0xe8] sm:$0xff]
        %v1060 = vld [vmem:[%s401 + $0xf0] sm:$0xff]
        %v1061 = vld [vmem:[%s401 + $0xf8] sm:$0xff]
        %v1062 = vld [vmem:[%s401 + $0x100] sm:$0xff]
        %v1063 = vld [vmem:[%s401 + $0x108] sm:$0xff]
        %v1064 = vld [vmem:[%s401 + $0x110] sm:$0xff]
        %v1065 = vld [vmem:[%s401 + $0x118] sm:$0xff]
        %v1066 = vld [vmem:[%s401 + $0x120] sm:$0xff]
        %v1067 = vld [vmem:[%s401 + $0x128] sm:$0xff]
        %v1068 = vld [vmem:[%s401 + $0x130] sm:$0xff]
        %v1069 = vld [vmem:[%s401 + $0x138] sm:$0xff]
        %v1070 = vld [vmem:[%s401 + $0x140] sm:$0xff]
        %v1071 = vld [vmem:[%s401 + $0x148] sm:$0xff]
        %v1072 = vld [vmem:[%s401 + $0x150] sm:$0xff]
        %v1073 = vld [vmem:[%s401 + $0x158] sm:$0xff]
        %v1074 = vld [vmem:[%s401 + $0x160] sm:$0xff]
        %v1075 = vld [vmem:[%s401 + $0x168] sm:$0xff]
        %v1076 = vld [vmem:[%s401 + $0x170] sm:$0xff]
        %v1077 = vld [vmem:[%s401 + $0x178] sm:$0xff]
        %v1078 = vld [vmem:[%s401 + $0x180] sm:$0xff]
        %v1079 = vld [vmem:[%s401 + $0x188] sm:$0xff]
        %v1080 = vld [vmem:[%s401 + $0x190] sm:$0xff]
        %v1081 = vld [vmem:[%s401 + $0x198] sm:$0xff]
        %v1082 = vld [vmem:[%s401 + $0x1a0] sm:$0xff]
        %v1083 = vld [vmem:[%s401 + $0x1a8] sm:$0xff]
        %v1084 = vld [vmem:[%s401 + $0x1b0] sm:$0xff]
        %v1085 = vld [vmem:[%s401 + $0x1b8] sm:$0xff]
        %v1086 = vld [vmem:[%s401 + $0x1c0] sm:$0xff]
        %v1087 = vld [vmem:[%s401 + $0x1c8] sm:$0xff]
        %v1088 = vld [vmem:[%s401 + $0x1d0] sm:$0xff]
        %v1089 = vld [vmem:[%s401 + $0x1d8] sm:$0xff]
        %v1090 = vld [vmem:[%s401 + $0x1e0] sm:$0xff]
        %v1091 = vld [vmem:[%s401 + $0x1e8] sm:$0xff]
        %v1092 = vld [vmem:[%s401 + $0x1f0] sm:$0xff]
        %v1093 = vld [vmem:[%s401 + $0x1f8] sm:$0xff]
        %v1094 = vld [vmem:[%s401 + $0x200] sm:$0xff]
        %v1095 = vld [vmem:[%s401 + $0x208] sm:$0xff]
        %v1096 = vld [vmem:[%s401 + $0x210] sm:$0xff]
        %v1097 = vld [vmem:[%s401 + $0x218] sm:$0xff]
        %v1098 = vld [vmem:[%s401 + $0x220] sm:$0xff]
        %v1099 = vld [vmem:[%s401 + $0x228] sm:$0xff]
        %v1100 = vld [vmem:[%s401 + $0x230] sm:$0xff]
        %v1101 = vld [vmem:[%s401 + $0x238] sm:$0xff]
        %v1102 = vld [vmem:[%s401 + $0x240] sm:$0xff]
        %v1103 = vld [vmem:[%s401 + $0x248] sm:$0xff]
        %v1104 = vld [vmem:[%s401 + $0x250] sm:$0xff]
        %v1105 = vld [vmem:[%s401 + $0x258] sm:$0xff]
        %v1106 = vld [vmem:[%s401 + $0x260] sm:$0xff]
        %v1107 = vld [vmem:[%s401 + $0x268] sm:$0xff]
        %v1108 = vld [vmem:[%s401 + $0x270] sm:$0xff]
        %v1109 = vld [vmem:[%s401 + $0x278] sm:$0xff]
        %v1110 = vld [vmem:[%s401 + $0x280] sm:$0xff]
        %v1111 = vld [vmem:[%s401 + $0x288] sm:$0xff]
        %v1112 = vld [vmem:[%s401 + $0x290] sm:$0xff]
        %v1113 = vld [vmem:[%s401 + $0x298] sm:$0xff]
        %v1114 = vld [vmem:[%s401 + $0x2a0] sm:$0xff]
        %v1115 = vld [vmem:[%s401 + $0x2a8] sm:$0xff]
        %v1116 = vld [vmem:[%s401 + $0x2b0] sm:$0xff]
        %v1117 = vld [vmem:[%s401 + $0x2b8] sm:$0xff]
        %v1118 = vld [vmem:[%s401 + $0x2c0] sm:$0xff]
        %v1119 = vld [vmem:[%s401 + $0x2c8] sm:$0xff]
        %v1120 = vld [vmem:[%s401 + $0x2d0] sm:$0xff]
        %v1121 = vld [vmem:[%s401 + $0x2d8] sm:$0xff]
        %v1122 = vld [vmem:[%s401 + $0x2e0] sm:$0xff]
        %v1123 = vld [vmem:[%s401 + $0x2e8] sm:$0xff]
        %v1124 = vld [vmem:[%s401 + $0x2f0] sm:$0xff]
        %v1125 = vld [vmem:[%s401 + $0x2f8] sm:$0xff]
        %v1126 = vld [vmem:[%s401 + $0x300] sm:$0xff]
        %v1127 = vld [vmem:[%s401 + $0x308] sm:$0xff]
        %v1128 = vld [vmem:[%s401 + $0x310] sm:$0xff]
        %v1129 = vld [vmem:[%s401 + $0x318] sm:$0xff]
        %v1130 = vld [vmem:[%s401 + $0x320] sm:$0xff]
        %v1131 = vld [vmem:[%s401 + $0x328] sm:$0xff]
        %v1132 = vld [vmem:[%s401 + $0x330] sm:$0xff]
        %v1133 = vld [vmem:[%s401 + $0x338] sm:$0xff]
        %v1134 = vld [vmem:[%s401 + $0x340] sm:$0xff]
        %v1135 = vld [vmem:[%s401 + $0x348] sm:$0xff]
        %v1136 = vld [vmem:[%s401 + $0x350] sm:$0xff]
        %v1137 = vld [vmem:[%s401 + $0x358] sm:$0xff]
        %v1138 = vld [vmem:[%s401 + $0x360] sm:$0xff]
        %v1139 = vld [vmem:[%s401 + $0x368] sm:$0xff]
        %v1140 = vld [vmem:[%s401 + $0x370] sm:$0xff]
        %v1141 = vld [vmem:[%s401 + $0x378] sm:$0xff]
        %v1142 = vld [vmem:[%s401 + $0x380] sm:$0xff]
        %v1143 = vld [vmem:[%s401 + $0x388] sm:$0xff]
        %v1144 = vld [vmem:[%s401 + $0x390] sm:$0xff]
        %v1145 = vld [vmem:[%s401 + $0x398] sm:$0xff]
        %v1146 = vld [vmem:[%s401 + $0x3a0] sm:$0xff]
        %v1147 = vld [vmem:[%s401 + $0x3a8] sm:$0xff]
        %v1148 = vld [vmem:[%s401 + $0x3b0] sm:$0xff]
        %v1149 = vld [vmem:[%s401 + $0x3b8] sm:$0xff]
        %v1150 = vld [vmem:[%s401 + $0x3c0] sm:$0xff]
        %v1151 = vld [vmem:[%s401 + $0x3c8] sm:$0xff]
        %v1152 = vld [vmem:[%s401 + $0x3d0] sm:$0xff]
        %v1153 = vld [vmem:[%s401 + $0x3d8] sm:$0xff]
        %v1154 = vld [vmem:[%s401 + $0x3e0] sm:$0xff]
        %v1155 = vld [vmem:[%s401 + $0x3e8] sm:$0xff]
        %v1156 = vld [vmem:[%s401 + $0x3f0] sm:$0xff]
        %v1157 = vld [vmem:[%s401 + $0x3f8] sm:$0xff]
        %v1158 = vld [vmem:[%s401 + $0x400] sm:$0xff]
        %v1159 = vld [vmem:[%s401 + $0x408] sm:$0xff]
        %v1160 = vld [vmem:[%s401 + $0x410] sm:$0xff]
        %v1161 = vld [vmem:[%s401 + $0x418] sm:$0xff]
        %v1162 = vld [vmem:[%s401 + $0x420] sm:$0xff]
        %v1163 = vld [vmem:[%s401 + $0x428] sm:$0xff]
        %v1164 = vld [vmem:[%s401 + $0x430] sm:$0xff]
        %v1165 = vld [vmem:[%s401 + $0x438] sm:$0xff]
        %v1166 = vld [vmem:[%s401 + $0x440] sm:$0xff]
        %v1167 = vld [vmem:[%s401 + $0x448] sm:$0xff]
        %v1168 = vld [vmem:[%s401 + $0x450] sm:$0xff]
        %v1169 = vld [vmem:[%s401 + $0x458] sm:$0xff]
        %v1170 = vld [vmem:[%s401 + $0x460] sm:$0xff]
        %v1171 = vld [vmem:[%s401 + $0x468] sm:$0xff]
        %v1172 = vld [vmem:[%s401 + $0x470] sm:$0xff]
        %v1173 = vld [vmem:[%s401 + $0x478] sm:$0xff]
        %v1174 = vld [vmem:[%s401 + $0x480] sm:$0xff]
        %v1175 = vld [vmem:[%s401 + $0x488] sm:$0xff]
        %v1176 = vld [vmem:[%s401 + $0x490] sm:$0xff]
        %v1177 = vld [vmem:[%s401 + $0x498] sm:$0xff]
        %v1178 = vld [vmem:[%s401 + $0x4a0] sm:$0xff]
        %v1179 = vld [vmem:[%s401 + $0x4a8] sm:$0xff]
        %v1180 = vld [vmem:[%s401 + $0x4b0] sm:$0xff]
        %v1181 = vld [vmem:[%s401 + $0x4b8] sm:$0xff]
        %v1182 = vld [vmem:[%s401 + $0x4c0] sm:$0xff]
        %v1183 = vld [vmem:[%s401 + $0x4c8] sm:$0xff]
        %v1184 = vld [vmem:[%s401 + $0x4d0] sm:$0xff]
        %v1185 = vld [vmem:[%s401 + $0x4d8] sm:$0xff]
        %v1186 = vld [vmem:[%s401 + $0x4e0] sm:$0xff]
        %v1187 = vld [vmem:[%s401 + $0x4e8] sm:$0xff]
        %v1188 = vld [vmem:[%s401 + $0x4f0] sm:$0xff]
        %v1189 = vld [vmem:[%s401 + $0x4f8] sm:$0xff]
        %v1190 = vld [vmem:[%s401 + $0x500] sm:$0xff]
        %v1191 = vld [vmem:[%s401 + $0x508] sm:$0xff]
        %v1192 = vld [vmem:[%s401 + $0x510] sm:$0xff]
        %v1193 = vld [vmem:[%s401 + $0x518] sm:$0xff]
        %v1194 = vld [vmem:[%s401 + $0x520] sm:$0xff]
        %v1195 = vld [vmem:[%s401 + $0x528] sm:$0xff]
        %v1196 = vld [vmem:[%s401 + $0x530] sm:$0xff]
        %v1197 = vld [vmem:[%s401 + $0x538] sm:$0xff]
        %v1198 = vld [vmem:[%s401 + $0x540] sm:$0xff]
        %v1199 = vld [vmem:[%s401 + $0x548] sm:$0xff]
        %v1200 = vld [vmem:[%s401 + $0x550] sm:$0xff]
        %v1201 = vld [vmem:[%s401 + $0x558] sm:$0xff]
        %v1202 = vld [vmem:[%s401 + $0x560] sm:$0xff]
        %v1203 = vld [vmem:[%s401 + $0x568] sm:$0xff]
        %v1204 = vld [vmem:[%s401 + $0x570] sm:$0xff]
        %v1205 = vld [vmem:[%s401 + $0x578] sm:$0xff]
        %v1206 = vld [vmem:[%s401 + $0x580] sm:$0xff]
        %v1207 = vld [vmem:[%s401 + $0x588] sm:$0xff]
        %v1208 = vld [vmem:[%s401 + $0x590] sm:$0xff]
        %v1209 = vld [vmem:[%s401 + $0x598] sm:$0xff]
        %v1210 = vld [vmem:[%s401 + $0x5a0] sm:$0xff]
        %v1211 = vld [vmem:[%s401 + $0x5a8] sm:$0xff]
        %v1212 = vld [vmem:[%s401 + $0x5b0] sm:$0xff]
        %v1213 = vld [vmem:[%s401 + $0x5b8] sm:$0xff]
        %v1214 = vld [vmem:[%s401 + $0x5c0] sm:$0xff]
        %v1215 = vld [vmem:[%s401 + $0x5c8] sm:$0xff]
        %v1216 = vld [vmem:[%s401 + $0x5d0] sm:$0xff]
        %v1217 = vld [vmem:[%s401 + $0x5d8] sm:$0xff]
        %v1218 = vld [vmem:[%s401 + $0x5e0] sm:$0xff]
        %v1219 = vld [vmem:[%s401 + $0x5e8] sm:$0xff]
        %v1220 = vld [vmem:[%s401 + $0x5f0] sm:$0xff]
        %v1221 = vld [vmem:[%s401 + $0x5f8] sm:$0xff]
        %v1222 = vld [vmem:[%s401 + $0x600] sm:$0xff]
        %v1223 = vld [vmem:[%s401 + $0x608] sm:$0xff]
        %v1224 = vld [vmem:[%s401 + $0x610] sm:$0xff]
        %v1225 = vld [vmem:[%s401 + $0x618] sm:$0xff]
        %v1226 = vld [vmem:[%s401 + $0x620] sm:$0xff]
        %v1227 = vld [vmem:[%s401 + $0x628] sm:$0xff]
        %v1228 = vld [vmem:[%s401 + $0x630] sm:$0xff]
        %v1229 = vld [vmem:[%s401 + $0x638] sm:$0xff]
        %v1230 = vld [vmem:[%s401 + $0x640] sm:$0xff]
        %v1231 = vld [vmem:[%s401 + $0x648] sm:$0xff]
        %v1232 = vld [vmem:[%s401 + $0x650] sm:$0xff]
        %v1233 = vld [vmem:[%s401 + $0x658] sm:$0xff]
        %v1234 = vld [vmem:[%s401 + $0x660] sm:$0xff]
        %v1235 = vld [vmem:[%s401 + $0x668] sm:$0xff]
        %v1236 = vld [vmem:[%s401 + $0x670] sm:$0xff]
        %v1237 = vld [vmem:[%s401 + $0x678] sm:$0xff]
        %v1238 = vld [vmem:[%s401 + $0x680] sm:$0xff]
        %v1239 = vld [vmem:[%s401 + $0x688] sm:$0xff]
        %v1240 = vld [vmem:[%s401 + $0x690] sm:$0xff]
        %v1241 = vld [vmem:[%s401 + $0x698] sm:$0xff]
        %v1242 = vld [vmem:[%s401 + $0x6a0] sm:$0xff]
        %v1243 = vld [vmem:[%s401 + $0x6a8] sm:$0xff]
        %v1244 = vld [vmem:[%s401 + $0x6b0] sm:$0xff]
        %v1245 = vld [vmem:[%s401 + $0x6b8] sm:$0xff]
        %v1246 = vld [vmem:[%s401 + $0x6c0] sm:$0xff]
        %v1247 = vld [vmem:[%s401 + $0x6c8] sm:$0xff]
        %v1248 = vld [vmem:[%s401 + $0x6d0] sm:$0xff]
        %v1249 = vld [vmem:[%s401 + $0x6d8] sm:$0xff]
        %v1250 = vld [vmem:[%s401 + $0x6e0] sm:$0xff]
        %v1251 = vld [vmem:[%s401 + $0x6e8] sm:$0xff]
        %v1252 = vld [vmem:[%s401 + $0x6f0] sm:$0xff]
        %v1253 = vld [vmem:[%s401 + $0x6f8] sm:$0xff]
        %v1254 = vld [vmem:[%s401 + $0x700] sm:$0xff]
        %v1255 = vld [vmem:[%s401 + $0x708] sm:$0xff]
        %v1256 = vld [vmem:[%s401 + $0x710] sm:$0xff]
        %v1257 = vld [vmem:[%s401 + $0x718] sm:$0xff]
        %v1258 = vld [vmem:[%s401 + $0x720] sm:$0xff]
        %v1259 = vld [vmem:[%s401 + $0x728] sm:$0xff]
        %v1260 = vld [vmem:[%s401 + $0x730] sm:$0xff]
        %v1261 = vld [vmem:[%s401 + $0x738] sm:$0xff]
        %v1262 = vld [vmem:[%s401 + $0x740] sm:$0xff]
        %v1263 = vld [vmem:[%s401 + $0x748] sm:$0xff]
        %v1264 = vld [vmem:[%s401 + $0x750] sm:$0xff]
        %v1265 = vld [vmem:[%s401 + $0x758] sm:$0xff]
        %v1266 = vld [vmem:[%s401 + $0x760] sm:$0xff]
        %v1267 = vld [vmem:[%s401 + $0x768] sm:$0xff]
        %v1268 = vld [vmem:[%s401 + $0x770] sm:$0xff]
        %v1269 = vld [vmem:[%s401 + $0x778] sm:$0xff]
        %v1270 = vld [vmem:[%s401 + $0x780] sm:$0xff]
        %v1271 = vld [vmem:[%s401 + $0x788] sm:$0xff]
        %v1272 = vld [vmem:[%s401 + $0x790] sm:$0xff]
        %v1273 = vld [vmem:[%s401 + $0x798] sm:$0xff]
        %v1274 = vld [vmem:[%s401 + $0x7a0] sm:$0xff]
        %v1275 = vld [vmem:[%s401 + $0x7a8] sm:$0xff]
        %v1276 = vld [vmem:[%s401 + $0x7b0] sm:$0xff]
        %v1277 = vld [vmem:[%s401 + $0x7b8] sm:$0xff]
        %v1278 = vld [vmem:[%s401 + $0x7c0] sm:$0xff]
        %v1279 = vld [vmem:[%s401 + $0x7c8] sm:$0xff]
        %v1280 = vld [vmem:[%s401 + $0x7d0] sm:$0xff]
        %v1281 = vld [vmem:[%s401 + $0x7d8] sm:$0xff]
        %v1282 = vld [vmem:[%s401 + $0x7e0] sm:$0xff]
        %v1283 = vld [vmem:[%s401 + $0x7e8] sm:$0xff]
        %v1284 = vld [vmem:[%s401 + $0x7f0] sm:$0xff]
        %v1285 = vld [vmem:[%s401 + $0x7f8] sm:$0xff]
        %v1286 = vld [vmem:[%s401 + $0x800] sm:$0xff]
        %v1287 = vld [vmem:[%s401 + $0x808] sm:$0xff]
        %v1288 = vld [vmem:[%s401 + $0x810] sm:$0xff]
        %v1289 = vld [vmem:[%s401 + $0x818] sm:$0xff]
        %v1290 = vld [vmem:[%s401 + $0x820] sm:$0xff]
        %v1291 = vld [vmem:[%s401 + $0x828] sm:$0xff]
        %v1292 = vld [vmem:[%s401 + $0x830] sm:$0xff]
        %v1293 = vld [vmem:[%s401 + $0x838] sm:$0xff]
        %v1294 = vld [vmem:[%s401 + $0x840] sm:$0xff]
        %v1295 = vld [vmem:[%s401 + $0x848] sm:$0xff]
        %v1296 = vld [vmem:[%s401 + $0x850] sm:$0xff]
        %v1297 = vld [vmem:[%s401 + $0x858] sm:$0xff]
        %v1298 = vld [vmem:[%s401 + $0x860] sm:$0xff]
        %v1299 = vld [vmem:[%s401 + $0x868] sm:$0xff]
        %v1300 = vld [vmem:[%s401 + $0x870] sm:$0xff]
        %v1301 = vld [vmem:[%s401 + $0x878] sm:$0xff]
        %v1302 = vld [vmem:[%s401 + $0x880] sm:$0xff]
        %v1303 = vld [vmem:[%s401 + $0x888] sm:$0xff]
        %v1304 = vld [vmem:[%s401 + $0x890] sm:$0xff]
        %v1305 = vld [vmem:[%s401 + $0x898] sm:$0xff]
        %v1306 = vld [vmem:[%s401 + $0x8a0] sm:$0xff]
        %v1307 = vld [vmem:[%s401 + $0x8a8] sm:$0xff]
        %v1308 = vld [vmem:[%s401 + $0x8b0] sm:$0xff]
        %v1309 = vld [vmem:[%s401 + $0x8b8] sm:$0xff]
        %v1310 = vld [vmem:[%s401 + $0x8c0] sm:$0xff]
        %v1311 = vld [vmem:[%s401 + $0x8c8] sm:$0xff]
        %v1312 = vld [vmem:[%s401 + $0x8d0] sm:$0xff]
        %v1313 = vld [vmem:[%s401 + $0x8d8] sm:$0xff]
        %v1314 = vld [vmem:[%s401 + $0x8e0] sm:$0xff]
        %v1315 = vld [vmem:[%s401 + $0x8e8] sm:$0xff]
        %v1316 = vld [vmem:[%s401 + $0x8f0] sm:$0xff]
        %v1317 = vld [vmem:[%s401 + $0x8f8] sm:$0xff]
        %v1318 = vld [vmem:[%s401 + $0x900] sm:$0xff]
        %v1319 = vld [vmem:[%s401 + $0x908] sm:$0xff]
        %v1320 = vld [vmem:[%s401 + $0x910] sm:$0xff]
        %v1321 = vld [vmem:[%s401 + $0x918] sm:$0xff]
        %v1322 = vld [vmem:[%s401 + $0x920] sm:$0xff]
        %v1323 = vld [vmem:[%s401 + $0x928] sm:$0xff]
        %v1324 = vld [vmem:[%s401 + $0x930] sm:$0xff]
        %v1325 = vld [vmem:[%s401 + $0x938] sm:$0xff]
        %v1326 = vld [vmem:[%s401 + $0x940] sm:$0xff]
        %v1327 = vld [vmem:[%s401 + $0x948] sm:$0xff]
        %v1328 = vld [vmem:[%s401 + $0x950] sm:$0xff]
        %v1329 = vld [vmem:[%s401 + $0x958] sm:$0xff]
        %v1330 = vld [vmem:[%s401 + $0x960] sm:$0xff]
        %v1331 = vld [vmem:[%s401 + $0x968] sm:$0xff]
        %v1332 = vld [vmem:[%s401 + $0x970] sm:$0xff]
        %v1333 = vld [vmem:[%s401 + $0x978] sm:$0xff]
        %v1334 = vld [vmem:[%s401 + $0x980] sm:$0xff]
        %v1335 = vld [vmem:[%s401 + $0x988] sm:$0xff]
        %v1336 = vld [vmem:[%s401 + $0x990] sm:$0xff]
        %v1337 = vld [vmem:[%s401 + $0x998] sm:$0xff]
        %v1338 = vld [vmem:[%s401 + $0x9a0] sm:$0xff]
        %v1339 = vld [vmem:[%s401 + $0x9a8] sm:$0xff]
        %v1340 = vld [vmem:[%s401 + $0x9b0] sm:$0xff]
        %v1341 = vld [vmem:[%s401 + $0x9b8] sm:$0xff]
        %v1342 = vld [vmem:[%s401 + $0x9c0] sm:$0xff]
        %v1343 = vld [vmem:[%s401 + $0x9c8] sm:$0xff]
        %v1344 = vld [vmem:[%s401 + $0x9d0] sm:$0xff]
        %v1345 = vld [vmem:[%s401 + $0x9d8] sm:$0xff]
        %v1346 = vld [vmem:[%s401 + $0x9e0] sm:$0xff]
        %v1347 = vld [vmem:[%s401 + $0x9e8] sm:$0xff]
        %v1348 = vld [vmem:[%s401 + $0x9f0] sm:$0xff]
        %v1349 = vld [vmem:[%s401 + $0x9f8] sm:$0xff]
        %v1350 = vld [vmem:[%s401 + $0xa00] sm:$0xff]
        %v1351 = vld [vmem:[%s401 + $0xa08] sm:$0xff]
        %v1352 = vld [vmem:[%s401 + $0xa10] sm:$0xff]
        %v1353 = vld [vmem:[%s401 + $0xa18] sm:$0xff]
        %v1354 = vld [vmem:[%s401 + $0xa20] sm:$0xff]
        %v1355 = vld [vmem:[%s401 + $0xa28] sm:$0xff]
        %v1356 = vld [vmem:[%s401 + $0xa30] sm:$0xff]
        %v1357 = vld [vmem:[%s401 + $0xa38] sm:$0xff]
        %v1358 = vld [vmem:[%s401 + $0xa40] sm:$0xff]
        %v1359 = vld [vmem:[%s401 + $0xa48] sm:$0xff]
        %v1360 = vld [vmem:[%s401 + $0xa50] sm:$0xff]
        %v1361 = vld [vmem:[%s401 + $0xa58] sm:$0xff]
        %v1362 = vld [vmem:[%s401 + $0xa60] sm:$0xff]
        %v1363 = vld [vmem:[%s401 + $0xa68] sm:$0xff]
        %v1364 = vld [vmem:[%s401 + $0xa70] sm:$0xff]
        %v1365 = vld [vmem:[%s401 + $0xa78] sm:$0xff]
        %v1366 = vld [vmem:[%s401 + $0xa80] sm:$0xff]
        %v1367 = vld [vmem:[%s401 + $0xa88] sm:$0xff]
        %v1368 = vld [vmem:[%s401 + $0xa90] sm:$0xff]
        %v1369 = vld [vmem:[%s401 + $0xa98] sm:$0xff]
        %v1370 = vld [vmem:[%s401 + $0xaa0] sm:$0xff]
        %v1371 = vld [vmem:[%s401 + $0xaa8] sm:$0xff]
        %v1372 = vld [vmem:[%s401 + $0xab0] sm:$0xff]
        %v1373 = vld [vmem:[%s401 + $0xab8] sm:$0xff]
        %v1374 = vld [vmem:[%s401 + $0xac0] sm:$0xff]
        %v1375 = vld [vmem:[%s401 + $0xac8] sm:$0xff]
        %v1376 = vld [vmem:[%s401 + $0xad0] sm:$0xff]
        %v1377 = vld [vmem:[%s401 + $0xad8] sm:$0xff]
        %v1378 = vld [vmem:[%s401 + $0xae0] sm:$0xff]
        %v1379 = vld [vmem:[%s401 + $0xae8] sm:$0xff]
        %v1380 = vld [vmem:[%s401 + $0xaf0] sm:$0xff]
        %v1381 = vld [vmem:[%s401 + $0xaf8] sm:$0xff]
        %v1382 = vld [vmem:[%s401 + $0xb00] sm:$0xff]
        %v1383 = vld [vmem:[%s401 + $0xb08] sm:$0xff]
        %v1384 = vld [vmem:[%s401 + $0xb10] sm:$0xff]
        %v1385 = vld [vmem:[%s401 + $0xb18] sm:$0xff]
        %v1386 = vld [vmem:[%s401 + $0xb20] sm:$0xff]
        %v1387 = vld [vmem:[%s401 + $0xb28] sm:$0xff]
        %v1388 = vld [vmem:[%s401 + $0xb30] sm:$0xff]
        %v1389 = vld [vmem:[%s401 + $0xb38] sm:$0xff]
        %v1390 = vld [vmem:[%s401 + $0xb40] sm:$0xff]
        %v1391 = vld [vmem:[%s401 + $0xb48] sm:$0xff]
        %v1392 = vld [vmem:[%s401 + $0xb50] sm:$0xff]
        %v1393 = vld [vmem:[%s401 + $0xb58] sm:$0xff]
        %v1394 = vld [vmem:[%s401 + $0xb60] sm:$0xff]
        %v1395 = vld [vmem:[%s401 + $0xb68] sm:$0xff]
        %v1396 = vld [vmem:[%s401 + $0xb70] sm:$0xff]
        %v1397 = vld [vmem:[%s401 + $0xb78] sm:$0xff]
        %v1398 = vld [vmem:[%s401 + $0xb80] sm:$0xff]
        %v1399 = vld [vmem:[%s401 + $0xb88] sm:$0xff]
        %v1400 = vld [vmem:[%s401 + $0xb90] sm:$0xff]
        %v1401 = vld [vmem:[%s401 + $0xb98] sm:$0xff]
        %v1402 = vld [vmem:[%s401 + $0xba0] sm:$0xff]
        %v1403 = vld [vmem:[%s401 + $0xba8] sm:$0xff]
        %v1404 = vld [vmem:[%s401 + $0xbb0] sm:$0xff]
        %v1405 = vld [vmem:[%s401 + $0xbb8] sm:$0xff]
        %v1406 = vld [vmem:[%s401 + $0xbc0] sm:$0xff]
        %v1407 = vld [vmem:[%s401 + $0xbc8] sm:$0xff]
        %v1408 = vld [vmem:[%s401 + $0xbd0] sm:$0xff]
        %v1409 = vld [vmem:[%s401 + $0xbd8] sm:$0xff]
        %v1410 = vld [vmem:[%s401 + $0xbe0] sm:$0xff]
        %v1411 = vld [vmem:[%s401 + $0xbe8] sm:$0xff]
        %v1412 = vld [vmem:[%s401 + $0xbf0] sm:$0xff]
        %v1413 = vld [vmem:[%s401 + $0xbf8] sm:$0xff]
        %v1414 = vld [vmem:[%s401 + $0xc00] sm:$0xff]
        %v1415 = vld [vmem:[%s401 + $0xc08] sm:$0xff]
        %v1416 = vld [vmem:[%s401 + $0xc10] sm:$0xff]
        %v1417 = vld [vmem:[%s401 + $0xc18] sm:$0xff]
        %v1418 = vld [vmem:[%s401 + $0xc20] sm:$0xff]
        %v1419 = vld [vmem:[%s401 + $0xc28] sm:$0xff]
        %v1420 = vld [vmem:[%s401 + $0xc30] sm:$0xff]
        %v1421 = vld [vmem:[%s401 + $0xc38] sm:$0xff]
        %v1422 = vld [vmem:[%s401 + $0xc40] sm:$0xff]
        %v1423 = vld [vmem:[%s401 + $0xc48] sm:$0xff]
        %v1424 = vld [vmem:[%s401 + $0xc50] sm:$0xff]
        %v1425 = vld [vmem:[%s401 + $0xc58] sm:$0xff]
        %v1426 = vld [vmem:[%s401 + $0xc60] sm:$0xff]
        %v1427 = vld [vmem:[%s401 + $0xc68] sm:$0xff]
        %v1428 = vld [vmem:[%s401 + $0xc70] sm:$0xff]
        %v1429 = vld [vmem:[%s401 + $0xc78] sm:$0xff]
        %v1430 = vld [vmem:[%s401 + $0xc80] sm:$0xff]
        %v1431 = vld [vmem:[%s401 + $0xc88] sm:$0xff]
        %v1432 = vld [vmem:[%s401 + $0xc90] sm:$0xff]
        %v1433 = vld [vmem:[%s401 + $0xc98] sm:$0xff]
        %v1434 = vld [vmem:[%s401 + $0xca0] sm:$0xff]
        %v1435 = vld [vmem:[%s401 + $0xca8] sm:$0xff]
        %v1436 = vld [vmem:[%s401 + $0xcb0] sm:$0xff]
        %v1437 = vld [vmem:[%s401 + $0xcb8] sm:$0xff]
        %v1438 = vld [vmem:[%s401 + $0xcc0] sm:$0xff]
        %v1439 = vld [vmem:[%s401 + $0xcc8] sm:$0xff]
        %v1440 = vld [vmem:[%s401 + $0xcd0] sm:$0xff]
        %v1441 = vld [vmem:[%s401 + $0xcd8] sm:$0xff]
        %v1442 = vld [vmem:[%s401 + $0xce0] sm:$0xff]
        %v1443 = vld [vmem:[%s401 + $0xce8] sm:$0xff]
        %v1444 = vld [vmem:[%s401 + $0xcf0] sm:$0xff]
        %v1445 = vld [vmem:[%s401 + $0xcf8] sm:$0xff]
        %v1446 = vld [vmem:[%s401 + $0xd00] sm:$0xff]
        %v1447 = vld [vmem:[%s401 + $0xd08] sm:$0xff]
        %v1448 = vld [vmem:[%s401 + $0xd10] sm:$0xff]
        %v1449 = vld [vmem:[%s401 + $0xd18] sm:$0xff]
        %v1450 = vld [vmem:[%s401 + $0xd20] sm:$0xff]
        %v1451 = vld [vmem:[%s401 + $0xd28] sm:$0xff]
        %v1452 = vld [vmem:[%s401 + $0xd30] sm:$0xff]
        %v1453 = vld [vmem:[%s401 + $0xd38] sm:$0xff]
        %v1454 = vld [vmem:[%s401 + $0xd40] sm:$0xff]
        %v1455 = vld [vmem:[%s401 + $0xd48] sm:$0xff]
        %v1456 = vld [vmem:[%s401 + $0xd50] sm:$0xff]
        %v1457 = vld [vmem:[%s401 + $0xd58] sm:$0xff]
        %v1458 = vld [vmem:[%s401 + $0xd60] sm:$0xff]
        %v1459 = vld [vmem:[%s401 + $0xd68] sm:$0xff]
        %v1460 = vld [vmem:[%s401 + $0xd70] sm:$0xff]
        %v1461 = vld [vmem:[%s401 + $0xd78] sm:$0xff]
        %v1462 = vld [vmem:[%s401 + $0xd80] sm:$0xff]
        %v1463 = vld [vmem:[%s401 + $0xd88] sm:$0xff]
        %v1464 = vld [vmem:[%s401 + $0xd90] sm:$0xff]
        %v1465 = vld [vmem:[%s401 + $0xd98] sm:$0xff]
        %v1466 = vld [vmem:[%s401 + $0xda0] sm:$0xff]
        %v1467 = vld [vmem:[%s401 + $0xda8] sm:$0xff]
        %v1468 = vld [vmem:[%s401 + $0xdb0] sm:$0xff]
        %v1469 = vld [vmem:[%s401 + $0xdb8] sm:$0xff]
        %v1470 = vld [vmem:[%s401 + $0xdc0] sm:$0xff]
        %v1471 = vld [vmem:[%s401 + $0xdc8] sm:$0xff]
        %v1472 = vld [vmem:[%s401 + $0xdd0] sm:$0xff]
        %v1473 = vld [vmem:[%s401 + $0xdd8] sm:$0xff]
        %v1474 = vld [vmem:[%s401 + $0xde0] sm:$0xff]
        %v1475 = vld [vmem:[%s401 + $0xde8] sm:$0xff]
        %v1476 = vld [vmem:[%s401 + $0xdf0] sm:$0xff]
        %v1477 = vld [vmem:[%s401 + $0xdf8] sm:$0xff]
        %v1478 = vld [vmem:[%s401 + $0xe00] sm:$0xff]
        %v1479 = vld [vmem:[%s401 + $0xe08] sm:$0xff]
        %v1480 = vld [vmem:[%s401 + $0xe10] sm:$0xff]
        %v1481 = vld [vmem:[%s401 + $0xe18] sm:$0xff]
        %v1482 = vld [vmem:[%s401 + $0xe20] sm:$0xff]
        %v1483 = vld [vmem:[%s401 + $0xe28] sm:$0xff]
        %v1484 = vld [vmem:[%s401 + $0xe30] sm:$0xff]
        %v1485 = vld [vmem:[%s401 + $0xe38] sm:$0xff]
        %v1486 = vld [vmem:[%s401 + $0xe40] sm:$0xff]
        %v1487 = vld [vmem:[%s401 + $0xe48] sm:$0xff]
        %v1488 = vld [vmem:[%s401 + $0xe50] sm:$0xff]
        %v1489 = vld [vmem:[%s401 + $0xe58] sm:$0xff]
        %v1490 = vld [vmem:[%s401 + $0xe60] sm:$0xff]
        %v1491 = vld [vmem:[%s401 + $0xe68] sm:$0xff]
        %v1492 = vld [vmem:[%s401 + $0xe70] sm:$0xff]
        %v1493 = vld [vmem:[%s401 + $0xe78] sm:$0xff]
        %v1494 = vld [vmem:[%s401 + $0xe80] sm:$0xff]
        %v1495 = vld [vmem:[%s401 + $0xe88] sm:$0xff]
        %v1496 = vld [vmem:[%s401 + $0xe90] sm:$0xff]
        %v1497 = vld [vmem:[%s401 + $0xe98] sm:$0xff]
        %v1498 = vld [vmem:[%s401 + $0xea0] sm:$0xff]
        %v1499 = vld [vmem:[%s401 + $0xea8] sm:$0xff]
        %v1500 = vld [vmem:[%s401 + $0xeb0] sm:$0xff]
        %v1501 = vld [vmem:[%s401 + $0xeb8] sm:$0xff]
        %v1502 = vld [vmem:[%s401 + $0xec0] sm:$0xff]
        %v1503 = vld [vmem:[%s401 + $0xec8] sm:$0xff]
        %v1504 = vld [vmem:[%s401 + $0xed0] sm:$0xff]
        %v1505 = vld [vmem:[%s401 + $0xed8] sm:$0xff]
        %v1506 = vld [vmem:[%s401 + $0xee0] sm:$0xff]
        %v1507 = vld [vmem:[%s401 + $0xee8] sm:$0xff]
        %v1508 = vld [vmem:[%s401 + $0xef0] sm:$0xff]
        %v1509 = vld [vmem:[%s401 + $0xef8] sm:$0xff]
        %v1510 = vld [vmem:[%s401 + $0xf00] sm:$0xff]
        %v1511 = vld [vmem:[%s401 + $0xf08] sm:$0xff]
        %v1512 = vld [vmem:[%s401 + $0xf10] sm:$0xff]
        %v1513 = vld [vmem:[%s401 + $0xf18] sm:$0xff]
        %v1514 = vld [vmem:[%s401 + $0xf20] sm:$0xff]
        %v1515 = vld [vmem:[%s401 + $0xf28] sm:$0xff]
        %v1516 = vld [vmem:[%s401 + $0xf30] sm:$0xff]
        %v1517 = vld [vmem:[%s401 + $0xf38] sm:$0xff]
        %v1518 = vld [vmem:[%s401 + $0xf40] sm:$0xff]
        %v1519 = vld [vmem:[%s401 + $0xf48] sm:$0xff]
        %v1520 = vld [vmem:[%s401 + $0xf50] sm:$0xff]
        %v1521 = vld [vmem:[%s401 + $0xf58] sm:$0xff]
        %v1522 = vld [vmem:[%s401 + $0xf60] sm:$0xff]
        %v1523 = vld [vmem:[%s401 + $0xf68] sm:$0xff]
        %v1524 = vld [vmem:[%s401 + $0xf70] sm:$0xff]
        %v1525 = vld [vmem:[%s401 + $0xf78] sm:$0xff]
        %v1526 = vld [vmem:[%s401 + $0xf80] sm:$0xff]
        %v1527 = vld [vmem:[%s401 + $0xf88] sm:$0xff]
        %v1528 = vld [vmem:[%s401 + $0xf90] sm:$0xff]
        %v1529 = vld [vmem:[%s401 + $0xf98] sm:$0xff]
        %v1530 = vld [vmem:[%s401 + $0xfa0] sm:$0xff]
        %v1531 = vld [vmem:[%s401 + $0xfa8] sm:$0xff]
        %v1532 = vld [vmem:[%s401 + $0xfb0] sm:$0xff]
        %v1533 = vld [vmem:[%s401 + $0xfb8] sm:$0xff]
        %v1534 = vld [vmem:[%s401 + $0xfc0] sm:$0xff]
        %v1535 = vld [vmem:[%s401 + $0xfc8] sm:$0xff]
        %v1536 = vld [vmem:[%s401 + $0xfd0] sm:$0xff]
        %v1537 = vld [vmem:[%s401 + $0xfd8] sm:$0xff]
        %v1538 = vld [vmem:[%s401 + $0xfe0] sm:$0xff]
        %v1539 = vld [vmem:[%s401 + $0xfe8] sm:$0xff]
        %v1540 = vld [vmem:[%s401 + $0xff0] sm:$0xff]
        %v1541 = vld [vmem:[%s401 + $0xff8] sm:$0xff]
        %v1542 = vld [vmem:[%s410] sm:$0xff]
        %v1544 = vlaneseq
        %v1545 = vshrl.u32 %v1544, 7
        %v1546 = vsub.s32 0, %v1545
        %v1547 = vrot.slane %v1542, %v1546
        %v1548 = vlaneseq
        %v1549 = vshrl.u32 %v1548, 7
        %v1550 = vsub.s32 1, %v1549
        %v1551 = vrot.slane %v1542, %v1550
        %v1552 = vlaneseq
        %v1553 = vshrl.u32 %v1552, 7
        %v1554 = vsub.s32 2, %v1553
        %v1555 = vrot.slane %v1542, %v1554
        %v1556 = vlaneseq
        %v1557 = vshrl.u32 %v1556, 7
        %v1558 = vsub.s32 3, %v1557
        %v1559 = vrot.slane %v1542, %v1558
        %v1560 = vlaneseq
        %v1561 = vshrl.u32 %v1560, 7
        %v1562 = vsub.s32 4, %v1561
        %v1563 = vrot.slane %v1542, %v1562
        %v1564 = vlaneseq
        %v1565 = vshrl.u32 %v1564, 7
        %v1566 = vsub.s32 5, %v1565
        %v1567 = vrot.slane %v1542, %v1566
        %v1568 = vlaneseq
        %v1569 = vshrl.u32 %v1568, 7
        %v1570 = vsub.s32 6, %v1569
        %v1571 = vrot.slane %v1542, %v1570
        %v1572 = vlaneseq
        %v1573 = vshrl.u32 %v1572, 7
        %v1574 = vsub.s32 7, %v1573
        %v1575 = vrot.slane %v1542, %v1574
        %v2096 = vunpack.c.l.b16 %v1030
        %v2097 = vunpack.c.h.b16 %v1030
        %v2098 = vunpack.c.l.b16 %v1031
        %v2099 = vunpack.c.h.b16 %v1031
        %v2100 = vunpack.c.l.b16 %v1032
        %v2101 = vunpack.c.h.b16 %v1032
        %v2102 = vunpack.c.l.b16 %v1033
        %v2103 = vunpack.c.h.b16 %v1033
        %v2104 = vunpack.c.l.b16 %v1034
        %v2105 = vunpack.c.h.b16 %v1034
        %v2106 = vunpack.c.l.b16 %v1035
        %v2107 = vunpack.c.h.b16 %v1035
        %v2108 = vunpack.c.l.b16 %v1036
        %v2109 = vunpack.c.h.b16 %v1036
        %v2110 = vunpack.c.l.b16 %v1037
        %v2111 = vunpack.c.h.b16 %v1037
        %v2112 = vunpack.c.l.b16 %v1038
        %v2113 = vunpack.c.h.b16 %v1038
        %v2114 = vunpack.c.l.b16 %v1039
        %v2115 = vunpack.c.h.b16 %v1039
        %v2116 = vunpack.c.l.b16 %v1040
        %v2117 = vunpack.c.h.b16 %v1040
        %v2118 = vunpack.c.l.b16 %v1041
        %v2119 = vunpack.c.h.b16 %v1041
        %v2120 = vunpack.c.l.b16 %v1042
        %v2121 = vunpack.c.h.b16 %v1042
        %v2122 = vunpack.c.l.b16 %v1043
        %v2123 = vunpack.c.h.b16 %v1043
        %v2124 = vunpack.c.l.b16 %v1044
        %v2125 = vunpack.c.h.b16 %v1044
        %v2126 = vunpack.c.l.b16 %v1045
        %v2127 = vunpack.c.h.b16 %v1045
        %v2128 = vunpack.c.l.b16 %v1046
        %v2129 = vunpack.c.h.b16 %v1046
        %v2130 = vunpack.c.l.b16 %v1047
        %v2131 = vunpack.c.h.b16 %v1047
        %v2132 = vunpack.c.l.b16 %v1048
        %v2133 = vunpack.c.h.b16 %v1048
        %v2134 = vunpack.c.l.b16 %v1049
        %v2135 = vunpack.c.h.b16 %v1049
        %v2136 = vunpack.c.l.b16 %v1050
        %v2137 = vunpack.c.h.b16 %v1050
        %v2138 = vunpack.c.l.b16 %v1051
        %v2139 = vunpack.c.h.b16 %v1051
        %v2140 = vunpack.c.l.b16 %v1052
        %v2141 = vunpack.c.h.b16 %v1052
        %v2142 = vunpack.c.l.b16 %v1053
        %v2143 = vunpack.c.h.b16 %v1053
        %v2144 = vunpack.c.l.b16 %v1054
        %v2145 = vunpack.c.h.b16 %v1054
        %v2146 = vunpack.c.l.b16 %v1055
        %v2147 = vunpack.c.h.b16 %v1055
        %v2148 = vunpack.c.l.b16 %v1056
        %v2149 = vunpack.c.h.b16 %v1056
        %v2150 = vunpack.c.l.b16 %v1057
        %v2151 = vunpack.c.h.b16 %v1057
        %v2152 = vunpack.c.l.b16 %v1058
        %v2153 = vunpack.c.h.b16 %v1058
        %v2154 = vunpack.c.l.b16 %v1059
        %v2155 = vunpack.c.h.b16 %v1059
        %v2156 = vunpack.c.l.b16 %v1060
        %v2157 = vunpack.c.h.b16 %v1060
        %v2158 = vunpack.c.l.b16 %v1061
        %v2159 = vunpack.c.h.b16 %v1061
        %v2160 = vunpack.c.l.b16 %v1062
        %v2161 = vunpack.c.h.b16 %v1062
        %v2162 = vunpack.c.l.b16 %v1063
        %v2163 = vunpack.c.h.b16 %v1063
        %v2164 = vunpack.c.l.b16 %v1064
        %v2165 = vunpack.c.h.b16 %v1064
        %v2166 = vunpack.c.l.b16 %v1065
        %v2167 = vunpack.c.h.b16 %v1065
        %v2168 = vunpack.c.l.b16 %v1066
        %v2169 = vunpack.c.h.b16 %v1066
        %v2170 = vunpack.c.l.b16 %v1067
        %v2171 = vunpack.c.h.b16 %v1067
        %v2172 = vunpack.c.l.b16 %v1068
        %v2173 = vunpack.c.h.b16 %v1068
        %v2174 = vunpack.c.l.b16 %v1069
        %v2175 = vunpack.c.h.b16 %v1069
        %v2176 = vunpack.c.l.b16 %v1070
        %v2177 = vunpack.c.h.b16 %v1070
        %v2178 = vunpack.c.l.b16 %v1071
        %v2179 = vunpack.c.h.b16 %v1071
        %v2180 = vunpack.c.l.b16 %v1072
        %v2181 = vunpack.c.h.b16 %v1072
        %v2182 = vunpack.c.l.b16 %v1073
        %v2183 = vunpack.c.h.b16 %v1073
        %v2184 = vunpack.c.l.b16 %v1074
        %v2185 = vunpack.c.h.b16 %v1074
        %v2186 = vunpack.c.l.b16 %v1075
        %v2187 = vunpack.c.h.b16 %v1075
        %v2188 = vunpack.c.l.b16 %v1076
        %v2189 = vunpack.c.h.b16 %v1076
        %v2190 = vunpack.c.l.b16 %v1077
        %v2191 = vunpack.c.h.b16 %v1077
        %v2192 = vunpack.c.l.b16 %v1078
        %v2193 = vunpack.c.h.b16 %v1078
        %v2194 = vunpack.c.l.b16 %v1079
        %v2195 = vunpack.c.h.b16 %v1079
        %v2196 = vunpack.c.l.b16 %v1080
        %v2197 = vunpack.c.h.b16 %v1080
        %v2198 = vunpack.c.l.b16 %v1081
        %v2199 = vunpack.c.h.b16 %v1081
        %v2200 = vunpack.c.l.b16 %v1082
        %v2201 = vunpack.c.h.b16 %v1082
        %v2202 = vunpack.c.l.b16 %v1083
        %v2203 = vunpack.c.h.b16 %v1083
        %v2204 = vunpack.c.l.b16 %v1084
        %v2205 = vunpack.c.h.b16 %v1084
        %v2206 = vunpack.c.l.b16 %v1085
        %v2207 = vunpack.c.h.b16 %v1085
        %v2208 = vunpack.c.l.b16 %v1086
        %v2209 = vunpack.c.h.b16 %v1086
        %v2210 = vunpack.c.l.b16 %v1087
        %v2211 = vunpack.c.h.b16 %v1087
        %v2212 = vunpack.c.l.b16 %v1088
        %v2213 = vunpack.c.h.b16 %v1088
        %v2214 = vunpack.c.l.b16 %v1089
        %v2215 = vunpack.c.h.b16 %v1089
        %v2216 = vunpack.c.l.b16 %v1090
        %v2217 = vunpack.c.h.b16 %v1090
        %v2218 = vunpack.c.l.b16 %v1091
        %v2219 = vunpack.c.h.b16 %v1091
        %v2220 = vunpack.c.l.b16 %v1092
        %v2221 = vunpack.c.h.b16 %v1092
        %v2222 = vunpack.c.l.b16 %v1093
        %v2223 = vunpack.c.h.b16 %v1093
        %v2224 = vunpack.c.l.b16 %v1094
        %v2225 = vunpack.c.h.b16 %v1094
        %v2226 = vunpack.c.l.b16 %v1095
        %v2227 = vunpack.c.h.b16 %v1095
        %v2228 = vunpack.c.l.b16 %v1096
        %v2229 = vunpack.c.h.b16 %v1096
        %v2230 = vunpack.c.l.b16 %v1097
        %v2231 = vunpack.c.h.b16 %v1097
        %v2232 = vunpack.c.l.b16 %v1098
        %v2233 = vunpack.c.h.b16 %v1098
        %v2234 = vunpack.c.l.b16 %v1099
        %v2235 = vunpack.c.h.b16 %v1099
        %v2236 = vunpack.c.l.b16 %v1100
        %v2237 = vunpack.c.h.b16 %v1100
        %v2238 = vunpack.c.l.b16 %v1101
        %v2239 = vunpack.c.h.b16 %v1101
        %v2240 = vunpack.c.l.b16 %v1102
        %v2241 = vunpack.c.h.b16 %v1102
        %v2242 = vunpack.c.l.b16 %v1103
        %v2243 = vunpack.c.h.b16 %v1103
        %v2244 = vunpack.c.l.b16 %v1104
        %v2245 = vunpack.c.h.b16 %v1104
        %v2246 = vunpack.c.l.b16 %v1105
        %v2247 = vunpack.c.h.b16 %v1105
        %v2248 = vunpack.c.l.b16 %v1106
        %v2249 = vunpack.c.h.b16 %v1106
        %v2250 = vunpack.c.l.b16 %v1107
        %v2251 = vunpack.c.h.b16 %v1107
        %v2252 = vunpack.c.l.b16 %v1108
        %v2253 = vunpack.c.h.b16 %v1108
        %v2254 = vunpack.c.l.b16 %v1109
        %v2255 = vunpack.c.h.b16 %v1109
        %v2256 = vunpack.c.l.b16 %v1110
        %v2257 = vunpack.c.h.b16 %v1110
        %v2258 = vunpack.c.l.b16 %v1111
        %v2259 = vunpack.c.h.b16 %v1111
        %v2260 = vunpack.c.l.b16 %v1112
        %v2261 = vunpack.c.h.b16 %v1112
        %v2262 = vunpack.c.l.b16 %v1113
        %v2263 = vunpack.c.h.b16 %v1113
        %v2264 = vunpack.c.l.b16 %v1114
        %v2265 = vunpack.c.h.b16 %v1114
        %v2266 = vunpack.c.l.b16 %v1115
        %v2267 = vunpack.c.h.b16 %v1115
        %v2268 = vunpack.c.l.b16 %v1116
        %v2269 = vunpack.c.h.b16 %v1116
        %v2270 = vunpack.c.l.b16 %v1117
        %v2271 = vunpack.c.h.b16 %v1117
        %v2272 = vunpack.c.l.b16 %v1118
        %v2273 = vunpack.c.h.b16 %v1118
        %v2274 = vunpack.c.l.b16 %v1119
        %v2275 = vunpack.c.h.b16 %v1119
        %v2276 = vunpack.c.l.b16 %v1120
        %v2277 = vunpack.c.h.b16 %v1120
        %v2278 = vunpack.c.l.b16 %v1121
        %v2279 = vunpack.c.h.b16 %v1121
        %v2280 = vunpack.c.l.b16 %v1122
        %v2281 = vunpack.c.h.b16 %v1122
        %v2282 = vunpack.c.l.b16 %v1123
        %v2283 = vunpack.c.h.b16 %v1123
        %v2284 = vunpack.c.l.b16 %v1124
        %v2285 = vunpack.c.h.b16 %v1124
        %v2286 = vunpack.c.l.b16 %v1125
        %v2287 = vunpack.c.h.b16 %v1125
        %v2288 = vunpack.c.l.b16 %v1126
        %v2289 = vunpack.c.h.b16 %v1126
        %v2290 = vunpack.c.l.b16 %v1127
        %v2291 = vunpack.c.h.b16 %v1127
        %v2292 = vunpack.c.l.b16 %v1128
        %v2293 = vunpack.c.h.b16 %v1128
        %v2294 = vunpack.c.l.b16 %v1129
        %v2295 = vunpack.c.h.b16 %v1129
        %v2296 = vunpack.c.l.b16 %v1130
        %v2297 = vunpack.c.h.b16 %v1130
        %v2298 = vunpack.c.l.b16 %v1131
        %v2299 = vunpack.c.h.b16 %v1131
        %v2300 = vunpack.c.l.b16 %v1132
        %v2301 = vunpack.c.h.b16 %v1132
        %v2302 = vunpack.c.l.b16 %v1133
        %v2303 = vunpack.c.h.b16 %v1133
        %v2304 = vunpack.c.l.b16 %v1134
        %v2305 = vunpack.c.h.b16 %v1134
        %v2306 = vunpack.c.l.b16 %v1135
        %v2307 = vunpack.c.h.b16 %v1135
        %v2308 = vunpack.c.l.b16 %v1136
        %v2309 = vunpack.c.h.b16 %v1136
        %v2310 = vunpack.c.l.b16 %v1137
        %v2311 = vunpack.c.h.b16 %v1137
        %v2312 = vunpack.c.l.b16 %v1138
        %v2313 = vunpack.c.h.b16 %v1138
        %v2314 = vunpack.c.l.b16 %v1139
        %v2315 = vunpack.c.h.b16 %v1139
        %v2316 = vunpack.c.l.b16 %v1140
        %v2317 = vunpack.c.h.b16 %v1140
        %v2318 = vunpack.c.l.b16 %v1141
        %v2319 = vunpack.c.h.b16 %v1141
        %v2320 = vunpack.c.l.b16 %v1142
        %v2321 = vunpack.c.h.b16 %v1142
        %v2322 = vunpack.c.l.b16 %v1143
        %v2323 = vunpack.c.h.b16 %v1143
        %v2324 = vunpack.c.l.b16 %v1144
        %v2325 = vunpack.c.h.b16 %v1144
        %v2326 = vunpack.c.l.b16 %v1145
        %v2327 = vunpack.c.h.b16 %v1145
        %v2328 = vunpack.c.l.b16 %v1146
        %v2329 = vunpack.c.h.b16 %v1146
        %v2330 = vunpack.c.l.b16 %v1147
        %v2331 = vunpack.c.h.b16 %v1147
        %v2332 = vunpack.c.l.b16 %v1148
        %v2333 = vunpack.c.h.b16 %v1148
        %v2334 = vunpack.c.l.b16 %v1149
        %v2335 = vunpack.c.h.b16 %v1149
        %v2336 = vunpack.c.l.b16 %v1150
        %v2337 = vunpack.c.h.b16 %v1150
        %v2338 = vunpack.c.l.b16 %v1151
        %v2339 = vunpack.c.h.b16 %v1151
        %v2340 = vunpack.c.l.b16 %v1152
        %v2341 = vunpack.c.h.b16 %v1152
        %v2342 = vunpack.c.l.b16 %v1153
        %v2343 = vunpack.c.h.b16 %v1153
        %v2344 = vunpack.c.l.b16 %v1154
        %v2345 = vunpack.c.h.b16 %v1154
        %v2346 = vunpack.c.l.b16 %v1155
        %v2347 = vunpack.c.h.b16 %v1155
        %v2348 = vunpack.c.l.b16 %v1156
        %v2349 = vunpack.c.h.b16 %v1156
        %v2350 = vunpack.c.l.b16 %v1157
        %v2351 = vunpack.c.h.b16 %v1157
        %v2352 = vunpack.c.l.b16 %v1158
        %v2353 = vunpack.c.h.b16 %v1158
        %v2354 = vunpack.c.l.b16 %v1159
        %v2355 = vunpack.c.h.b16 %v1159
        %v2356 = vunpack.c.l.b16 %v1160
        %v2357 = vunpack.c.h.b16 %v1160
        %v2358 = vunpack.c.l.b16 %v1161
        %v2359 = vunpack.c.h.b16 %v1161
        %v2360 = vunpack.c.l.b16 %v1162
        %v2361 = vunpack.c.h.b16 %v1162
        %v2362 = vunpack.c.l.b16 %v1163
        %v2363 = vunpack.c.h.b16 %v1163
        %v2364 = vunpack.c.l.b16 %v1164
        %v2365 = vunpack.c.h.b16 %v1164
        %v2366 = vunpack.c.l.b16 %v1165
        %v2367 = vunpack.c.h.b16 %v1165
        %v2368 = vunpack.c.l.b16 %v1166
        %v2369 = vunpack.c.h.b16 %v1166
        %v2370 = vunpack.c.l.b16 %v1167
        %v2371 = vunpack.c.h.b16 %v1167
        %v2372 = vunpack.c.l.b16 %v1168
        %v2373 = vunpack.c.h.b16 %v1168
        %v2374 = vunpack.c.l.b16 %v1169
        %v2375 = vunpack.c.h.b16 %v1169
        %v2376 = vunpack.c.l.b16 %v1170
        %v2377 = vunpack.c.h.b16 %v1170
        %v2378 = vunpack.c.l.b16 %v1171
        %v2379 = vunpack.c.h.b16 %v1171
        %v2380 = vunpack.c.l.b16 %v1172
        %v2381 = vunpack.c.h.b16 %v1172
        %v2382 = vunpack.c.l.b16 %v1173
        %v2383 = vunpack.c.h.b16 %v1173
        %v2384 = vunpack.c.l.b16 %v1174
        %v2385 = vunpack.c.h.b16 %v1174
        %v2386 = vunpack.c.l.b16 %v1175
        %v2387 = vunpack.c.h.b16 %v1175
        %v2388 = vunpack.c.l.b16 %v1176
        %v2389 = vunpack.c.h.b16 %v1176
        %v2390 = vunpack.c.l.b16 %v1177
        %v2391 = vunpack.c.h.b16 %v1177
        %v2392 = vunpack.c.l.b16 %v1178
        %v2393 = vunpack.c.h.b16 %v1178
        %v2394 = vunpack.c.l.b16 %v1179
        %v2395 = vunpack.c.h.b16 %v1179
        %v2396 = vunpack.c.l.b16 %v1180
        %v2397 = vunpack.c.h.b16 %v1180
        %v2398 = vunpack.c.l.b16 %v1181
        %v2399 = vunpack.c.h.b16 %v1181
        %v2400 = vunpack.c.l.b16 %v1182
        %v2401 = vunpack.c.h.b16 %v1182
        %v2402 = vunpack.c.l.b16 %v1183
        %v2403 = vunpack.c.h.b16 %v1183
        %v2404 = vunpack.c.l.b16 %v1184
        %v2405 = vunpack.c.h.b16 %v1184
        %v2406 = vunpack.c.l.b16 %v1185
        %v2407 = vunpack.c.h.b16 %v1185
        %v2408 = vunpack.c.l.b16 %v1186
        %v2409 = vunpack.c.h.b16 %v1186
        %v2410 = vunpack.c.l.b16 %v1187
        %v2411 = vunpack.c.h.b16 %v1187
        %v2412 = vunpack.c.l.b16 %v1188
        %v2413 = vunpack.c.h.b16 %v1188
        %v2414 = vunpack.c.l.b16 %v1189
        %v2415 = vunpack.c.h.b16 %v1189
        %v2416 = vunpack.c.l.b16 %v1190
        %v2417 = vunpack.c.h.b16 %v1190
        %v2418 = vunpack.c.l.b16 %v1191
        %v2419 = vunpack.c.h.b16 %v1191
        %v2420 = vunpack.c.l.b16 %v1192
        %v2421 = vunpack.c.h.b16 %v1192
        %v2422 = vunpack.c.l.b16 %v1193
        %v2423 = vunpack.c.h.b16 %v1193
        %v2424 = vunpack.c.l.b16 %v1194
        %v2425 = vunpack.c.h.b16 %v1194
        %v2426 = vunpack.c.l.b16 %v1195
        %v2427 = vunpack.c.h.b16 %v1195
        %v2428 = vunpack.c.l.b16 %v1196
        %v2429 = vunpack.c.h.b16 %v1196
        %v2430 = vunpack.c.l.b16 %v1197
        %v2431 = vunpack.c.h.b16 %v1197
        %v2432 = vunpack.c.l.b16 %v1198
        %v2433 = vunpack.c.h.b16 %v1198
        %v2434 = vunpack.c.l.b16 %v1199
        %v2435 = vunpack.c.h.b16 %v1199
        %v2436 = vunpack.c.l.b16 %v1200
        %v2437 = vunpack.c.h.b16 %v1200
        %v2438 = vunpack.c.l.b16 %v1201
        %v2439 = vunpack.c.h.b16 %v1201
        %v2440 = vunpack.c.l.b16 %v1202
        %v2441 = vunpack.c.h.b16 %v1202
        %v2442 = vunpack.c.l.b16 %v1203
        %v2443 = vunpack.c.h.b16 %v1203
        %v2444 = vunpack.c.l.b16 %v1204
        %v2445 = vunpack.c.h.b16 %v1204
        %v2446 = vunpack.c.l.b16 %v1205
        %v2447 = vunpack.c.h.b16 %v1205
        %v2448 = vunpack.c.l.b16 %v1206
        %v2449 = vunpack.c.h.b16 %v1206
        %v2450 = vunpack.c.l.b16 %v1207
        %v2451 = vunpack.c.h.b16 %v1207
        %v2452 = vunpack.c.l.b16 %v1208
        %v2453 = vunpack.c.h.b16 %v1208
        %v2454 = vunpack.c.l.b16 %v1209
        %v2455 = vunpack.c.h.b16 %v1209
        %v2456 = vunpack.c.l.b16 %v1210
        %v2457 = vunpack.c.h.b16 %v1210
        %v2458 = vunpack.c.l.b16 %v1211
        %v2459 = vunpack.c.h.b16 %v1211
        %v2460 = vunpack.c.l.b16 %v1212
        %v2461 = vunpack.c.h.b16 %v1212
        %v2462 = vunpack.c.l.b16 %v1213
        %v2463 = vunpack.c.h.b16 %v1213
        %v2464 = vunpack.c.l.b16 %v1214
        %v2465 = vunpack.c.h.b16 %v1214
        %v2466 = vunpack.c.l.b16 %v1215
        %v2467 = vunpack.c.h.b16 %v1215
        %v2468 = vunpack.c.l.b16 %v1216
        %v2469 = vunpack.c.h.b16 %v1216
        %v2470 = vunpack.c.l.b16 %v1217
        %v2471 = vunpack.c.h.b16 %v1217
        %v2472 = vunpack.c.l.b16 %v1218
        %v2473 = vunpack.c.h.b16 %v1218
        %v2474 = vunpack.c.l.b16 %v1219
        %v2475 = vunpack.c.h.b16 %v1219
        %v2476 = vunpack.c.l.b16 %v1220
        %v2477 = vunpack.c.h.b16 %v1220
        %v2478 = vunpack.c.l.b16 %v1221
        %v2479 = vunpack.c.h.b16 %v1221
        %v2480 = vunpack.c.l.b16 %v1222
        %v2481 = vunpack.c.h.b16 %v1222
        %v2482 = vunpack.c.l.b16 %v1223
        %v2483 = vunpack.c.h.b16 %v1223
        %v2484 = vunpack.c.l.b16 %v1224
        %v2485 = vunpack.c.h.b16 %v1224
        %v2486 = vunpack.c.l.b16 %v1225
        %v2487 = vunpack.c.h.b16 %v1225
        %v2488 = vunpack.c.l.b16 %v1226
        %v2489 = vunpack.c.h.b16 %v1226
        %v2490 = vunpack.c.l.b16 %v1227
        %v2491 = vunpack.c.h.b16 %v1227
        %v2492 = vunpack.c.l.b16 %v1228
        %v2493 = vunpack.c.h.b16 %v1228
        %v2494 = vunpack.c.l.b16 %v1229
        %v2495 = vunpack.c.h.b16 %v1229
        %v2496 = vunpack.c.l.b16 %v1230
        %v2497 = vunpack.c.h.b16 %v1230
        %v2498 = vunpack.c.l.b16 %v1231
        %v2499 = vunpack.c.h.b16 %v1231
        %v2500 = vunpack.c.l.b16 %v1232
        %v2501 = vunpack.c.h.b16 %v1232
        %v2502 = vunpack.c.l.b16 %v1233
        %v2503 = vunpack.c.h.b16 %v1233
        %v2504 = vunpack.c.l.b16 %v1234
        %v2505 = vunpack.c.h.b16 %v1234
        %v2506 = vunpack.c.l.b16 %v1235
        %v2507 = vunpack.c.h.b16 %v1235
        %v2508 = vunpack.c.l.b16 %v1236
        %v2509 = vunpack.c.h.b16 %v1236
        %v2510 = vunpack.c.l.b16 %v1237
        %v2511 = vunpack.c.h.b16 %v1237
        %v2512 = vunpack.c.l.b16 %v1238
        %v2513 = vunpack.c.h.b16 %v1238
        %v2514 = vunpack.c.l.b16 %v1239
        %v2515 = vunpack.c.h.b16 %v1239
        %v2516 = vunpack.c.l.b16 %v1240
        %v2517 = vunpack.c.h.b16 %v1240
        %v2518 = vunpack.c.l.b16 %v1241
        %v2519 = vunpack.c.h.b16 %v1241
        %v2520 = vunpack.c.l.b16 %v1242
        %v2521 = vunpack.c.h.b16 %v1242
        %v2522 = vunpack.c.l.b16 %v1243
        %v2523 = vunpack.c.h.b16 %v1243
        %v2524 = vunpack.c.l.b16 %v1244
        %v2525 = vunpack.c.h.b16 %v1244
        %v2526 = vunpack.c.l.b16 %v1245
        %v2527 = vunpack.c.h.b16 %v1245
        %v2528 = vunpack.c.l.b16 %v1246
        %v2529 = vunpack.c.h.b16 %v1246
        %v2530 = vunpack.c.l.b16 %v1247
        %v2531 = vunpack.c.h.b16 %v1247
        %v2532 = vunpack.c.l.b16 %v1248
        %v2533 = vunpack.c.h.b16 %v1248
        %v2534 = vunpack.c.l.b16 %v1249
        %v2535 = vunpack.c.h.b16 %v1249
        %v2536 = vunpack.c.l.b16 %v1250
        %v2537 = vunpack.c.h.b16 %v1250
        %v2538 = vunpack.c.l.b16 %v1251
        %v2539 = vunpack.c.h.b16 %v1251
        %v2540 = vunpack.c.l.b16 %v1252
        %v2541 = vunpack.c.h.b16 %v1252
        %v2542 = vunpack.c.l.b16 %v1253
        %v2543 = vunpack.c.h.b16 %v1253
        %v2544 = vunpack.c.l.b16 %v1254
        %v2545 = vunpack.c.h.b16 %v1254
        %v2546 = vunpack.c.l.b16 %v1255
        %v2547 = vunpack.c.h.b16 %v1255
        %v2548 = vunpack.c.l.b16 %v1256
        %v2549 = vunpack.c.h.b16 %v1256
        %v2550 = vunpack.c.l.b16 %v1257
        %v2551 = vunpack.c.h.b16 %v1257
        %v2552 = vunpack.c.l.b16 %v1258
        %v2553 = vunpack.c.h.b16 %v1258
        %v2554 = vunpack.c.l.b16 %v1259
        %v2555 = vunpack.c.h.b16 %v1259
        %v2556 = vunpack.c.l.b16 %v1260
        %v2557 = vunpack.c.h.b16 %v1260
        %v2558 = vunpack.c.l.b16 %v1261
        %v2559 = vunpack.c.h.b16 %v1261
        %v2560 = vunpack.c.l.b16 %v1262
        %v2561 = vunpack.c.h.b16 %v1262
        %v2562 = vunpack.c.l.b16 %v1263
        %v2563 = vunpack.c.h.b16 %v1263
        %v2564 = vunpack.c.l.b16 %v1264
        %v2565 = vunpack.c.h.b16 %v1264
        %v2566 = vunpack.c.l.b16 %v1265
        %v2567 = vunpack.c.h.b16 %v1265
        %v2568 = vunpack.c.l.b16 %v1266
        %v2569 = vunpack.c.h.b16 %v1266
        %v2570 = vunpack.c.l.b16 %v1267
        %v2571 = vunpack.c.h.b16 %v1267
        %v2572 = vunpack.c.l.b16 %v1268
        %v2573 = vunpack.c.h.b16 %v1268
        %v2574 = vunpack.c.l.b16 %v1269
        %v2575 = vunpack.c.h.b16 %v1269
        %v2576 = vunpack.c.l.b16 %v1270
        %v2577 = vunpack.c.h.b16 %v1270
        %v2578 = vunpack.c.l.b16 %v1271
        %v2579 = vunpack.c.h.b16 %v1271
        %v2580 = vunpack.c.l.b16 %v1272
        %v2581 = vunpack.c.h.b16 %v1272
        %v2582 = vunpack.c.l.b16 %v1273
        %v2583 = vunpack.c.h.b16 %v1273
        %v2584 = vunpack.c.l.b16 %v1274
        %v2585 = vunpack.c.h.b16 %v1274
        %v2586 = vunpack.c.l.b16 %v1275
        %v2587 = vunpack.c.h.b16 %v1275
        %v2588 = vunpack.c.l.b16 %v1276
        %v2589 = vunpack.c.h.b16 %v1276
        %v2590 = vunpack.c.l.b16 %v1277
        %v2591 = vunpack.c.h.b16 %v1277
        %v2592 = vunpack.c.l.b16 %v1278
        %v2593 = vunpack.c.h.b16 %v1278
        %v2594 = vunpack.c.l.b16 %v1279
        %v2595 = vunpack.c.h.b16 %v1279
        %v2596 = vunpack.c.l.b16 %v1280
        %v2597 = vunpack.c.h.b16 %v1280
        %v2598 = vunpack.c.l.b16 %v1281
        %v2599 = vunpack.c.h.b16 %v1281
        %v2600 = vunpack.c.l.b16 %v1282
        %v2601 = vunpack.c.h.b16 %v1282
        %v2602 = vunpack.c.l.b16 %v1283
        %v2603 = vunpack.c.h.b16 %v1283
        %v2604 = vunpack.c.l.b16 %v1284
        %v2605 = vunpack.c.h.b16 %v1284
        %v2606 = vunpack.c.l.b16 %v1285
        %v2607 = vunpack.c.h.b16 %v1285
        %v2608 = vunpack.c.l.b16 %v1286
        %v2609 = vunpack.c.h.b16 %v1286
        %v2610 = vunpack.c.l.b16 %v1287
        %v2611 = vunpack.c.h.b16 %v1287
        %v2612 = vunpack.c.l.b16 %v1288
        %v2613 = vunpack.c.h.b16 %v1288
        %v2614 = vunpack.c.l.b16 %v1289
        %v2615 = vunpack.c.h.b16 %v1289
        %v2616 = vunpack.c.l.b16 %v1290
        %v2617 = vunpack.c.h.b16 %v1290
        %v2618 = vunpack.c.l.b16 %v1291
        %v2619 = vunpack.c.h.b16 %v1291
        %v2620 = vunpack.c.l.b16 %v1292
        %v2621 = vunpack.c.h.b16 %v1292
        %v2622 = vunpack.c.l.b16 %v1293
        %v2623 = vunpack.c.h.b16 %v1293
        %v2624 = vunpack.c.l.b16 %v1294
        %v2625 = vunpack.c.h.b16 %v1294
        %v2626 = vunpack.c.l.b16 %v1295
        %v2627 = vunpack.c.h.b16 %v1295
        %v2628 = vunpack.c.l.b16 %v1296
        %v2629 = vunpack.c.h.b16 %v1296
        %v2630 = vunpack.c.l.b16 %v1297
        %v2631 = vunpack.c.h.b16 %v1297
        %v2632 = vunpack.c.l.b16 %v1298
        %v2633 = vunpack.c.h.b16 %v1298
        %v2634 = vunpack.c.l.b16 %v1299
        %v2635 = vunpack.c.h.b16 %v1299
        %v2636 = vunpack.c.l.b16 %v1300
        %v2637 = vunpack.c.h.b16 %v1300
        %v2638 = vunpack.c.l.b16 %v1301
        %v2639 = vunpack.c.h.b16 %v1301
        %v2640 = vunpack.c.l.b16 %v1302
        %v2641 = vunpack.c.h.b16 %v1302
        %v2642 = vunpack.c.l.b16 %v1303
        %v2643 = vunpack.c.h.b16 %v1303
        %v2644 = vunpack.c.l.b16 %v1304
        %v2645 = vunpack.c.h.b16 %v1304
        %v2646 = vunpack.c.l.b16 %v1305
        %v2647 = vunpack.c.h.b16 %v1305
        %v2648 = vunpack.c.l.b16 %v1306
        %v2649 = vunpack.c.h.b16 %v1306
        %v2650 = vunpack.c.l.b16 %v1307
        %v2651 = vunpack.c.h.b16 %v1307
        %v2652 = vunpack.c.l.b16 %v1308
        %v2653 = vunpack.c.h.b16 %v1308
        %v2654 = vunpack.c.l.b16 %v1309
        %v2655 = vunpack.c.h.b16 %v1309
        %v2656 = vunpack.c.l.b16 %v1310
        %v2657 = vunpack.c.h.b16 %v1310
        %v2658 = vunpack.c.l.b16 %v1311
        %v2659 = vunpack.c.h.b16 %v1311
        %v2660 = vunpack.c.l.b16 %v1312
        %v2661 = vunpack.c.h.b16 %v1312
        %v2662 = vunpack.c.l.b16 %v1313
        %v2663 = vunpack.c.h.b16 %v1313
        %v2664 = vunpack.c.l.b16 %v1314
        %v2665 = vunpack.c.h.b16 %v1314
        %v2666 = vunpack.c.l.b16 %v1315
        %v2667 = vunpack.c.h.b16 %v1315
        %v2668 = vunpack.c.l.b16 %v1316
        %v2669 = vunpack.c.h.b16 %v1316
        %v2670 = vunpack.c.l.b16 %v1317
        %v2671 = vunpack.c.h.b16 %v1317
        %v2672 = vunpack.c.l.b16 %v1318
        %v2673 = vunpack.c.h.b16 %v1318
        %v2674 = vunpack.c.l.b16 %v1319
        %v2675 = vunpack.c.h.b16 %v1319
        %v2676 = vunpack.c.l.b16 %v1320
        %v2677 = vunpack.c.h.b16 %v1320
        %v2678 = vunpack.c.l.b16 %v1321
        %v2679 = vunpack.c.h.b16 %v1321
        %v2680 = vunpack.c.l.b16 %v1322
        %v2681 = vunpack.c.h.b16 %v1322
        %v2682 = vunpack.c.l.b16 %v1323
        %v2683 = vunpack.c.h.b16 %v1323
        %v2684 = vunpack.c.l.b16 %v1324
        %v2685 = vunpack.c.h.b16 %v1324
        %v2686 = vunpack.c.l.b16 %v1325
        %v2687 = vunpack.c.h.b16 %v1325
        %v2688 = vunpack.c.l.b16 %v1326
        %v2689 = vunpack.c.h.b16 %v1326
        %v2690 = vunpack.c.l.b16 %v1327
        %v2691 = vunpack.c.h.b16 %v1327
        %v2692 = vunpack.c.l.b16 %v1328
        %v2693 = vunpack.c.h.b16 %v1328
        %v2694 = vunpack.c.l.b16 %v1329
        %v2695 = vunpack.c.h.b16 %v1329
        %v2696 = vunpack.c.l.b16 %v1330
        %v2697 = vunpack.c.h.b16 %v1330
        %v2698 = vunpack.c.l.b16 %v1331
        %v2699 = vunpack.c.h.b16 %v1331
        %v2700 = vunpack.c.l.b16 %v1332
        %v2701 = vunpack.c.h.b16 %v1332
        %v2702 = vunpack.c.l.b16 %v1333
        %v2703 = vunpack.c.h.b16 %v1333
        %v2704 = vunpack.c.l.b16 %v1334
        %v2705 = vunpack.c.h.b16 %v1334
        %v2706 = vunpack.c.l.b16 %v1335
        %v2707 = vunpack.c.h.b16 %v1335
        %v2708 = vunpack.c.l.b16 %v1336
        %v2709 = vunpack.c.h.b16 %v1336
        %v2710 = vunpack.c.l.b16 %v1337
        %v2711 = vunpack.c.h.b16 %v1337
        %v2712 = vunpack.c.l.b16 %v1338
        %v2713 = vunpack.c.h.b16 %v1338
        %v2714 = vunpack.c.l.b16 %v1339
        %v2715 = vunpack.c.h.b16 %v1339
        %v2716 = vunpack.c.l.b16 %v1340
        %v2717 = vunpack.c.h.b16 %v1340
        %v2718 = vunpack.c.l.b16 %v1341
        %v2719 = vunpack.c.h.b16 %v1341
        %v2720 = vunpack.c.l.b16 %v1342
        %v2721 = vunpack.c.h.b16 %v1342
        %v2722 = vunpack.c.l.b16 %v1343
        %v2723 = vunpack.c.h.b16 %v1343
        %v2724 = vunpack.c.l.b16 %v1344
        %v2725 = vunpack.c.h.b16 %v1344
        %v2726 = vunpack.c.l.b16 %v1345
        %v2727 = vunpack.c.h.b16 %v1345
        %v2728 = vunpack.c.l.b16 %v1346
        %v2729 = vunpack.c.h.b16 %v1346
        %v2730 = vunpack.c.l.b16 %v1347
        %v2731 = vunpack.c.h.b16 %v1347
        %v2732 = vunpack.c.l.b16 %v1348
        %v2733 = vunpack.c.h.b16 %v1348
        %v2734 = vunpack.c.l.b16 %v1349
        %v2735 = vunpack.c.h.b16 %v1349
        %v2736 = vunpack.c.l.b16 %v1350
        %v2737 = vunpack.c.h.b16 %v1350
        %v2738 = vunpack.c.l.b16 %v1351
        %v2739 = vunpack.c.h.b16 %v1351
        %v2740 = vunpack.c.l.b16 %v1352
        %v2741 = vunpack.c.h.b16 %v1352
        %v2742 = vunpack.c.l.b16 %v1353
        %v2743 = vunpack.c.h.b16 %v1353
        %v2744 = vunpack.c.l.b16 %v1354
        %v2745 = vunpack.c.h.b16 %v1354
        %v2746 = vunpack.c.l.b16 %v1355
        %v2747 = vunpack.c.h.b16 %v1355
        %v2748 = vunpack.c.l.b16 %v1356
        %v2749 = vunpack.c.h.b16 %v1356
        %v2750 = vunpack.c.l.b16 %v1357
        %v2751 = vunpack.c.h.b16 %v1357
        %v2752 = vunpack.c.l.b16 %v1358
        %v2753 = vunpack.c.h.b16 %v1358
        %v2754 = vunpack.c.l.b16 %v1359
        %v2755 = vunpack.c.h.b16 %v1359
        %v2756 = vunpack.c.l.b16 %v1360
        %v2757 = vunpack.c.h.b16 %v1360
        %v2758 = vunpack.c.l.b16 %v1361
        %v2759 = vunpack.c.h.b16 %v1361
        %v2760 = vunpack.c.l.b16 %v1362
        %v2761 = vunpack.c.h.b16 %v1362
        %v2762 = vunpack.c.l.b16 %v1363
        %v2763 = vunpack.c.h.b16 %v1363
        %v2764 = vunpack.c.l.b16 %v1364
        %v2765 = vunpack.c.h.b16 %v1364
        %v2766 = vunpack.c.l.b16 %v1365
        %v2767 = vunpack.c.h.b16 %v1365
        %v2768 = vunpack.c.l.b16 %v1366
        %v2769 = vunpack.c.h.b16 %v1366
        %v2770 = vunpack.c.l.b16 %v1367
        %v2771 = vunpack.c.h.b16 %v1367
        %v2772 = vunpack.c.l.b16 %v1368
        %v2773 = vunpack.c.h.b16 %v1368
        %v2774 = vunpack.c.l.b16 %v1369
        %v2775 = vunpack.c.h.b16 %v1369
        %v2776 = vunpack.c.l.b16 %v1370
        %v2777 = vunpack.c.h.b16 %v1370
        %v2778 = vunpack.c.l.b16 %v1371
        %v2779 = vunpack.c.h.b16 %v1371
        %v2780 = vunpack.c.l.b16 %v1372
        %v2781 = vunpack.c.h.b16 %v1372
        %v2782 = vunpack.c.l.b16 %v1373
        %v2783 = vunpack.c.h.b16 %v1373
        %v2784 = vunpack.c.l.b16 %v1374
        %v2785 = vunpack.c.h.b16 %v1374
        %v2786 = vunpack.c.l.b16 %v1375
        %v2787 = vunpack.c.h.b16 %v1375
        %v2788 = vunpack.c.l.b16 %v1376
        %v2789 = vunpack.c.h.b16 %v1376
        %v2790 = vunpack.c.l.b16 %v1377
        %v2791 = vunpack.c.h.b16 %v1377
        %v2792 = vunpack.c.l.b16 %v1378
        %v2793 = vunpack.c.h.b16 %v1378
        %v2794 = vunpack.c.l.b16 %v1379
        %v2795 = vunpack.c.h.b16 %v1379
        %v2796 = vunpack.c.l.b16 %v1380
        %v2797 = vunpack.c.h.b16 %v1380
        %v2798 = vunpack.c.l.b16 %v1381
        %v2799 = vunpack.c.h.b16 %v1381
        %v2800 = vunpack.c.l.b16 %v1382
        %v2801 = vunpack.c.h.b16 %v1382
        %v2802 = vunpack.c.l.b16 %v1383
        %v2803 = vunpack.c.h.b16 %v1383
        %v2804 = vunpack.c.l.b16 %v1384
        %v2805 = vunpack.c.h.b16 %v1384
        %v2806 = vunpack.c.l.b16 %v1385
        %v2807 = vunpack.c.h.b16 %v1385
        %v2808 = vunpack.c.l.b16 %v1386
        %v2809 = vunpack.c.h.b16 %v1386
        %v2810 = vunpack.c.l.b16 %v1387
        %v2811 = vunpack.c.h.b16 %v1387
        %v2812 = vunpack.c.l.b16 %v1388
        %v2813 = vunpack.c.h.b16 %v1388
        %v2814 = vunpack.c.l.b16 %v1389
        %v2815 = vunpack.c.h.b16 %v1389
        %v2816 = vunpack.c.l.b16 %v1390
        %v2817 = vunpack.c.h.b16 %v1390
        %v2818 = vunpack.c.l.b16 %v1391
        %v2819 = vunpack.c.h.b16 %v1391
        %v2820 = vunpack.c.l.b16 %v1392
        %v2821 = vunpack.c.h.b16 %v1392
        %v2822 = vunpack.c.l.b16 %v1393
        %v2823 = vunpack.c.h.b16 %v1393
        %v2824 = vunpack.c.l.b16 %v1394
        %v2825 = vunpack.c.h.b16 %v1394
        %v2826 = vunpack.c.l.b16 %v1395
        %v2827 = vunpack.c.h.b16 %v1395
        %v2828 = vunpack.c.l.b16 %v1396
        %v2829 = vunpack.c.h.b16 %v1396
        %v2830 = vunpack.c.l.b16 %v1397
        %v2831 = vunpack.c.h.b16 %v1397
        %v2832 = vunpack.c.l.b16 %v1398
        %v2833 = vunpack.c.h.b16 %v1398
        %v2834 = vunpack.c.l.b16 %v1399
        %v2835 = vunpack.c.h.b16 %v1399
        %v2836 = vunpack.c.l.b16 %v1400
        %v2837 = vunpack.c.h.b16 %v1400
        %v2838 = vunpack.c.l.b16 %v1401
        %v2839 = vunpack.c.h.b16 %v1401
        %v2840 = vunpack.c.l.b16 %v1402
        %v2841 = vunpack.c.h.b16 %v1402
        %v2842 = vunpack.c.l.b16 %v1403
        %v2843 = vunpack.c.h.b16 %v1403
        %v2844 = vunpack.c.l.b16 %v1404
        %v2845 = vunpack.c.h.b16 %v1404
        %v2846 = vunpack.c.l.b16 %v1405
        %v2847 = vunpack.c.h.b16 %v1405
        %v2848 = vunpack.c.l.b16 %v1406
        %v2849 = vunpack.c.h.b16 %v1406
        %v2850 = vunpack.c.l.b16 %v1407
        %v2851 = vunpack.c.h.b16 %v1407
        %v2852 = vunpack.c.l.b16 %v1408
        %v2853 = vunpack.c.h.b16 %v1408
        %v2854 = vunpack.c.l.b16 %v1409
        %v2855 = vunpack.c.h.b16 %v1409
        %v2856 = vunpack.c.l.b16 %v1410
        %v2857 = vunpack.c.h.b16 %v1410
        %v2858 = vunpack.c.l.b16 %v1411
        %v2859 = vunpack.c.h.b16 %v1411
        %v2860 = vunpack.c.l.b16 %v1412
        %v2861 = vunpack.c.h.b16 %v1412
        %v2862 = vunpack.c.l.b16 %v1413
        %v2863 = vunpack.c.h.b16 %v1413
        %v2864 = vunpack.c.l.b16 %v1414
        %v2865 = vunpack.c.h.b16 %v1414
        %v2866 = vunpack.c.l.b16 %v1415
        %v2867 = vunpack.c.h.b16 %v1415
        %v2868 = vunpack.c.l.b16 %v1416
        %v2869 = vunpack.c.h.b16 %v1416
        %v2870 = vunpack.c.l.b16 %v1417
        %v2871 = vunpack.c.h.b16 %v1417
        %v2872 = vunpack.c.l.b16 %v1418
        %v2873 = vunpack.c.h.b16 %v1418
        %v2874 = vunpack.c.l.b16 %v1419
        %v2875 = vunpack.c.h.b16 %v1419
        %v2876 = vunpack.c.l.b16 %v1420
        %v2877 = vunpack.c.h.b16 %v1420
        %v2878 = vunpack.c.l.b16 %v1421
        %v2879 = vunpack.c.h.b16 %v1421
        %v2880 = vunpack.c.l.b16 %v1422
        %v2881 = vunpack.c.h.b16 %v1422
        %v2882 = vunpack.c.l.b16 %v1423
        %v2883 = vunpack.c.h.b16 %v1423
        %v2884 = vunpack.c.l.b16 %v1424
        %v2885 = vunpack.c.h.b16 %v1424
        %v2886 = vunpack.c.l.b16 %v1425
        %v2887 = vunpack.c.h.b16 %v1425
        %v2888 = vunpack.c.l.b16 %v1426
        %v2889 = vunpack.c.h.b16 %v1426
        %v2890 = vunpack.c.l.b16 %v1427
        %v2891 = vunpack.c.h.b16 %v1427
        %v2892 = vunpack.c.l.b16 %v1428
        %v2893 = vunpack.c.h.b16 %v1428
        %v2894 = vunpack.c.l.b16 %v1429
        %v2895 = vunpack.c.h.b16 %v1429
        %v2896 = vunpack.c.l.b16 %v1430
        %v2897 = vunpack.c.h.b16 %v1430
        %v2898 = vunpack.c.l.b16 %v1431
        %v2899 = vunpack.c.h.b16 %v1431
        %v2900 = vunpack.c.l.b16 %v1432
        %v2901 = vunpack.c.h.b16 %v1432
        %v2902 = vunpack.c.l.b16 %v1433
        %v2903 = vunpack.c.h.b16 %v1433
        %v2904 = vunpack.c.l.b16 %v1434
        %v2905 = vunpack.c.h.b16 %v1434
        %v2906 = vunpack.c.l.b16 %v1435
        %v2907 = vunpack.c.h.b16 %v1435
        %v2908 = vunpack.c.l.b16 %v1436
        %v2909 = vunpack.c.h.b16 %v1436
        %v2910 = vunpack.c.l.b16 %v1437
        %v2911 = vunpack.c.h.b16 %v1437
        %v2912 = vunpack.c.l.b16 %v1438
        %v2913 = vunpack.c.h.b16 %v1438
        %v2914 = vunpack.c.l.b16 %v1439
        %v2915 = vunpack.c.h.b16 %v1439
        %v2916 = vunpack.c.l.b16 %v1440
        %v2917 = vunpack.c.h.b16 %v1440
        %v2918 = vunpack.c.l.b16 %v1441
        %v2919 = vunpack.c.h.b16 %v1441
        %v2920 = vunpack.c.l.b16 %v1442
        %v2921 = vunpack.c.h.b16 %v1442
        %v2922 = vunpack.c.l.b16 %v1443
        %v2923 = vunpack.c.h.b16 %v1443
        %v2924 = vunpack.c.l.b16 %v1444
        %v2925 = vunpack.c.h.b16 %v1444
        %v2926 = vunpack.c.l.b16 %v1445
        %v2927 = vunpack.c.h.b16 %v1445
        %v2928 = vunpack.c.l.b16 %v1446
        %v2929 = vunpack.c.h.b16 %v1446
        %v2930 = vunpack.c.l.b16 %v1447
        %v2931 = vunpack.c.h.b16 %v1447
        %v2932 = vunpack.c.l.b16 %v1448
        %v2933 = vunpack.c.h.b16 %v1448
        %v2934 = vunpack.c.l.b16 %v1449
        %v2935 = vunpack.c.h.b16 %v1449
        %v2936 = vunpack.c.l.b16 %v1450
        %v2937 = vunpack.c.h.b16 %v1450
        %v2938 = vunpack.c.l.b16 %v1451
        %v2939 = vunpack.c.h.b16 %v1451
        %v2940 = vunpack.c.l.b16 %v1452
        %v2941 = vunpack.c.h.b16 %v1452
        %v2942 = vunpack.c.l.b16 %v1453
        %v2943 = vunpack.c.h.b16 %v1453
        %v2944 = vunpack.c.l.b16 %v1454
        %v2945 = vunpack.c.h.b16 %v1454
        %v2946 = vunpack.c.l.b16 %v1455
        %v2947 = vunpack.c.h.b16 %v1455
        %v2948 = vunpack.c.l.b16 %v1456
        %v2949 = vunpack.c.h.b16 %v1456
        %v2950 = vunpack.c.l.b16 %v1457
        %v2951 = vunpack.c.h.b16 %v1457
        %v2952 = vunpack.c.l.b16 %v1458
        %v2953 = vunpack.c.h.b16 %v1458
        %v2954 = vunpack.c.l.b16 %v1459
        %v2955 = vunpack.c.h.b16 %v1459
        %v2956 = vunpack.c.l.b16 %v1460
        %v2957 = vunpack.c.h.b16 %v1460
        %v2958 = vunpack.c.l.b16 %v1461
        %v2959 = vunpack.c.h.b16 %v1461
        %v2960 = vunpack.c.l.b16 %v1462
        %v2961 = vunpack.c.h.b16 %v1462
        %v2962 = vunpack.c.l.b16 %v1463
        %v2963 = vunpack.c.h.b16 %v1463
        %v2964 = vunpack.c.l.b16 %v1464
        %v2965 = vunpack.c.h.b16 %v1464
        %v2966 = vunpack.c.l.b16 %v1465
        %v2967 = vunpack.c.h.b16 %v1465
        %v2968 = vunpack.c.l.b16 %v1466
        %v2969 = vunpack.c.h.b16 %v1466
        %v2970 = vunpack.c.l.b16 %v1467
        %v2971 = vunpack.c.h.b16 %v1467
        %v2972 = vunpack.c.l.b16 %v1468
        %v2973 = vunpack.c.h.b16 %v1468
        %v2974 = vunpack.c.l.b16 %v1469
        %v2975 = vunpack.c.h.b16 %v1469
        %v2976 = vunpack.c.l.b16 %v1470
        %v2977 = vunpack.c.h.b16 %v1470
        %v2978 = vunpack.c.l.b16 %v1471
        %v2979 = vunpack.c.h.b16 %v1471
        %v2980 = vunpack.c.l.b16 %v1472
        %v2981 = vunpack.c.h.b16 %v1472
        %v2982 = vunpack.c.l.b16 %v1473
        %v2983 = vunpack.c.h.b16 %v1473
        %v2984 = vunpack.c.l.b16 %v1474
        %v2985 = vunpack.c.h.b16 %v1474
        %v2986 = vunpack.c.l.b16 %v1475
        %v2987 = vunpack.c.h.b16 %v1475
        %v2988 = vunpack.c.l.b16 %v1476
        %v2989 = vunpack.c.h.b16 %v1476
        %v2990 = vunpack.c.l.b16 %v1477
        %v2991 = vunpack.c.h.b16 %v1477
        %v2992 = vunpack.c.l.b16 %v1478
        %v2993 = vunpack.c.h.b16 %v1478
        %v2994 = vunpack.c.l.b16 %v1479
        %v2995 = vunpack.c.h.b16 %v1479
        %v2996 = vunpack.c.l.b16 %v1480
        %v2997 = vunpack.c.h.b16 %v1480
        %v2998 = vunpack.c.l.b16 %v1481
        %v2999 = vunpack.c.h.b16 %v1481
        %v3000 = vunpack.c.l.b16 %v1482
        %v3001 = vunpack.c.h.b16 %v1482
        %v3002 = vunpack.c.l.b16 %v1483
        %v3003 = vunpack.c.h.b16 %v1483
        %v3004 = vunpack.c.l.b16 %v1484
        %v3005 = vunpack.c.h.b16 %v1484
        %v3006 = vunpack.c.l.b16 %v1485
        %v3007 = vunpack.c.h.b16 %v1485
        %v3008 = vunpack.c.l.b16 %v1486
        %v3009 = vunpack.c.h.b16 %v1486
        %v3010 = vunpack.c.l.b16 %v1487
        %v3011 = vunpack.c.h.b16 %v1487
        %v3012 = vunpack.c.l.b16 %v1488
        %v3013 = vunpack.c.h.b16 %v1488
        %v3014 = vunpack.c.l.b16 %v1489
        %v3015 = vunpack.c.h.b16 %v1489
        %v3016 = vunpack.c.l.b16 %v1490
        %v3017 = vunpack.c.h.b16 %v1490
        %v3018 = vunpack.c.l.b16 %v1491
        %v3019 = vunpack.c.h.b16 %v1491
        %v3020 = vunpack.c.l.b16 %v1492
        %v3021 = vunpack.c.h.b16 %v1492
        %v3022 = vunpack.c.l.b16 %v1493
        %v3023 = vunpack.c.h.b16 %v1493
        %v3024 = vunpack.c.l.b16 %v1494
        %v3025 = vunpack.c.h.b16 %v1494
        %v3026 = vunpack.c.l.b16 %v1495
        %v3027 = vunpack.c.h.b16 %v1495
        %v3028 = vunpack.c.l.b16 %v1496
        %v3029 = vunpack.c.h.b16 %v1496
        %v3030 = vunpack.c.l.b16 %v1497
        %v3031 = vunpack.c.h.b16 %v1497
        %v3032 = vunpack.c.l.b16 %v1498
        %v3033 = vunpack.c.h.b16 %v1498
        %v3034 = vunpack.c.l.b16 %v1499
        %v3035 = vunpack.c.h.b16 %v1499
        %v3036 = vunpack.c.l.b16 %v1500
        %v3037 = vunpack.c.h.b16 %v1500
        %v3038 = vunpack.c.l.b16 %v1501
        %v3039 = vunpack.c.h.b16 %v1501
        %v3040 = vunpack.c.l.b16 %v1502
        %v3041 = vunpack.c.h.b16 %v1502
        %v3042 = vunpack.c.l.b16 %v1503
        %v3043 = vunpack.c.h.b16 %v1503
        %v3044 = vunpack.c.l.b16 %v1504
        %v3045 = vunpack.c.h.b16 %v1504
        %v3046 = vunpack.c.l.b16 %v1505
        %v3047 = vunpack.c.h.b16 %v1505
        %v3048 = vunpack.c.l.b16 %v1506
        %v3049 = vunpack.c.h.b16 %v1506
        %v3050 = vunpack.c.l.b16 %v1507
        %v3051 = vunpack.c.h.b16 %v1507
        %v3052 = vunpack.c.l.b16 %v1508
        %v3053 = vunpack.c.h.b16 %v1508
        %v3054 = vunpack.c.l.b16 %v1509
        %v3055 = vunpack.c.h.b16 %v1509
        %v3056 = vunpack.c.l.b16 %v1510
        %v3057 = vunpack.c.h.b16 %v1510
        %v3058 = vunpack.c.l.b16 %v1511
        %v3059 = vunpack.c.h.b16 %v1511
        %v3060 = vunpack.c.l.b16 %v1512
        %v3061 = vunpack.c.h.b16 %v1512
        %v3062 = vunpack.c.l.b16 %v1513
        %v3063 = vunpack.c.h.b16 %v1513
        %v3064 = vunpack.c.l.b16 %v1514
        %v3065 = vunpack.c.h.b16 %v1514
        %v3066 = vunpack.c.l.b16 %v1515
        %v3067 = vunpack.c.h.b16 %v1515
        %v3068 = vunpack.c.l.b16 %v1516
        %v3069 = vunpack.c.h.b16 %v1516
        %v3070 = vunpack.c.l.b16 %v1517
        %v3071 = vunpack.c.h.b16 %v1517
        %v3072 = vunpack.c.l.b16 %v1518
        %v3073 = vunpack.c.h.b16 %v1518
        %v3074 = vunpack.c.l.b16 %v1519
        %v3075 = vunpack.c.h.b16 %v1519
        %v3076 = vunpack.c.l.b16 %v1520
        %v3077 = vunpack.c.h.b16 %v1520
        %v3078 = vunpack.c.l.b16 %v1521
        %v3079 = vunpack.c.h.b16 %v1521
        %v3080 = vunpack.c.l.b16 %v1522
        %v3081 = vunpack.c.h.b16 %v1522
        %v3082 = vunpack.c.l.b16 %v1523
        %v3083 = vunpack.c.h.b16 %v1523
        %v3084 = vunpack.c.l.b16 %v1524
        %v3085 = vunpack.c.h.b16 %v1524
        %v3086 = vunpack.c.l.b16 %v1525
        %v3087 = vunpack.c.h.b16 %v1525
        %v3088 = vunpack.c.l.b16 %v1526
        %v3089 = vunpack.c.h.b16 %v1526
        %v3090 = vunpack.c.l.b16 %v1527
        %v3091 = vunpack.c.h.b16 %v1527
        %v3092 = vunpack.c.l.b16 %v1528
        %v3093 = vunpack.c.h.b16 %v1528
        %v3094 = vunpack.c.l.b16 %v1529
        %v3095 = vunpack.c.h.b16 %v1529
        %v3096 = vunpack.c.l.b16 %v1530
        %v3097 = vunpack.c.h.b16 %v1530
        %v3098 = vunpack.c.l.b16 %v1531
        %v3099 = vunpack.c.h.b16 %v1531
        %v3100 = vunpack.c.l.b16 %v1532
        %v3101 = vunpack.c.h.b16 %v1532
        %v3102 = vunpack.c.l.b16 %v1533
        %v3103 = vunpack.c.h.b16 %v1533
        %v3104 = vunpack.c.l.b16 %v1534
        %v3105 = vunpack.c.h.b16 %v1534
        %v3106 = vunpack.c.l.b16 %v1535
        %v3107 = vunpack.c.h.b16 %v1535
        %v3108 = vunpack.c.l.b16 %v1536
        %v3109 = vunpack.c.h.b16 %v1536
        %v3110 = vunpack.c.l.b16 %v1537
        %v3111 = vunpack.c.h.b16 %v1537
        %v3112 = vunpack.c.l.b16 %v1538
        %v3113 = vunpack.c.h.b16 %v1538
        %v3114 = vunpack.c.l.b16 %v1539
        %v3115 = vunpack.c.h.b16 %v1539
        %v3116 = vunpack.c.l.b16 %v1540
        %v3117 = vunpack.c.h.b16 %v1540
        %v3118 = vunpack.c.l.b16 %v1541
        %v3119 = vunpack.c.h.b16 %v1541
        %v3120 = vpack.c.b16 %v2104, %v2096
        %v3121 = vpack.c.b16 %v2105, %v2097
        %v3122 = vpack.c.b16 %v2106, %v2098
        %v3123 = vpack.c.b16 %v2107, %v2099
        %v3124 = vpack.c.b16 %v2108, %v2100
        %v3125 = vpack.c.b16 %v2109, %v2101
        %v3126 = vpack.c.b16 %v2110, %v2102
        %v3127 = vpack.c.b16 %v2111, %v2103
        %v3128 = vpack.c.b16 %v2120, %v2112
        %v3129 = vpack.c.b16 %v2121, %v2113
        %v3130 = vpack.c.b16 %v2122, %v2114
        %v3131 = vpack.c.b16 %v2123, %v2115
        %v3132 = vpack.c.b16 %v2124, %v2116
        %v3133 = vpack.c.b16 %v2125, %v2117
        %v3134 = vpack.c.b16 %v2126, %v2118
        %v3135 = vpack.c.b16 %v2127, %v2119
        %v3136 = vpack.c.b16 %v2136, %v2128
        %v3137 = vpack.c.b16 %v2137, %v2129
        %v3138 = vpack.c.b16 %v2138, %v2130
        %v3139 = vpack.c.b16 %v2139, %v2131
        %v3140 = vpack.c.b16 %v2140, %v2132
        %v3141 = vpack.c.b16 %v2141, %v2133
        %v3142 = vpack.c.b16 %v2142, %v2134
        %v3143 = vpack.c.b16 %v2143, %v2135
        %v3144 = vpack.c.b16 %v2152, %v2144
        %v3145 = vpack.c.b16 %v2153, %v2145
        %v3146 = vpack.c.b16 %v2154, %v2146
        %v3147 = vpack.c.b16 %v2155, %v2147
        %v3148 = vpack.c.b16 %v2156, %v2148
        %v3149 = vpack.c.b16 %v2157, %v2149
        %v3150 = vpack.c.b16 %v2158, %v2150
        %v3151 = vpack.c.b16 %v2159, %v2151
        %v3152 = vpack.c.b16 %v2168, %v2160
        %v3153 = vpack.c.b16 %v2169, %v2161
        %v3154 = vpack.c.b16 %v2170, %v2162
        %v3155 = vpack.c.b16 %v2171, %v2163
        %v3156 = vpack.c.b16 %v2172, %v2164
        %v3157 = vpack.c.b16 %v2173, %v2165
        %v3158 = vpack.c.b16 %v2174, %v2166
        %v3159 = vpack.c.b16 %v2175, %v2167
        %v3160 = vpack.c.b16 %v2184, %v2176
        %v3161 = vpack.c.b16 %v2185, %v2177
        %v3162 = vpack.c.b16 %v2186, %v2178
        %v3163 = vpack.c.b16 %v2187, %v2179
        %v3164 = vpack.c.b16 %v2188, %v2180
        %v3165 = vpack.c.b16 %v2189, %v2181
        %v3166 = vpack.c.b16 %v2190, %v2182
        %v3167 = vpack.c.b16 %v2191, %v2183
        %v3168 = vpack.c.b16 %v2200, %v2192
        %v3169 = vpack.c.b16 %v2201, %v2193
        %v3170 = vpack.c.b16 %v2202, %v2194
        %v3171 = vpack.c.b16 %v2203, %v2195
        %v3172 = vpack.c.b16 %v2204, %v2196
        %v3173 = vpack.c.b16 %v2205, %v2197
        %v3174 = vpack.c.b16 %v2206, %v2198
        %v3175 = vpack.c.b16 %v2207, %v2199
        %v3176 = vpack.c.b16 %v2216, %v2208
        %v3177 = vpack.c.b16 %v2217, %v2209
        %v3178 = vpack.c.b16 %v2218, %v2210
        %v3179 = vpack.c.b16 %v2219, %v2211
        %v3180 = vpack.c.b16 %v2220, %v2212
        %v3181 = vpack.c.b16 %v2221, %v2213
        %v3182 = vpack.c.b16 %v2222, %v2214
        %v3183 = vpack.c.b16 %v2223, %v2215
        %v3184 = vpack.c.b16 %v2232, %v2224
        %v3185 = vpack.c.b16 %v2233, %v2225
        %v3186 = vpack.c.b16 %v2234, %v2226
        %v3187 = vpack.c.b16 %v2235, %v2227
        %v3188 = vpack.c.b16 %v2236, %v2228
        %v3189 = vpack.c.b16 %v2237, %v2229
        %v3190 = vpack.c.b16 %v2238, %v2230
        %v3191 = vpack.c.b16 %v2239, %v2231
        %v3192 = vpack.c.b16 %v2248, %v2240
        %v3193 = vpack.c.b16 %v2249, %v2241
        %v3194 = vpack.c.b16 %v2250, %v2242
        %v3195 = vpack.c.b16 %v2251, %v2243
        %v3196 = vpack.c.b16 %v2252, %v2244
        %v3197 = vpack.c.b16 %v2253, %v2245
        %v3198 = vpack.c.b16 %v2254, %v2246
        %v3199 = vpack.c.b16 %v2255, %v2247
        %v3200 = vpack.c.b16 %v2264, %v2256
        %v3201 = vpack.c.b16 %v2265, %v2257
        %v3202 = vpack.c.b16 %v2266, %v2258
        %v3203 = vpack.c.b16 %v2267, %v2259
        %v3204 = vpack.c.b16 %v2268, %v2260
        %v3205 = vpack.c.b16 %v2269, %v2261
        %v3206 = vpack.c.b16 %v2270, %v2262
        %v3207 = vpack.c.b16 %v2271, %v2263
        %v3208 = vpack.c.b16 %v2280, %v2272
        %v3209 = vpack.c.b16 %v2281, %v2273
        %v3210 = vpack.c.b16 %v2282, %v2274
        %v3211 = vpack.c.b16 %v2283, %v2275
        %v3212 = vpack.c.b16 %v2284, %v2276
        %v3213 = vpack.c.b16 %v2285, %v2277
        %v3214 = vpack.c.b16 %v2286, %v2278
        %v3215 = vpack.c.b16 %v2287, %v2279
        %v3216 = vpack.c.b16 %v2296, %v2288
        %v3217 = vpack.c.b16 %v2297, %v2289
        %v3218 = vpack.c.b16 %v2298, %v2290
        %v3219 = vpack.c.b16 %v2299, %v2291
        %v3220 = vpack.c.b16 %v2300, %v2292
        %v3221 = vpack.c.b16 %v2301, %v2293
        %v3222 = vpack.c.b16 %v2302, %v2294
        %v3223 = vpack.c.b16 %v2303, %v2295
        %v3224 = vpack.c.b16 %v2312, %v2304
        %v3225 = vpack.c.b16 %v2313, %v2305
        %v3226 = vpack.c.b16 %v2314, %v2306
        %v3227 = vpack.c.b16 %v2315, %v2307
        %v3228 = vpack.c.b16 %v2316, %v2308
        %v3229 = vpack.c.b16 %v2317, %v2309
        %v3230 = vpack.c.b16 %v2318, %v2310
        %v3231 = vpack.c.b16 %v2319, %v2311
        %v3232 = vpack.c.b16 %v2328, %v2320
        %v3233 = vpack.c.b16 %v2329, %v2321
        %v3234 = vpack.c.b16 %v2330, %v2322
        %v3235 = vpack.c.b16 %v2331, %v2323
        %v3236 = vpack.c.b16 %v2332, %v2324
        %v3237 = vpack.c.b16 %v2333, %v2325
        %v3238 = vpack.c.b16 %v2334, %v2326
        %v3239 = vpack.c.b16 %v2335, %v2327
        %v3240 = vpack.c.b16 %v2344, %v2336
        %v3241 = vpack.c.b16 %v2345, %v2337
        %v3242 = vpack.c.b16 %v2346, %v2338
        %v3243 = vpack.c.b16 %v2347, %v2339
        %v3244 = vpack.c.b16 %v2348, %v2340
        %v3245 = vpack.c.b16 %v2349, %v2341
        %v3246 = vpack.c.b16 %v2350, %v2342
        %v3247 = vpack.c.b16 %v2351, %v2343
        %v3248 = vpack.c.b16 %v2360, %v2352
        %v3249 = vpack.c.b16 %v2361, %v2353
        %v3250 = vpack.c.b16 %v2362, %v2354
        %v3251 = vpack.c.b16 %v2363, %v2355
        %v3252 = vpack.c.b16 %v2364, %v2356
        %v3253 = vpack.c.b16 %v2365, %v2357
        %v3254 = vpack.c.b16 %v2366, %v2358
        %v3255 = vpack.c.b16 %v2367, %v2359
        %v3256 = vpack.c.b16 %v2376, %v2368
        %v3257 = vpack.c.b16 %v2377, %v2369
        %v3258 = vpack.c.b16 %v2378, %v2370
        %v3259 = vpack.c.b16 %v2379, %v2371
        %v3260 = vpack.c.b16 %v2380, %v2372
        %v3261 = vpack.c.b16 %v2381, %v2373
        %v3262 = vpack.c.b16 %v2382, %v2374
        %v3263 = vpack.c.b16 %v2383, %v2375
        %v3264 = vpack.c.b16 %v2392, %v2384
        %v3265 = vpack.c.b16 %v2393, %v2385
        %v3266 = vpack.c.b16 %v2394, %v2386
        %v3267 = vpack.c.b16 %v2395, %v2387
        %v3268 = vpack.c.b16 %v2396, %v2388
        %v3269 = vpack.c.b16 %v2397, %v2389
        %v3270 = vpack.c.b16 %v2398, %v2390
        %v3271 = vpack.c.b16 %v2399, %v2391
        %v3272 = vpack.c.b16 %v2408, %v2400
        %v3273 = vpack.c.b16 %v2409, %v2401
        %v3274 = vpack.c.b16 %v2410, %v2402
        %v3275 = vpack.c.b16 %v2411, %v2403
        %v3276 = vpack.c.b16 %v2412, %v2404
        %v3277 = vpack.c.b16 %v2413, %v2405
        %v3278 = vpack.c.b16 %v2414, %v2406
        %v3279 = vpack.c.b16 %v2415, %v2407
        %v3280 = vpack.c.b16 %v2424, %v2416
        %v3281 = vpack.c.b16 %v2425, %v2417
        %v3282 = vpack.c.b16 %v2426, %v2418
        %v3283 = vpack.c.b16 %v2427, %v2419
        %v3284 = vpack.c.b16 %v2428, %v2420
        %v3285 = vpack.c.b16 %v2429, %v2421
        %v3286 = vpack.c.b16 %v2430, %v2422
        %v3287 = vpack.c.b16 %v2431, %v2423
        %v3288 = vpack.c.b16 %v2440, %v2432
        %v3289 = vpack.c.b16 %v2441, %v2433
        %v3290 = vpack.c.b16 %v2442, %v2434
        %v3291 = vpack.c.b16 %v2443, %v2435
        %v3292 = vpack.c.b16 %v2444, %v2436
        %v3293 = vpack.c.b16 %v2445, %v2437
        %v3294 = vpack.c.b16 %v2446, %v2438
        %v3295 = vpack.c.b16 %v2447, %v2439
        %v3296 = vpack.c.b16 %v2456, %v2448
        %v3297 = vpack.c.b16 %v2457, %v2449
        %v3298 = vpack.c.b16 %v2458, %v2450
        %v3299 = vpack.c.b16 %v2459, %v2451
        %v3300 = vpack.c.b16 %v2460, %v2452
        %v3301 = vpack.c.b16 %v2461, %v2453
        %v3302 = vpack.c.b16 %v2462, %v2454
        %v3303 = vpack.c.b16 %v2463, %v2455
        %v3304 = vpack.c.b16 %v2472, %v2464
        %v3305 = vpack.c.b16 %v2473, %v2465
        %v3306 = vpack.c.b16 %v2474, %v2466
        %v3307 = vpack.c.b16 %v2475, %v2467
        %v3308 = vpack.c.b16 %v2476, %v2468
        %v3309 = vpack.c.b16 %v2477, %v2469
        %v3310 = vpack.c.b16 %v2478, %v2470
        %v3311 = vpack.c.b16 %v2479, %v2471
        %v3312 = vpack.c.b16 %v2488, %v2480
        %v3313 = vpack.c.b16 %v2489, %v2481
        %v3314 = vpack.c.b16 %v2490, %v2482
        %v3315 = vpack.c.b16 %v2491, %v2483
        %v3316 = vpack.c.b16 %v2492, %v2484
        %v3317 = vpack.c.b16 %v2493, %v2485
        %v3318 = vpack.c.b16 %v2494, %v2486
        %v3319 = vpack.c.b16 %v2495, %v2487
        %v3320 = vpack.c.b16 %v2504, %v2496
        %v3321 = vpack.c.b16 %v2505, %v2497
        %v3322 = vpack.c.b16 %v2506, %v2498
        %v3323 = vpack.c.b16 %v2507, %v2499
        %v3324 = vpack.c.b16 %v2508, %v2500
        %v3325 = vpack.c.b16 %v2509, %v2501
        %v3326 = vpack.c.b16 %v2510, %v2502
        %v3327 = vpack.c.b16 %v2511, %v2503
        %v3328 = vpack.c.b16 %v2520, %v2512
        %v3329 = vpack.c.b16 %v2521, %v2513
        %v3330 = vpack.c.b16 %v2522, %v2514
        %v3331 = vpack.c.b16 %v2523, %v2515
        %v3332 = vpack.c.b16 %v2524, %v2516
        %v3333 = vpack.c.b16 %v2525, %v2517
        %v3334 = vpack.c.b16 %v2526, %v2518
        %v3335 = vpack.c.b16 %v2527, %v2519
        %v3336 = vpack.c.b16 %v2536, %v2528
        %v3337 = vpack.c.b16 %v2537, %v2529
        %v3338 = vpack.c.b16 %v2538, %v2530
        %v3339 = vpack.c.b16 %v2539, %v2531
        %v3340 = vpack.c.b16 %v2540, %v2532
        %v3341 = vpack.c.b16 %v2541, %v2533
        %v3342 = vpack.c.b16 %v2542, %v2534
        %v3343 = vpack.c.b16 %v2543, %v2535
        %v3344 = vpack.c.b16 %v2552, %v2544
        %v3345 = vpack.c.b16 %v2553, %v2545
        %v3346 = vpack.c.b16 %v2554, %v2546
        %v3347 = vpack.c.b16 %v2555, %v2547
        %v3348 = vpack.c.b16 %v2556, %v2548
        %v3349 = vpack.c.b16 %v2557, %v2549
        %v3350 = vpack.c.b16 %v2558, %v2550
        %v3351 = vpack.c.b16 %v2559, %v2551
        %v3352 = vpack.c.b16 %v2568, %v2560
        %v3353 = vpack.c.b16 %v2569, %v2561
        %v3354 = vpack.c.b16 %v2570, %v2562
        %v3355 = vpack.c.b16 %v2571, %v2563
        %v3356 = vpack.c.b16 %v2572, %v2564
        %v3357 = vpack.c.b16 %v2573, %v2565
        %v3358 = vpack.c.b16 %v2574, %v2566
        %v3359 = vpack.c.b16 %v2575, %v2567
        %v3360 = vpack.c.b16 %v2584, %v2576
        %v3361 = vpack.c.b16 %v2585, %v2577
        %v3362 = vpack.c.b16 %v2586, %v2578
        %v3363 = vpack.c.b16 %v2587, %v2579
        %v3364 = vpack.c.b16 %v2588, %v2580
        %v3365 = vpack.c.b16 %v2589, %v2581
        %v3366 = vpack.c.b16 %v2590, %v2582
        %v3367 = vpack.c.b16 %v2591, %v2583
        %v3368 = vpack.c.b16 %v2600, %v2592
        %v3369 = vpack.c.b16 %v2601, %v2593
        %v3370 = vpack.c.b16 %v2602, %v2594
        %v3371 = vpack.c.b16 %v2603, %v2595
        %v3372 = vpack.c.b16 %v2604, %v2596
        %v3373 = vpack.c.b16 %v2605, %v2597
        %v3374 = vpack.c.b16 %v2606, %v2598
        %v3375 = vpack.c.b16 %v2607, %v2599
        %v3376 = vpack.c.b16 %v2616, %v2608
        %v3377 = vpack.c.b16 %v2617, %v2609
        %v3378 = vpack.c.b16 %v2618, %v2610
        %v3379 = vpack.c.b16 %v2619, %v2611
        %v3380 = vpack.c.b16 %v2620, %v2612
        %v3381 = vpack.c.b16 %v2621, %v2613
        %v3382 = vpack.c.b16 %v2622, %v2614
        %v3383 = vpack.c.b16 %v2623, %v2615
        %v3384 = vpack.c.b16 %v2632, %v2624
        %v3385 = vpack.c.b16 %v2633, %v2625
        %v3386 = vpack.c.b16 %v2634, %v2626
        %v3387 = vpack.c.b16 %v2635, %v2627
        %v3388 = vpack.c.b16 %v2636, %v2628
        %v3389 = vpack.c.b16 %v2637, %v2629
        %v3390 = vpack.c.b16 %v2638, %v2630
        %v3391 = vpack.c.b16 %v2639, %v2631
        %v3392 = vpack.c.b16 %v2648, %v2640
        %v3393 = vpack.c.b16 %v2649, %v2641
        %v3394 = vpack.c.b16 %v2650, %v2642
        %v3395 = vpack.c.b16 %v2651, %v2643
        %v3396 = vpack.c.b16 %v2652, %v2644
        %v3397 = vpack.c.b16 %v2653, %v2645
        %v3398 = vpack.c.b16 %v2654, %v2646
        %v3399 = vpack.c.b16 %v2655, %v2647
        %v3400 = vpack.c.b16 %v2664, %v2656
        %v3401 = vpack.c.b16 %v2665, %v2657
        %v3402 = vpack.c.b16 %v2666, %v2658
        %v3403 = vpack.c.b16 %v2667, %v2659
        %v3404 = vpack.c.b16 %v2668, %v2660
        %v3405 = vpack.c.b16 %v2669, %v2661
        %v3406 = vpack.c.b16 %v2670, %v2662
        %v3407 = vpack.c.b16 %v2671, %v2663
        %v3408 = vpack.c.b16 %v2680, %v2672
        %v3409 = vpack.c.b16 %v2681, %v2673
        %v3410 = vpack.c.b16 %v2682, %v2674
        %v3411 = vpack.c.b16 %v2683, %v2675
        %v3412 = vpack.c.b16 %v2684, %v2676
        %v3413 = vpack.c.b16 %v2685, %v2677
        %v3414 = vpack.c.b16 %v2686, %v2678
        %v3415 = vpack.c.b16 %v2687, %v2679
        %v3416 = vpack.c.b16 %v2696, %v2688
        %v3417 = vpack.c.b16 %v2697, %v2689
        %v3418 = vpack.c.b16 %v2698, %v2690
        %v3419 = vpack.c.b16 %v2699, %v2691
        %v3420 = vpack.c.b16 %v2700, %v2692
        %v3421 = vpack.c.b16 %v2701, %v2693
        %v3422 = vpack.c.b16 %v2702, %v2694
        %v3423 = vpack.c.b16 %v2703, %v2695
        %v3424 = vpack.c.b16 %v2712, %v2704
        %v3425 = vpack.c.b16 %v2713, %v2705
        %v3426 = vpack.c.b16 %v2714, %v2706
        %v3427 = vpack.c.b16 %v2715, %v2707
        %v3428 = vpack.c.b16 %v2716, %v2708
        %v3429 = vpack.c.b16 %v2717, %v2709
        %v3430 = vpack.c.b16 %v2718, %v2710
        %v3431 = vpack.c.b16 %v2719, %v2711
        %v3432 = vpack.c.b16 %v2728, %v2720
        %v3433 = vpack.c.b16 %v2729, %v2721
        %v3434 = vpack.c.b16 %v2730, %v2722
        %v3435 = vpack.c.b16 %v2731, %v2723
        %v3436 = vpack.c.b16 %v2732, %v2724
        %v3437 = vpack.c.b16 %v2733, %v2725
        %v3438 = vpack.c.b16 %v2734, %v2726
        %v3439 = vpack.c.b16 %v2735, %v2727
        %v3440 = vpack.c.b16 %v2744, %v2736
        %v3441 = vpack.c.b16 %v2745, %v2737
        %v3442 = vpack.c.b16 %v2746, %v2738
        %v3443 = vpack.c.b16 %v2747, %v2739
        %v3444 = vpack.c.b16 %v2748, %v2740
        %v3445 = vpack.c.b16 %v2749, %v2741
        %v3446 = vpack.c.b16 %v2750, %v2742
        %v3447 = vpack.c.b16 %v2751, %v2743
        %v3448 = vpack.c.b16 %v2760, %v2752
        %v3449 = vpack.c.b16 %v2761, %v2753
        %v3450 = vpack.c.b16 %v2762, %v2754
        %v3451 = vpack.c.b16 %v2763, %v2755
        %v3452 = vpack.c.b16 %v2764, %v2756
        %v3453 = vpack.c.b16 %v2765, %v2757
        %v3454 = vpack.c.b16 %v2766, %v2758
        %v3455 = vpack.c.b16 %v2767, %v2759
        %v3456 = vpack.c.b16 %v2776, %v2768
        %v3457 = vpack.c.b16 %v2777, %v2769
        %v3458 = vpack.c.b16 %v2778, %v2770
        %v3459 = vpack.c.b16 %v2779, %v2771
        %v3460 = vpack.c.b16 %v2780, %v2772
        %v3461 = vpack.c.b16 %v2781, %v2773
        %v3462 = vpack.c.b16 %v2782, %v2774
        %v3463 = vpack.c.b16 %v2783, %v2775
        %v3464 = vpack.c.b16 %v2792, %v2784
        %v3465 = vpack.c.b16 %v2793, %v2785
        %v3466 = vpack.c.b16 %v2794, %v2786
        %v3467 = vpack.c.b16 %v2795, %v2787
        %v3468 = vpack.c.b16 %v2796, %v2788
        %v3469 = vpack.c.b16 %v2797, %v2789
        %v3470 = vpack.c.b16 %v2798, %v2790
        %v3471 = vpack.c.b16 %v2799, %v2791
        %v3472 = vpack.c.b16 %v2808, %v2800
        %v3473 = vpack.c.b16 %v2809, %v2801
        %v3474 = vpack.c.b16 %v2810, %v2802
        %v3475 = vpack.c.b16 %v2811, %v2803
        %v3476 = vpack.c.b16 %v2812, %v2804
        %v3477 = vpack.c.b16 %v2813, %v2805
        %v3478 = vpack.c.b16 %v2814, %v2806
        %v3479 = vpack.c.b16 %v2815, %v2807
        %v3480 = vpack.c.b16 %v2824, %v2816
        %v3481 = vpack.c.b16 %v2825, %v2817
        %v3482 = vpack.c.b16 %v2826, %v2818
        %v3483 = vpack.c.b16 %v2827, %v2819
        %v3484 = vpack.c.b16 %v2828, %v2820
        %v3485 = vpack.c.b16 %v2829, %v2821
        %v3486 = vpack.c.b16 %v2830, %v2822
        %v3487 = vpack.c.b16 %v2831, %v2823
        %v3488 = vpack.c.b16 %v2840, %v2832
        %v3489 = vpack.c.b16 %v2841, %v2833
        %v3490 = vpack.c.b16 %v2842, %v2834
        %v3491 = vpack.c.b16 %v2843, %v2835
        %v3492 = vpack.c.b16 %v2844, %v2836
        %v3493 = vpack.c.b16 %v2845, %v2837
        %v3494 = vpack.c.b16 %v2846, %v2838
        %v3495 = vpack.c.b16 %v2847, %v2839
        %v3496 = vpack.c.b16 %v2856, %v2848
        %v3497 = vpack.c.b16 %v2857, %v2849
        %v3498 = vpack.c.b16 %v2858, %v2850
        %v3499 = vpack.c.b16 %v2859, %v2851
        %v3500 = vpack.c.b16 %v2860, %v2852
        %v3501 = vpack.c.b16 %v2861, %v2853
        %v3502 = vpack.c.b16 %v2862, %v2854
        %v3503 = vpack.c.b16 %v2863, %v2855
        %v3504 = vpack.c.b16 %v2872, %v2864
        %v3505 = vpack.c.b16 %v2873, %v2865
        %v3506 = vpack.c.b16 %v2874, %v2866
        %v3507 = vpack.c.b16 %v2875, %v2867
        %v3508 = vpack.c.b16 %v2876, %v2868
        %v3509 = vpack.c.b16 %v2877, %v2869
        %v3510 = vpack.c.b16 %v2878, %v2870
        %v3511 = vpack.c.b16 %v2879, %v2871
        %v3512 = vpack.c.b16 %v2888, %v2880
        %v3513 = vpack.c.b16 %v2889, %v2881
        %v3514 = vpack.c.b16 %v2890, %v2882
        %v3515 = vpack.c.b16 %v2891, %v2883
        %v3516 = vpack.c.b16 %v2892, %v2884
        %v3517 = vpack.c.b16 %v2893, %v2885
        %v3518 = vpack.c.b16 %v2894, %v2886
        %v3519 = vpack.c.b16 %v2895, %v2887
        %v3520 = vpack.c.b16 %v2904, %v2896
        %v3521 = vpack.c.b16 %v2905, %v2897
        %v3522 = vpack.c.b16 %v2906, %v2898
        %v3523 = vpack.c.b16 %v2907, %v2899
        %v3524 = vpack.c.b16 %v2908, %v2900
        %v3525 = vpack.c.b16 %v2909, %v2901
        %v3526 = vpack.c.b16 %v2910, %v2902
        %v3527 = vpack.c.b16 %v2911, %v2903
        %v3528 = vpack.c.b16 %v2920, %v2912
        %v3529 = vpack.c.b16 %v2921, %v2913
        %v3530 = vpack.c.b16 %v2922, %v2914
        %v3531 = vpack.c.b16 %v2923, %v2915
        %v3532 = vpack.c.b16 %v2924, %v2916
        %v3533 = vpack.c.b16 %v2925, %v2917
        %v3534 = vpack.c.b16 %v2926, %v2918
        %v3535 = vpack.c.b16 %v2927, %v2919
        %v3536 = vpack.c.b16 %v2936, %v2928
        %v3537 = vpack.c.b16 %v2937, %v2929
        %v3538 = vpack.c.b16 %v2938, %v2930
        %v3539 = vpack.c.b16 %v2939, %v2931
        %v3540 = vpack.c.b16 %v2940, %v2932
        %v3541 = vpack.c.b16 %v2941, %v2933
        %v3542 = vpack.c.b16 %v2942, %v2934
        %v3543 = vpack.c.b16 %v2943, %v2935
        %v3544 = vpack.c.b16 %v2952, %v2944
        %v3545 = vpack.c.b16 %v2953, %v2945
        %v3546 = vpack.c.b16 %v2954, %v2946
        %v3547 = vpack.c.b16 %v2955, %v2947
        %v3548 = vpack.c.b16 %v2956, %v2948
        %v3549 = vpack.c.b16 %v2957, %v2949
        %v3550 = vpack.c.b16 %v2958, %v2950
        %v3551 = vpack.c.b16 %v2959, %v2951
        %v3552 = vpack.c.b16 %v2968, %v2960
        %v3553 = vpack.c.b16 %v2969, %v2961
        %v3554 = vpack.c.b16 %v2970, %v2962
        %v3555 = vpack.c.b16 %v2971, %v2963
        %v3556 = vpack.c.b16 %v2972, %v2964
        %v3557 = vpack.c.b16 %v2973, %v2965
        %v3558 = vpack.c.b16 %v2974, %v2966
        %v3559 = vpack.c.b16 %v2975, %v2967
        %v3560 = vpack.c.b16 %v2984, %v2976
        %v3561 = vpack.c.b16 %v2985, %v2977
        %v3562 = vpack.c.b16 %v2986, %v2978
        %v3563 = vpack.c.b16 %v2987, %v2979
        %v3564 = vpack.c.b16 %v2988, %v2980
        %v3565 = vpack.c.b16 %v2989, %v2981
        %v3566 = vpack.c.b16 %v2990, %v2982
        %v3567 = vpack.c.b16 %v2991, %v2983
        %v3568 = vpack.c.b16 %v3000, %v2992
        %v3569 = vpack.c.b16 %v3001, %v2993
        %v3570 = vpack.c.b16 %v3002, %v2994
        %v3571 = vpack.c.b16 %v3003, %v2995
        %v3572 = vpack.c.b16 %v3004, %v2996
        %v3573 = vpack.c.b16 %v3005, %v2997
        %v3574 = vpack.c.b16 %v3006, %v2998
        %v3575 = vpack.c.b16 %v3007, %v2999
        %v3576 = vpack.c.b16 %v3016, %v3008
        %v3577 = vpack.c.b16 %v3017, %v3009
        %v3578 = vpack.c.b16 %v3018, %v3010
        %v3579 = vpack.c.b16 %v3019, %v3011
        %v3580 = vpack.c.b16 %v3020, %v3012
        %v3581 = vpack.c.b16 %v3021, %v3013
        %v3582 = vpack.c.b16 %v3022, %v3014
        %v3583 = vpack.c.b16 %v3023, %v3015
        %v3584 = vpack.c.b16 %v3032, %v3024
        %v3585 = vpack.c.b16 %v3033, %v3025
        %v3586 = vpack.c.b16 %v3034, %v3026
        %v3587 = vpack.c.b16 %v3035, %v3027
        %v3588 = vpack.c.b16 %v3036, %v3028
        %v3589 = vpack.c.b16 %v3037, %v3029
        %v3590 = vpack.c.b16 %v3038, %v3030
        %v3591 = vpack.c.b16 %v3039, %v3031
        %v3592 = vpack.c.b16 %v3048, %v3040
        %v3593 = vpack.c.b16 %v3049, %v3041
        %v3594 = vpack.c.b16 %v3050, %v3042
        %v3595 = vpack.c.b16 %v3051, %v3043
        %v3596 = vpack.c.b16 %v3052, %v3044
        %v3597 = vpack.c.b16 %v3053, %v3045
        %v3598 = vpack.c.b16 %v3054, %v3046
        %v3599 = vpack.c.b16 %v3055, %v3047
        %v3600 = vpack.c.b16 %v3064, %v3056
        %v3601 = vpack.c.b16 %v3065, %v3057
        %v3602 = vpack.c.b16 %v3066, %v3058
        %v3603 = vpack.c.b16 %v3067, %v3059
        %v3604 = vpack.c.b16 %v3068, %v3060
        %v3605 = vpack.c.b16 %v3069, %v3061
        %v3606 = vpack.c.b16 %v3070, %v3062
        %v3607 = vpack.c.b16 %v3071, %v3063
        %v3608 = vpack.c.b16 %v3080, %v3072
        %v3609 = vpack.c.b16 %v3081, %v3073
        %v3610 = vpack.c.b16 %v3082, %v3074
        %v3611 = vpack.c.b16 %v3083, %v3075
        %v3612 = vpack.c.b16 %v3084, %v3076
        %v3613 = vpack.c.b16 %v3085, %v3077
        %v3614 = vpack.c.b16 %v3086, %v3078
        %v3615 = vpack.c.b16 %v3087, %v3079
        %v3616 = vpack.c.b16 %v3096, %v3088
        %v3617 = vpack.c.b16 %v3097, %v3089
        %v3618 = vpack.c.b16 %v3098, %v3090
        %v3619 = vpack.c.b16 %v3099, %v3091
        %v3620 = vpack.c.b16 %v3100, %v3092
        %v3621 = vpack.c.b16 %v3101, %v3093
        %v3622 = vpack.c.b16 %v3102, %v3094
        %v3623 = vpack.c.b16 %v3103, %v3095
        %v3624 = vpack.c.b16 %v3112, %v3104
        %v3625 = vpack.c.b16 %v3113, %v3105
        %v3626 = vpack.c.b16 %v3114, %v3106
        %v3627 = vpack.c.b16 %v3115, %v3107
        %v3628 = vpack.c.b16 %v3116, %v3108
        %v3629 = vpack.c.b16 %v3117, %v3109
        %v3630 = vpack.c.b16 %v3118, %v3110
        %v3631 = vpack.c.b16 %v3119, %v3111
        %4144 = vmatprep.subr.bf16.mxu0 %v3121
        %4145 = vmatpush1.bf16.msra.mxu0 %v3120
        %4146 = vmatprep.subr.bf16.mxu0 %v3129
        %4147 = vmatpush1.bf16.msra.mxu0 %v3128
        %4148 = vmatprep.subr.bf16.mxu0 %v3137
        %4149 = vmatpush1.bf16.msra.mxu0 %v3136
        %4150 = vmatprep.subr.bf16.mxu0 %v3145
        %4151 = vmatpush1.bf16.msra.mxu0 %v3144
        %4152 = vmatprep.subr.bf16.mxu0 %v3153
        %4153 = vmatpush1.bf16.msra.mxu0 %v3152
        %4154 = vmatprep.subr.bf16.mxu0 %v3161
        %4155 = vmatpush1.bf16.msra.mxu0 %v3160
        %4156 = vmatprep.subr.bf16.mxu0 %v3169
        %4157 = vmatpush1.bf16.msra.mxu0 %v3168
        %4158 = vmatprep.subr.bf16.mxu0 %v3177
        %4159 = vmatpush1.bf16.msra.mxu0 %v3176
        %4160 = vmatprep.subr.bf16.mxu0 %v3185
        %4161 = vmatpush1.bf16.msra.mxu0 %v3184
        %4162 = vmatprep.subr.bf16.mxu0 %v3193
        %4163 = vmatpush1.bf16.msra.mxu0 %v3192
        %4164 = vmatprep.subr.bf16.mxu0 %v3201
        %4165 = vmatpush1.bf16.msra.mxu0 %v3200
        %4166 = vmatprep.subr.bf16.mxu0 %v3209
        %4167 = vmatpush1.bf16.msra.mxu0 %v3208
        %4168 = vmatprep.subr.bf16.mxu0 %v3217
        %4169 = vmatpush1.bf16.msra.mxu0 %v3216
        %4170 = vmatprep.subr.bf16.mxu0 %v3225
        %4171 = vmatpush1.bf16.msra.mxu0 %v3224
        %4172 = vmatprep.subr.bf16.mxu0 %v3233
        %4173 = vmatpush1.bf16.msra.mxu0 %v3232
        %4174 = vmatprep.subr.bf16.mxu0 %v3241
        %4175 = vmatpush1.bf16.msra.mxu0 %v3240
        %4176 = vmatprep.mubr.bf16.mxu0 %v1023
        %4177 = vmatmul.mubr.bf16.gmra.mrb[0].mxu0 %v1022
        %v4178 = vpop.f32.mrb[0].mxu0
        %v4179 = vadd.f32 %v1547, %v4178
        %v4180 = vpop.f32.mrb[0].mxu0
        %v4181 = vadd.f32 %v1551, %v4180
        %v4182 = vpop.f32.mrb[0].mxu0
        %v4183 = vpop.f32.mrb[0].mxu0
        %4184 = vdwg.mxu0
        %4185 = vmatprep.subr.bf16.mxu0 %v3249
        %4186 = vmatpush1.bf16.msra.mxu0 %v3248
        %4187 = vmatprep.subr.bf16.mxu0 %v3257
        %4188 = vmatpush1.bf16.msra.mxu0 %v3256
        %4189 = vmatprep.subr.bf16.mxu0 %v3265
        %4190 = vmatpush1.bf16.msra.mxu0 %v3264
        %4191 = vmatprep.subr.bf16.mxu0 %v3273
        %4192 = vmatpush1.bf16.msra.mxu0 %v3272
        %4193 = vmatprep.subr.bf16.mxu0 %v3281
        %4194 = vmatpush1.bf16.msra.mxu0 %v3280
        %4195 = vmatprep.subr.bf16.mxu0 %v3289
        %4196 = vmatpush1.bf16.msra.mxu0 %v3288
        %4197 = vmatprep.subr.bf16.mxu0 %v3297
        %4198 = vmatpush1.bf16.msra.mxu0 %v3296
        %4199 = vmatprep.subr.bf16.mxu0 %v3305
        %4200 = vmatpush1.bf16.msra.mxu0 %v3304
        %4201 = vmatprep.subr.bf16.mxu0 %v3313
        %4202 = vmatpush1.bf16.msra.mxu0 %v3312
        %4203 = vmatprep.subr.bf16.mxu0 %v3321
        %4204 = vmatpush1.bf16.msra.mxu0 %v3320
        %4205 = vmatprep.subr.bf16.mxu0 %v3329
        %4206 = vmatpush1.bf16.msra.mxu0 %v3328
        %4207 = vmatprep.subr.bf16.mxu0 %v3337
        %4208 = vmatpush1.bf16.msra.mxu0 %v3336
        %4209 = vmatprep.subr.bf16.mxu0 %v3345
        %4210 = vmatpush1.bf16.msra.mxu0 %v3344
        %4211 = vmatprep.subr.bf16.mxu0 %v3353
        %4212 = vmatpush1.bf16.msra.mxu0 %v3352
        %4213 = vmatprep.subr.bf16.mxu0 %v3361
        %4214 = vmatpush1.bf16.msra.mxu0 %v3360
        %4215 = vmatprep.subr.bf16.mxu0 %v3369
        %4216 = vmatpush1.bf16.msra.mxu0 %v3368
        %4217 = vmatprep.mubr.bf16.mxu0 %v1025
        %4218 = vmatmul.mubr.bf16.gmra.mrb[0].mxu0 %v1024
        %v4219 = vpop.f32.mrb[0].mxu0
        %v4220 = vadd.f32 %v4179, %v4219
        %v4221 = vpop.f32.mrb[0].mxu0
        %v4222 = vadd.f32 %v4181, %v4221
        %v4223 = vpop.f32.mrb[0].mxu0
        %v4224 = vpop.f32.mrb[0].mxu0
        %4225 = vdwg.mxu0
        %4226 = vmatprep.subr.bf16.mxu0 %v3377
        %4227 = vmatpush1.bf16.msra.mxu0 %v3376
        %4228 = vmatprep.subr.bf16.mxu0 %v3385
        %4229 = vmatpush1.bf16.msra.mxu0 %v3384
        %4230 = vmatprep.subr.bf16.mxu0 %v3393
        %4231 = vmatpush1.bf16.msra.mxu0 %v3392
        %4232 = vmatprep.subr.bf16.mxu0 %v3401
        %4233 = vmatpush1.bf16.msra.mxu0 %v3400
        %4234 = vmatprep.subr.bf16.mxu0 %v3409
        %4235 = vmatpush1.bf16.msra.mxu0 %v3408
        %4236 = vmatprep.subr.bf16.mxu0 %v3417
        %4237 = vmatpush1.bf16.msra.mxu0 %v3416
        %4238 = vmatprep.subr.bf16.mxu0 %v3425
        %4239 = vmatpush1.bf16.msra.mxu0 %v3424
        %4240 = vmatprep.subr.bf16.mxu0 %v3433
        %4241 = vmatpush1.bf16.msra.mxu0 %v3432
        %4242 = vmatprep.subr.bf16.mxu0 %v3441
        %4243 = vmatpush1.bf16.msra.mxu0 %v3440
        %4244 = vmatprep.subr.bf16.mxu0 %v3449
        %4245 = vmatpush1.bf16.msra.mxu0 %v3448
        %4246 = vmatprep.subr.bf16.mxu0 %v3457
        %4247 = vmatpush1.bf16.msra.mxu0 %v3456
        %4248 = vmatprep.subr.bf16.mxu0 %v3465
        %4249 = vmatpush1.bf16.msra.mxu0 %v3464
        %4250 = vmatprep.subr.bf16.mxu0 %v3473
        %4251 = vmatpush1.bf16.msra.mxu0 %v3472
        %4252 = vmatprep.subr.bf16.mxu0 %v3481
        %4253 = vmatpush1.bf16.msra.mxu0 %v3480
        %4254 = vmatprep.subr.bf16.mxu0 %v3489
        %4255 = vmatpush1.bf16.msra.mxu0 %v3488
        %4256 = vmatprep.subr.bf16.mxu0 %v3497
        %4257 = vmatpush1.bf16.msra.mxu0 %v3496
        %4258 = vmatprep.mubr.bf16.mxu0 %v1027
        %4259 = vmatmul.mubr.bf16.gmra.mrb[0].mxu0 %v1026
        %v4260 = vpop.f32.mrb[0].mxu0
        %v4261 = vadd.f32 %v4220, %v4260
        %v4262 = vpop.f32.mrb[0].mxu0
        %v4263 = vadd.f32 %v4222, %v4262
        %v4264 = vpop.f32.mrb[0].mxu0
        %v4265 = vpop.f32.mrb[0].mxu0
        %4266 = vdwg.mxu0
        %4267 = vmatprep.subr.bf16.mxu0 %v3505
        %4268 = vmatpush1.bf16.msra.mxu0 %v3504
        %4269 = vmatprep.subr.bf16.mxu0 %v3513
        %4270 = vmatpush1.bf16.msra.mxu0 %v3512
        %4271 = vmatprep.subr.bf16.mxu0 %v3521
        %4272 = vmatpush1.bf16.msra.mxu0 %v3520
        %4273 = vmatprep.subr.bf16.mxu0 %v3529
        %4274 = vmatpush1.bf16.msra.mxu0 %v3528
        %4275 = vmatprep.subr.bf16.mxu0 %v3537
        %4276 = vmatpush1.bf16.msra.mxu0 %v3536
        %4277 = vmatprep.subr.bf16.mxu0 %v3545
        %4278 = vmatpush1.bf16.msra.mxu0 %v3544
        %4279 = vmatprep.subr.bf16.mxu0 %v3553
        %4280 = vmatpush1.bf16.msra.mxu0 %v3552
        %4281 = vmatprep.subr.bf16.mxu0 %v3561
        %4282 = vmatpush1.bf16.msra.mxu0 %v3560
        %4283 = vmatprep.subr.bf16.mxu0 %v3569
        %4284 = vmatpush1.bf16.msra.mxu0 %v3568
        %4285 = vmatprep.subr.bf16.mxu0 %v3577
        %4286 = vmatpush1.bf16.msra.mxu0 %v3576
        %4287 = vmatprep.subr.bf16.mxu0 %v3585
        %4288 = vmatpush1.bf16.msra.mxu0 %v3584
        %4289 = vmatprep.subr.bf16.mxu0 %v3593
        %4290 = vmatpush1.bf16.msra.mxu0 %v3592
        %4291 = vmatprep.subr.bf16.mxu0 %v3601
        %4292 = vmatpush1.bf16.msra.mxu0 %v3600
        %4293 = vmatprep.subr.bf16.mxu0 %v3609
        %4294 = vmatpush1.bf16.msra.mxu0 %v3608
        %4295 = vmatprep.subr.bf16.mxu0 %v3617
        %4296 = vmatpush1.bf16.msra.mxu0 %v3616
        %4297 = vmatprep.subr.bf16.mxu0 %v3625
        %4298 = vmatpush1.bf16.msra.mxu0 %v3624
        %4299 = vmatprep.mubr.bf16.mxu0 %v1029
        %4300 = vmatmul.mubr.bf16.gmra.mrb[0].mxu0 %v1028
        %v4301 = vpop.f32.mrb[0].mxu0
        %v4302 = vadd.f32 %v4261, %v4301
        %v4303 = vpop.f32.mrb[0].mxu0
        %v4304 = vadd.f32 %v4263, %v4303
        %v4305 = vpop.f32.mrb[0].mxu0
        %v4306 = vpop.f32.mrb[0].mxu0
        %4307 = vdwg.mxu0
        %4308 = vmatprep.subr.bf16.mxu0 %v3123
        %4309 = vmatpush1.bf16.msra.mxu0 %v3122
        %4310 = vmatprep.subr.bf16.mxu0 %v3131
        %4311 = vmatpush1.bf16.msra.mxu0 %v3130
        %4312 = vmatprep.subr.bf16.mxu0 %v3139
        %4313 = vmatpush1.bf16.msra.mxu0 %v3138
        %4314 = vmatprep.subr.bf16.mxu0 %v3147
        %4315 = vmatpush1.bf16.msra.mxu0 %v3146
        %4316 = vmatprep.subr.bf16.mxu0 %v3155
        %4317 = vmatpush1.bf16.msra.mxu0 %v3154
        %4318 = vmatprep.subr.bf16.mxu0 %v3163
        %4319 = vmatpush1.bf16.msra.mxu0 %v3162
        %4320 = vmatprep.subr.bf16.mxu0 %v3171
        %4321 = vmatpush1.bf16.msra.mxu0 %v3170
        %4322 = vmatprep.subr.bf16.mxu0 %v3179
        %4323 = vmatpush1.bf16.msra.mxu0 %v3178
        %4324 = vmatprep.subr.bf16.mxu0 %v3187
        %4325 = vmatpush1.bf16.msra.mxu0 %v3186
        %4326 = vmatprep.subr.bf16.mxu0 %v3195
        %4327 = vmatpush1.bf16.msra.mxu0 %v3194
        %4328 = vmatprep.subr.bf16.mxu0 %v3203
        %4329 = vmatpush1.bf16.msra.mxu0 %v3202
        %4330 = vmatprep.subr.bf16.mxu0 %v3211
        %4331 = vmatpush1.bf16.msra.mxu0 %v3210
        %4332 = vmatprep.subr.bf16.mxu0 %v3219
        %4333 = vmatpush1.bf16.msra.mxu0 %v3218
        %4334 = vmatprep.subr.bf16.mxu0 %v3227
        %4335 = vmatpush1.bf16.msra.mxu0 %v3226
        %4336 = vmatprep.subr.bf16.mxu0 %v3235
        %4337 = vmatpush1.bf16.msra.mxu0 %v3234
        %4338 = vmatprep.subr.bf16.mxu0 %v3243
        %4339 = vmatpush1.bf16.msra.mxu0 %v3242
        %4340 = vmatprep.mubr.bf16.mxu0 %v1023
        %4341 = vmatmul.mubr.bf16.gmra.mrb[0].mxu0 %v1022
        %v4342 = vpop.f32.mrb[0].mxu0
        %v4343 = vadd.f32 %v1555, %v4342
        %v4344 = vpop.f32.mrb[0].mxu0
        %v4345 = vadd.f32 %v1559, %v4344
        %v4346 = vpop.f32.mrb[0].mxu0
        %v4347 = vpop.f32.mrb[0].mxu0
        %4348 = vdwg.mxu0
        %4349 = vmatprep.subr.bf16.mxu0 %v3251
        %4350 = vmatpush1.bf16.msra.mxu0 %v3250
        %4351 = vmatprep.subr.bf16.mxu0 %v3259
        %4352 = vmatpush1.bf16.msra.mxu0 %v3258
        %4353 = vmatprep.subr.bf16.mxu0 %v3267
        %4354 = vmatpush1.bf16.msra.mxu0 %v3266
        %4355 = vmatprep.subr.bf16.mxu0 %v3275
        %4356 = vmatpush1.bf16.msra.mxu0 %v3274
        %4357 = vmatprep.subr.bf16.mxu0 %v3283
        %4358 = vmatpush1.bf16.msra.mxu0 %v3282
        %4359 = vmatprep.subr.bf16.mxu0 %v3291
        %4360 = vmatpush1.bf16.msra.mxu0 %v3290
        %4361 = vmatprep.subr.bf16.mxu0 %v3299
        %4362 = vmatpush1.bf16.msra.mxu0 %v3298
        %4363 = vmatprep.subr.bf16.mxu0 %v3307
        %4364 = vmatpush1.bf16.msra.mxu0 %v3306
        %4365 = vmatprep.subr.bf16.mxu0 %v3315
        %4366 = vmatpush1.bf16.msra.mxu0 %v3314
        %4367 = vmatprep.subr.bf16.mxu0 %v3323
        %4368 = vmatpush1.bf16.msra.mxu0 %v3322
        %4369 = vmatprep.subr.bf16.mxu0 %v3331
        %4370 = vmatpush1.bf16.msra.mxu0 %v3330
        %4371 = vmatprep.subr.bf16.mxu0 %v3339
        %4372 = vmatpush1.bf16.msra.mxu0 %v3338
        %4373 = vmatprep.subr.bf16.mxu0 %v3347
        %4374 = vmatpush1.bf16.msra.mxu0 %v3346
        %4375 = vmatprep.subr.bf16.mxu0 %v3355
        %4376 = vmatpush1.bf16.msra.mxu0 %v3354
        %4377 = vmatprep.subr.bf16.mxu0 %v3363
        %4378 = vmatpush1.bf16.msra.mxu0 %v3362
        %4379 = vmatprep.subr.bf16.mxu0 %v3371
        %4380 = vmatpush1.bf16.msra.mxu0 %v3370
        %4381 = vmatprep.mubr.bf16.mxu0 %v1025
        %4382 = vmatmul.mubr.bf16.gmra.mrb[0].mxu0 %v1024
        %v4383 = vpop.f32.mrb[0].mxu0
        %v4384 = vadd.f32 %v4343, %v4383
        %v4385 = vpop.f32.mrb[0].mxu0
        %v4386 = vadd.f32 %v4345, %v4385
        %v4387 = vpop.f32.mrb[0].mxu0
        %v4388 = vpop.f32.mrb[0].mxu0
        %4389 = vdwg.mxu0
        %4390 = vmatprep.subr.bf16.mxu0 %v3379
        %4391 = vmatpush1.bf16.msra.mxu0 %v3378
        %4392 = vmatprep.subr.bf16.mxu0 %v3387
        %4393 = vmatpush1.bf16.msra.mxu0 %v3386
        %4394 = vmatprep.subr.bf16.mxu0 %v3395
        %4395 = vmatpush1.bf16.msra.mxu0 %v3394
        %4396 = vmatprep.subr.bf16.mxu0 %v3403
        %4397 = vmatpush1.bf16.msra.mxu0 %v3402
        %4398 = vmatprep.subr.bf16.mxu0 %v3411
        %4399 = vmatpush1.bf16.msra.mxu0 %v3410
        %4400 = vmatprep.subr.bf16.mxu0 %v3419
        %4401 = vmatpush1.bf16.msra.mxu0 %v3418
        %4402 = vmatprep.subr.bf16.mxu0 %v3427
        %4403 = vmatpush1.bf16.msra.mxu0 %v3426
        %4404 = vmatprep.subr.bf16.mxu0 %v3435
        %4405 = vmatpush1.bf16.msra.mxu0 %v3434
        %4406 = vmatprep.subr.bf16.mxu0 %v3443
        %4407 = vmatpush1.bf16.msra.mxu0 %v3442
        %4408 = vmatprep.subr.bf16.mxu0 %v3451
        %4409 = vmatpush1.bf16.msra.mxu0 %v3450
        %4410 = vmatprep.subr.bf16.mxu0 %v3459
        %4411 = vmatpush1.bf16.msra.mxu0 %v3458
        %4412 = vmatprep.subr.bf16.mxu0 %v3467
        %4413 = vmatpush1.bf16.msra.mxu0 %v3466
        %4414 = vmatprep.subr.bf16.mxu0 %v3475
        %4415 = vmatpush1.bf16.msra.mxu0 %v3474
        %4416 = vmatprep.subr.bf16.mxu0 %v3483
        %4417 = vmatpush1.bf16.msra.mxu0 %v3482
        %4418 = vmatprep.subr.bf16.mxu0 %v3491
        %4419 = vmatpush1.bf16.msra.mxu0 %v3490
        %4420 = vmatprep.subr.bf16.mxu0 %v3499
        %4421 = vmatpush1.bf16.msra.mxu0 %v3498
        %4422 = vmatprep.mubr.bf16.mxu0 %v1027
        %4423 = vmatmul.mubr.bf16.gmra.mrb[0].mxu0 %v1026
        %v4424 = vpop.f32.mrb[0].mxu0
        %v4425 = vadd.f32 %v4384, %v4424
        %v4426 = vpop.f32.mrb[0].mxu0
        %v4427 = vadd.f32 %v4386, %v4426
        %v4428 = vpop.f32.mrb[0].mxu0
        %v4429 = vpop.f32.mrb[0].mxu0
        %4430 = vdwg.mxu0
        %4431 = vmatprep.subr.bf16.mxu0 %v3507
        %4432 = vmatpush1.bf16.msra.mxu0 %v3506
        %4433 = vmatprep.subr.bf16.mxu0 %v3515
        %4434 = vmatpush1.bf16.msra.mxu0 %v3514
        %4435 = vmatprep.subr.bf16.mxu0 %v3523
        %4436 = vmatpush1.bf16.msra.mxu0 %v3522
        %4437 = vmatprep.subr.bf16.mxu0 %v3531
        %4438 = vmatpush1.bf16.msra.mxu0 %v3530
        %4439 = vmatprep.subr.bf16.mxu0 %v3539
        %4440 = vmatpush1.bf16.msra.mxu0 %v3538
        %4441 = vmatprep.subr.bf16.mxu0 %v3547
        %4442 = vmatpush1.bf16.msra.mxu0 %v3546
        %4443 = vmatprep.subr.bf16.mxu0 %v3555
        %4444 = vmatpush1.bf16.msra.mxu0 %v3554
        %4445 = vmatprep.subr.bf16.mxu0 %v3563
        %4446 = vmatpush1.bf16.msra.mxu0 %v3562
        %4447 = vmatprep.subr.bf16.mxu0 %v3571
        %4448 = vmatpush1.bf16.msra.mxu0 %v3570
        %4449 = vmatprep.subr.bf16.mxu0 %v3579
        %4450 = vmatpush1.bf16.msra.mxu0 %v3578
        %4451 = vmatprep.subr.bf16.mxu0 %v3587
        %4452 = vmatpush1.bf16.msra.mxu0 %v3586
        %4453 = vmatprep.subr.bf16.mxu0 %v3595
        %4454 = vmatpush1.bf16.msra.mxu0 %v3594
        %4455 = vmatprep.subr.bf16.mxu0 %v3603
        %4456 = vmatpush1.bf16.msra.mxu0 %v3602
        %4457 = vmatprep.subr.bf16.mxu0 %v3611
        %4458 = vmatpush1.bf16.msra.mxu0 %v3610
        %4459 = vmatprep.subr.bf16.mxu0 %v3619
        %4460 = vmatpush1.bf16.msra.mxu0 %v3618
        %4461 = vmatprep.subr.bf16.mxu0 %v3627
        %4462 = vmatpush1.bf16.msra.mxu0 %v3626
        %4463 = vmatprep.mubr.bf16.mxu0 %v1029
        %4464 = vmatmul.mubr.bf16.gmra.mrb[0].mxu0 %v1028
        %v4465 = vpop.f32.mrb[0].mxu0
        %v4466 = vadd.f32 %v4425, %v4465
        %v4467 = vpop.f32.mrb[0].mxu0
        %v4468 = vadd.f32 %v4427, %v4467
        %v4469 = vpop.f32.mrb[0].mxu0
        %v4470 = vpop.f32.mrb[0].mxu0
        %4471 = vdwg.mxu0
        %4472 = vmatprep.subr.bf16.mxu0 %v3125
        %4473 = vmatpush1.bf16.msra.mxu0 %v3124
        %4474 = vmatprep.subr.bf16.mxu0 %v3133
        %4475 = vmatpush1.bf16.msra.mxu0 %v3132
        %4476 = vmatprep.subr.bf16.mxu0 %v3141
        %4477 = vmatpush1.bf16.msra.mxu0 %v3140
        %4478 = vmatprep.subr.bf16.mxu0 %v3149
        %4479 = vmatpush1.bf16.msra.mxu0 %v3148
        %4480 = vmatprep.subr.bf16.mxu0 %v3157
        %4481 = vmatpush1.bf16.msra.mxu0 %v3156
        %4482 = vmatprep.subr.bf16.mxu0 %v3165
        %4483 = vmatpush1.bf16.msra.mxu0 %v3164
        %4484 = vmatprep.subr.bf16.mxu0 %v3173
        %4485 = vmatpush1.bf16.msra.mxu0 %v3172
        %4486 = vmatprep.subr.bf16.mxu0 %v3181
        %4487 = vmatpush1.bf16.msra.mxu0 %v3180
        %4488 = vmatprep.subr.bf16.mxu0 %v3189
        %4489 = vmatpush1.bf16.msra.mxu0 %v3188
        %4490 = vmatprep.subr.bf16.mxu0 %v3197
        %4491 = vmatpush1.bf16.msra.mxu0 %v3196
        %4492 = vmatprep.subr.bf16.mxu0 %v3205
        %4493 = vmatpush1.bf16.msra.mxu0 %v3204
        %4494 = vmatprep.subr.bf16.mxu0 %v3213
        %4495 = vmatpush1.bf16.msra.mxu0 %v3212
        %4496 = vmatprep.subr.bf16.mxu0 %v3221
        %4497 = vmatpush1.bf16.msra.mxu0 %v3220
        %4498 = vmatprep.subr.bf16.mxu0 %v3229
        %4499 = vmatpush1.bf16.msra.mxu0 %v3228
        %4500 = vmatprep.subr.bf16.mxu0 %v3237
        %4501 = vmatpush1.bf16.msra.mxu0 %v3236
        %4502 = vmatprep.subr.bf16.mxu0 %v3245
        %4503 = vmatpush1.bf16.msra.mxu0 %v3244
        %4504 = vmatprep.mubr.bf16.mxu0 %v1023
        %4505 = vmatmul.mubr.bf16.gmra.mrb[0].mxu0 %v1022
        %v4506 = vpop.f32.mrb[0].mxu0
        %v4507 = vadd.f32 %v1563, %v4506
        %v4508 = vpop.f32.mrb[0].mxu0
        %v4509 = vadd.f32 %v1567, %v4508
        %v4510 = vpop.f32.mrb[0].mxu0
        %v4511 = vpop.f32.mrb[0].mxu0
        %4512 = vdwg.mxu0
        %4513 = vmatprep.subr.bf16.mxu0 %v3253
        %4514 = vmatpush1.bf16.msra.mxu0 %v3252
        %4515 = vmatprep.subr.bf16.mxu0 %v3261
        %4516 = vmatpush1.bf16.msra.mxu0 %v3260
        %4517 = vmatprep.subr.bf16.mxu0 %v3269
        %4518 = vmatpush1.bf16.msra.mxu0 %v3268
        %4519 = vmatprep.subr.bf16.mxu0 %v3277
        %4520 = vmatpush1.bf16.msra.mxu0 %v3276
        %4521 = vmatprep.subr.bf16.mxu0 %v3285
        %4522 = vmatpush1.bf16.msra.mxu0 %v3284
        %4523 = vmatprep.subr.bf16.mxu0 %v3293
        %4524 = vmatpush1.bf16.msra.mxu0 %v3292
        %4525 = vmatprep.subr.bf16.mxu0 %v3301
        %4526 = vmatpush1.bf16.msra.mxu0 %v3300
        %4527 = vmatprep.subr.bf16.mxu0 %v3309
        %4528 = vmatpush1.bf16.msra.mxu0 %v3308
        %4529 = vmatprep.subr.bf16.mxu0 %v3317
        %4530 = vmatpush1.bf16.msra.mxu0 %v3316
        %4531 = vmatprep.subr.bf16.mxu0 %v3325
        %4532 = vmatpush1.bf16.msra.mxu0 %v3324
        %4533 = vmatprep.subr.bf16.mxu0 %v3333
        %4534 = vmatpush1.bf16.msra.mxu0 %v3332
        %4535 = vmatprep.subr.bf16.mxu0 %v3341
        %4536 = vmatpush1.bf16.msra.mxu0 %v3340
        %4537 = vmatprep.subr.bf16.mxu0 %v3349
        %4538 = vmatpush1.bf16.msra.mxu0 %v3348
        %4539 = vmatprep.subr.bf16.mxu0 %v3357
        %4540 = vmatpush1.bf16.msra.mxu0 %v3356
        %4541 = vmatprep.subr.bf16.mxu0 %v3365
        %4542 = vmatpush1.bf16.msra.mxu0 %v3364
        %4543 = vmatprep.subr.bf16.mxu0 %v3373
        %4544 = vmatpush1.bf16.msra.mxu0 %v3372
        %4545 = vmatprep.mubr.bf16.mxu0 %v1025
        %4546 = vmatmul.mubr.bf16.gmra.mrb[0].mxu0 %v1024
        %v4547 = vpop.f32.mrb[0].mxu0
        %v4548 = vadd.f32 %v4507, %v4547
        %v4549 = vpop.f32.mrb[0].mxu0
        %v4550 = vadd.f32 %v4509, %v4549
        %v4551 = vpop.f32.mrb[0].mxu0
        %v4552 = vpop.f32.mrb[0].mxu0
        %4553 = vdwg.mxu0
        %4554 = vmatprep.subr.bf16.mxu0 %v3381
        %4555 = vmatpush1.bf16.msra.mxu0 %v3380
        %4556 = vmatprep.subr.bf16.mxu0 %v3389
        %4557 = vmatpush1.bf16.msra.mxu0 %v3388
        %4558 = vmatprep.subr.bf16.mxu0 %v3397
        %4559 = vmatpush1.bf16.msra.mxu0 %v3396
        %4560 = vmatprep.subr.bf16.mxu0 %v3405
        %4561 = vmatpush1.bf16.msra.mxu0 %v3404
        %4562 = vmatprep.subr.bf16.mxu0 %v3413
        %4563 = vmatpush1.bf16.msra.mxu0 %v3412
        %4564 = vmatprep.subr.bf16.mxu0 %v3421
        %4565 = vmatpush1.bf16.msra.mxu0 %v3420
        %4566 = vmatprep.subr.bf16.mxu0 %v3429
        %4567 = vmatpush1.bf16.msra.mxu0 %v3428
        %4568 = vmatprep.subr.bf16.mxu0 %v3437
        %4569 = vmatpush1.bf16.msra.mxu0 %v3436
        %4570 = vmatprep.subr.bf16.mxu0 %v3445
        %4571 = vmatpush1.bf16.msra.mxu0 %v3444
        %4572 = vmatprep.subr.bf16.mxu0 %v3453
        %4573 = vmatpush1.bf16.msra.mxu0 %v3452
        %4574 = vmatprep.subr.bf16.mxu0 %v3461
        %4575 = vmatpush1.bf16.msra.mxu0 %v3460
        %4576 = vmatprep.subr.bf16.mxu0 %v3469
        %4577 = vmatpush1.bf16.msra.mxu0 %v3468
        %4578 = vmatprep.subr.bf16.mxu0 %v3477
        %4579 = vmatpush1.bf16.msra.mxu0 %v3476
        %4580 = vmatprep.subr.bf16.mxu0 %v3485
        %4581 = vmatpush1.bf16.msra.mxu0 %v3484
        %4582 = vmatprep.subr.bf16.mxu0 %v3493
        %4583 = vmatpush1.bf16.msra.mxu0 %v3492
        %4584 = vmatprep.subr.bf16.mxu0 %v3501
        %4585 = vmatpush1.bf16.msra.mxu0 %v3500
        %4586 = vmatprep.mubr.bf16.mxu0 %v1027
        %4587 = vmatmul.mubr.bf16.gmra.mrb[0].mxu0 %v1026
        %v4588 = vpop.f32.mrb[0].mxu0
        %v4589 = vadd.f32 %v4548, %v4588
        %v4590 = vpop.f32.mrb[0].mxu0
        %v4591 = vadd.f32 %v4550, %v4590
        %v4592 = vpop.f32.mrb[0].mxu0
        %v4593 = vpop.f32.mrb[0].mxu0
        %4594 = vdwg.mxu0
        %4595 = vmatprep.subr.bf16.mxu0 %v3509
        %4596 = vmatpush1.bf16.msra.mxu0 %v3508
        %4597 = vmatprep.subr.bf16.mxu0 %v3517
        %4598 = vmatpush1.bf16.msra.mxu0 %v3516
        %4599 = vmatprep.subr.bf16.mxu0 %v3525
        %4600 = vmatpush1.bf16.msra.mxu0 %v3524
        %4601 = vmatprep.subr.bf16.mxu0 %v3533
        %4602 = vmatpush1.bf16.msra.mxu0 %v3532
        %4603 = vmatprep.subr.bf16.mxu0 %v3541
        %4604 = vmatpush1.bf16.msra.mxu0 %v3540
        %4605 = vmatprep.subr.bf16.mxu0 %v3549
        %4606 = vmatpush1.bf16.msra.mxu0 %v3548
        %4607 = vmatprep.subr.bf16.mxu0 %v3557
        %4608 = vmatpush1.bf16.msra.mxu0 %v3556
        %4609 = vmatprep.subr.bf16.mxu0 %v3565
        %4610 = vmatpush1.bf16.msra.mxu0 %v3564
        %4611 = vmatprep.subr.bf16.mxu0 %v3573
        %4612 = vmatpush1.bf16.msra.mxu0 %v3572
        %4613 = vmatprep.subr.bf16.mxu0 %v3581
        %4614 = vmatpush1.bf16.msra.mxu0 %v3580
        %4615 = vmatprep.subr.bf16.mxu0 %v3589
        %4616 = vmatpush1.bf16.msra.mxu0 %v3588
        %4617 = vmatprep.subr.bf16.mxu0 %v3597
        %4618 = vmatpush1.bf16.msra.mxu0 %v3596
        %4619 = vmatprep.subr.bf16.mxu0 %v3605
        %4620 = vmatpush1.bf16.msra.mxu0 %v3604
        %4621 = vmatprep.subr.bf16.mxu0 %v3613
        %4622 = vmatpush1.bf16.msra.mxu0 %v3612
        %4623 = vmatprep.subr.bf16.mxu0 %v3621
        %4624 = vmatpush1.bf16.msra.mxu0 %v3620
        %4625 = vmatprep.subr.bf16.mxu0 %v3629
        %4626 = vmatpush1.bf16.msra.mxu0 %v3628
        %4627 = vmatprep.mubr.bf16.mxu0 %v1029
        %4628 = vmatmul.mubr.bf16.gmra.mrb[0].mxu0 %v1028
        %v4629 = vpop.f32.mrb[0].mxu0
        %v4630 = vadd.f32 %v4589, %v4629
        %v4631 = vpop.f32.mrb[0].mxu0
        %v4632 = vadd.f32 %v4591, %v4631
        %v4633 = vpop.f32.mrb[0].mxu0
        %v4634 = vpop.f32.mrb[0].mxu0
        %4635 = vdwg.mxu0
        %4636 = vmatprep.subr.bf16.mxu0 %v3127
        %4637 = vmatpush1.bf16.msra.mxu0 %v3126
        %4638 = vmatprep.subr.bf16.mxu0 %v3135
        %4639 = vmatpush1.bf16.msra.mxu0 %v3134
        %4640 = vmatprep.subr.bf16.mxu0 %v3143
        %4641 = vmatpush1.bf16.msra.mxu0 %v3142
        %4642 = vmatprep.subr.bf16.mxu0 %v3151
        %4643 = vmatpush1.bf16.msra.mxu0 %v3150
        %4644 = vmatprep.subr.bf16.mxu0 %v3159
        %4645 = vmatpush1.bf16.msra.mxu0 %v3158
        %4646 = vmatprep.subr.bf16.mxu0 %v3167
        %4647 = vmatpush1.bf16.msra.mxu0 %v3166
        %4648 = vmatprep.subr.bf16.mxu0 %v3175
        %4649 = vmatpush1.bf16.msra.mxu0 %v3174
        %4650 = vmatprep.subr.bf16.mxu0 %v3183
        %4651 = vmatpush1.bf16.msra.mxu0 %v3182
        %4652 = vmatprep.subr.bf16.mxu0 %v3191
        %4653 = vmatpush1.bf16.msra.mxu0 %v3190
        %4654 = vmatprep.subr.bf16.mxu0 %v3199
        %4655 = vmatpush1.bf16.msra.mxu0 %v3198
        %4656 = vmatprep.subr.bf16.mxu0 %v3207
        %4657 = vmatpush1.bf16.msra.mxu0 %v3206
        %4658 = vmatprep.subr.bf16.mxu0 %v3215
        %4659 = vmatpush1.bf16.msra.mxu0 %v3214
        %4660 = vmatprep.subr.bf16.mxu0 %v3223
        %4661 = vmatpush1.bf16.msra.mxu0 %v3222
        %4662 = vmatprep.subr.bf16.mxu0 %v3231
        %4663 = vmatpush1.bf16.msra.mxu0 %v3230
        %4664 = vmatprep.subr.bf16.mxu0 %v3239
        %4665 = vmatpush1.bf16.msra.mxu0 %v3238
        %4666 = vmatprep.subr.bf16.mxu0 %v3247
        %4667 = vmatpush1.bf16.msra.mxu0 %v3246
        %4668 = vmatprep.mubr.bf16.mxu0 %v1023
        %4669 = vmatmul.mubr.bf16.gmra.mrb[0].mxu0 %v1022
        %v4670 = vpop.f32.mrb[0].mxu0
        %v4671 = vadd.f32 %v1571, %v4670
        %v4672 = vpop.f32.mrb[0].mxu0
        %v4673 = vadd.f32 %v1575, %v4672
        %v4674 = vpop.f32.mrb[0].mxu0
        %v4675 = vpop.f32.mrb[0].mxu0
        %4676 = vdwg.mxu0
        %4677 = vmatprep.subr.bf16.mxu0 %v3255
        %4678 = vmatpush1.bf16.msra.mxu0 %v3254
        %4679 = vmatprep.subr.bf16.mxu0 %v3263
        %4680 = vmatpush1.bf16.msra.mxu0 %v3262
        %4681 = vmatprep.subr.bf16.mxu0 %v3271
        %4682 = vmatpush1.bf16.msra.mxu0 %v3270
        %4683 = vmatprep.subr.bf16.mxu0 %v3279
        %4684 = vmatpush1.bf16.msra.mxu0 %v3278
        %4685 = vmatprep.subr.bf16.mxu0 %v3287
        %4686 = vmatpush1.bf16.msra.mxu0 %v3286
        %4687 = vmatprep.subr.bf16.mxu0 %v3295
        %4688 = vmatpush1.bf16.msra.mxu0 %v3294
        %4689 = vmatprep.subr.bf16.mxu0 %v3303
        %4690 = vmatpush1.bf16.msra.mxu0 %v3302
        %4691 = vmatprep.subr.bf16.mxu0 %v3311
        %4692 = vmatpush1.bf16.msra.mxu0 %v3310
        %4693 = vmatprep.subr.bf16.mxu0 %v3319
        %4694 = vmatpush1.bf16.msra.mxu0 %v3318
        %4695 = vmatprep.subr.bf16.mxu0 %v3327
        %4696 = vmatpush1.bf16.msra.mxu0 %v3326
        %4697 = vmatprep.subr.bf16.mxu0 %v3335
        %4698 = vmatpush1.bf16.msra.mxu0 %v3334
        %4699 = vmatprep.subr.bf16.mxu0 %v3343
        %4700 = vmatpush1.bf16.msra.mxu0 %v3342
        %4701 = vmatprep.subr.bf16.mxu0 %v3351
        %4702 = vmatpush1.bf16.msra.mxu0 %v3350
        %4703 = vmatprep.subr.bf16.mxu0 %v3359
        %4704 = vmatpush1.bf16.msra.mxu0 %v3358
        %4705 = vmatprep.subr.bf16.mxu0 %v3367
        %4706 = vmatpush1.bf16.msra.mxu0 %v3366
        %4707 = vmatprep.subr.bf16.mxu0 %v3375
        %4708 = vmatpush1.bf16.msra.mxu0 %v3374
        %4709 = vmatprep.mubr.bf16.mxu0 %v1025
        %4710 = vmatmul.mubr.bf16.gmra.mrb[0].mxu0 %v1024
        %v4711 = vpop.f32.mrb[0].mxu0
        %v4712 = vadd.f32 %v4671, %v4711
        %v4713 = vpop.f32.mrb[0].mxu0
        %v4714 = vadd.f32 %v4673, %v4713
        %v4715 = vpop.f32.mrb[0].mxu0
        %v4716 = vpop.f32.mrb[0].mxu0
        %4717 = vdwg.mxu0
        %4718 = vmatprep.subr.bf16.mxu0 %v3383
        %4719 = vmatpush1.bf16.msra.mxu0 %v3382
        %4720 = vmatprep.subr.bf16.mxu0 %v3391
        %4721 = vmatpush1.bf16.msra.mxu0 %v3390
        %4722 = vmatprep.subr.bf16.mxu0 %v3399
        %4723 = vmatpush1.bf16.msra.mxu0 %v3398
        %4724 = vmatprep.subr.bf16.mxu0 %v3407
        %4725 = vmatpush1.bf16.msra.mxu0 %v3406
        %4726 = vmatprep.subr.bf16.mxu0 %v3415
        %4727 = vmatpush1.bf16.msra.mxu0 %v3414
        %4728 = vmatprep.subr.bf16.mxu0 %v3423
        %4729 = vmatpush1.bf16.msra.mxu0 %v3422
        %4730 = vmatprep.subr.bf16.mxu0 %v3431
        %4731 = vmatpush1.bf16.msra.mxu0 %v3430
        %4732 = vmatprep.subr.bf16.mxu0 %v3439
        %4733 = vmatpush1.bf16.msra.mxu0 %v3438
        %4734 = vmatprep.subr.bf16.mxu0 %v3447
        %4735 = vmatpush1.bf16.msra.mxu0 %v3446
        %4736 = vmatprep.subr.bf16.mxu0 %v3455
        %4737 = vmatpush1.bf16.msra.mxu0 %v3454
        %4738 = vmatprep.subr.bf16.mxu0 %v3463
        %4739 = vmatpush1.bf16.msra.mxu0 %v3462
        %4740 = vmatprep.subr.bf16.mxu0 %v3471
        %4741 = vmatpush1.bf16.msra.mxu0 %v3470
        %4742 = vmatprep.subr.bf16.mxu0 %v3479
        %4743 = vmatpush1.bf16.msra.mxu0 %v3478
        %4744 = vmatprep.subr.bf16.mxu0 %v3487
        %4745 = vmatpush1.bf16.msra.mxu0 %v3486
        %4746 = vmatprep.subr.bf16.mxu0 %v3495
        %4747 = vmatpush1.bf16.msra.mxu0 %v3494
        %4748 = vmatprep.subr.bf16.mxu0 %v3503
        %4749 = vmatpush1.bf16.msra.mxu0 %v3502
        %4750 = vmatprep.mubr.bf16.mxu0 %v1027
        %4751 = vmatmul.mubr.bf16.gmra.mrb[0].mxu0 %v1026
        %v4752 = vpop.f32.mrb[0].mxu0
        %v4753 = vadd.f32 %v4712, %v4752
        %v4754 = vpop.f32.mrb[0].mxu0
        %v4755 = vadd.f32 %v4714, %v4754
        %v4756 = vpop.f32.mrb[0].mxu0
        %v4757 = vpop.f32.mrb[0].mxu0
        %4758 = vdwg.mxu0
        %4759 = vmatprep.subr.bf16.mxu0 %v3511
        %4760 = vmatpush1.bf16.msra.mxu0 %v3510
        %4761 = vmatprep.subr.bf16.mxu0 %v3519
        %4762 = vmatpush1.bf16.msra.mxu0 %v3518
        %4763 = vmatprep.subr.bf16.mxu0 %v3527
        %4764 = vmatpush1.bf16.msra.mxu0 %v3526
        %4765 = vmatprep.subr.bf16.mxu0 %v3535
        %4766 = vmatpush1.bf16.msra.mxu0 %v3534
        %4767 = vmatprep.subr.bf16.mxu0 %v3543
        %4768 = vmatpush1.bf16.msra.mxu0 %v3542
        %4769 = vmatprep.subr.bf16.mxu0 %v3551
        %4770 = vmatpush1.bf16.msra.mxu0 %v3550
        %4771 = vmatprep.subr.bf16.mxu0 %v3559
        %4772 = vmatpush1.bf16.msra.mxu0 %v3558
        %4773 = vmatprep.subr.bf16.mxu0 %v3567
        %4774 = vmatpush1.bf16.msra.mxu0 %v3566
        %4775 = vmatprep.subr.bf16.mxu0 %v3575
        %4776 = vmatpush1.bf16.msra.mxu0 %v3574
        %4777 = vmatprep.subr.bf16.mxu0 %v3583
        %4778 = vmatpush1.bf16.msra.mxu0 %v3582
        %4779 = vmatprep.subr.bf16.mxu0 %v3591
        %4780 = vmatpush1.bf16.msra.mxu0 %v3590
        %4781 = vmatprep.subr.bf16.mxu0 %v3599
        %4782 = vmatpush1.bf16.msra.mxu0 %v3598
        %4783 = vmatprep.subr.bf16.mxu0 %v3607
        %4784 = vmatpush1.bf16.msra.mxu0 %v3606
        %4785 = vmatprep.subr.bf16.mxu0 %v3615
        %4786 = vmatpush1.bf16.msra.mxu0 %v3614
        %4787 = vmatprep.subr.bf16.mxu0 %v3623
        %4788 = vmatpush1.bf16.msra.mxu0 %v3622
        %4789 = vmatprep.subr.bf16.mxu0 %v3631
        %4790 = vmatpush1.bf16.msra.mxu0 %v3630
        %4791 = vmatprep.mubr.bf16.mxu0 %v1029
        %4792 = vmatmul.mubr.bf16.gmra.mrb[0].mxu0 %v1028
        %v4793 = vpop.f32.mrb[0].mxu0
        %v4794 = vadd.f32 %v4753, %v4793
        %v4795 = vpop.f32.mrb[0].mxu0
        %v4796 = vadd.f32 %v4755, %v4795
        %v4797 = vpop.f32.mrb[0].mxu0
        %v4798 = vpop.f32.mrb[0].mxu0
        %4799 = vdwg.mxu0
        %v4800 = vsel %vm796, %v4302, 0.0
        %v4801 = vrot.slane %v4800, 4
        %v4802 = vadd.f32 %v4800, %v4801
        %v4803 = vrot.slane %v4802, 2
        %v4804 = vadd.f32 %v4802, %v4803
        %v4805 = vrot.slane %v4804, 1
        %v4806 = vadd.f32 %v4804, %v4805
        %v4807 = vsel %vm796, %v4304, 0.0
        %v4808 = vrot.slane %v4807, 4
        %v4809 = vadd.f32 %v4807, %v4808
        %v4810 = vrot.slane %v4809, 2
        %v4811 = vadd.f32 %v4809, %v4810
        %v4812 = vrot.slane %v4811, 1
        %v4813 = vadd.f32 %v4811, %v4812
        %v4814 = vsel %vm796, %v4466, 0.0
        %v4815 = vrot.slane %v4814, 4
        %v4816 = vadd.f32 %v4814, %v4815
        %v4817 = vrot.slane %v4816, 2
        %v4818 = vadd.f32 %v4816, %v4817
        %v4819 = vrot.slane %v4818, 1
        %v4820 = vadd.f32 %v4818, %v4819
        %v4821 = vsel %vm796, %v4468, 0.0
        %v4822 = vrot.slane %v4821, 4
        %v4823 = vadd.f32 %v4821, %v4822
        %v4824 = vrot.slane %v4823, 2
        %v4825 = vadd.f32 %v4823, %v4824
        %v4826 = vrot.slane %v4825, 1
        %v4827 = vadd.f32 %v4825, %v4826
        %v4828 = vsel %vm796, %v4630, 0.0
        %v4829 = vrot.slane %v4828, 4
        %v4830 = vadd.f32 %v4828, %v4829
        %v4831 = vrot.slane %v4830, 2
        %v4832 = vadd.f32 %v4830, %v4831
        %v4833 = vrot.slane %v4832, 1
        %v4834 = vadd.f32 %v4832, %v4833
        %v4835 = vsel %vm796, %v4632, 0.0
        %v4836 = vrot.slane %v4835, 4
        %v4837 = vadd.f32 %v4835, %v4836
        %v4838 = vrot.slane %v4837, 2
        %v4839 = vadd.f32 %v4837, %v4838
        %v4840 = vrot.slane %v4839, 1
        %v4841 = vadd.f32 %v4839, %v4840
        %v4842 = vsel %vm796, %v4794, 0.0
        %v4843 = vrot.slane %v4842, 4
        %v4844 = vadd.f32 %v4842, %v4843
        %v4845 = vrot.slane %v4844, 2
        %v4846 = vadd.f32 %v4844, %v4845
        %v4847 = vrot.slane %v4846, 1
        %v4848 = vadd.f32 %v4846, %v4847
        %v4849 = vsel %vm796, %v4796, 0.0
        %v4850 = vrot.slane %v4849, 4
        %v4851 = vadd.f32 %v4849, %v4850
        %v4852 = vrot.slane %v4851, 2
        %v4853 = vadd.f32 %v4851, %v4852
        %v4854 = vrot.slane %v4853, 1
        %v4855 = vadd.f32 %v4853, %v4854
        %v4856 = vmul.f32 %v4806, %v853
        %v4857 = vmul.f32 %v4813, %v853
        %v4858 = vmul.f32 %v4820, %v853
        %v4859 = vmul.f32 %v4827, %v853
        %v4860 = vmul.f32 %v4834, %v853
        %v4861 = vmul.f32 %v4841, %v853
        %v4862 = vmul.f32 %v4848, %v853
        %v4863 = vmul.f32 %v4855, %v853
        %v4864 = vsub.f32 %v4302, %v4856
        %v4865 = vsub.f32 %v4304, %v4857
        %v4866 = vsub.f32 %v4466, %v4858
        %v4867 = vsub.f32 %v4468, %v4859
        %v4868 = vsub.f32 %v4630, %v4860
        %v4869 = vsub.f32 %v4632, %v4861
        %v4870 = vsub.f32 %v4794, %v4862
        %v4871 = vsub.f32 %v4796, %v4863
        %v4872 = vmul.f32 %v4864, %v4864
        %v4873 = vmul.f32 %v4865, %v4865
        %v4874 = vmul.f32 %v4866, %v4866
        %v4875 = vmul.f32 %v4867, %v4867
        %v4876 = vmul.f32 %v4868, %v4868
        %v4877 = vmul.f32 %v4869, %v4869
        %v4878 = vmul.f32 %v4870, %v4870
        %v4879 = vmul.f32 %v4871, %v4871
        %v4880 = vsel %vm796, %v4872, 0.0
        %v4881 = vrot.slane %v4880, 4
        %v4882 = vadd.f32 %v4880, %v4881
        %v4883 = vrot.slane %v4882, 2
        %v4884 = vadd.f32 %v4882, %v4883
        %v4885 = vrot.slane %v4884, 1
        %v4886 = vadd.f32 %v4884, %v4885
        %v4887 = vsel %vm796, %v4873, 0.0
        %v4888 = vrot.slane %v4887, 4
        %v4889 = vadd.f32 %v4887, %v4888
        %v4890 = vrot.slane %v4889, 2
        %v4891 = vadd.f32 %v4889, %v4890
        %v4892 = vrot.slane %v4891, 1
        %v4893 = vadd.f32 %v4891, %v4892
        %v4894 = vsel %vm796, %v4874, 0.0
        %v4895 = vrot.slane %v4894, 4
        %v4896 = vadd.f32 %v4894, %v4895
        %v4897 = vrot.slane %v4896, 2
        %v4898 = vadd.f32 %v4896, %v4897
        %v4899 = vrot.slane %v4898, 1
        %v4900 = vadd.f32 %v4898, %v4899
        %v4901 = vsel %vm796, %v4875, 0.0
        %v4902 = vrot.slane %v4901, 4
        %v4903 = vadd.f32 %v4901, %v4902
        %v4904 = vrot.slane %v4903, 2
        %v4905 = vadd.f32 %v4903, %v4904
        %v4906 = vrot.slane %v4905, 1
        %v4907 = vadd.f32 %v4905, %v4906
        %v4908 = vsel %vm796, %v4876, 0.0
        %v4909 = vrot.slane %v4908, 4
        %v4910 = vadd.f32 %v4908, %v4909
        %v4911 = vrot.slane %v4910, 2
        %v4912 = vadd.f32 %v4910, %v4911
        %v4913 = vrot.slane %v4912, 1
        %v4914 = vadd.f32 %v4912, %v4913
        %v4915 = vsel %vm796, %v4877, 0.0
        %v4916 = vrot.slane %v4915, 4
        %v4917 = vadd.f32 %v4915, %v4916
        %v4918 = vrot.slane %v4917, 2
        %v4919 = vadd.f32 %v4917, %v4918
        %v4920 = vrot.slane %v4919, 1
        %v4921 = vadd.f32 %v4919, %v4920
        %v4922 = vsel %vm796, %v4878, 0.0
        %v4923 = vrot.slane %v4922, 4
        %v4924 = vadd.f32 %v4922, %v4923
        %v4925 = vrot.slane %v4924, 2
        %v4926 = vadd.f32 %v4924, %v4925
        %v4927 = vrot.slane %v4926, 1
        %v4928 = vadd.f32 %v4926, %v4927
        %v4929 = vsel %vm796, %v4879, 0.0
        %v4930 = vrot.slane %v4929, 4
        %v4931 = vadd.f32 %v4929, %v4930
        %v4932 = vrot.slane %v4931, 2
        %v4933 = vadd.f32 %v4931, %v4932
        %v4934 = vrot.slane %v4933, 1
        %v4935 = vadd.f32 %v4933, %v4934
        %v4936 = vmul.f32 %v4886, %v853
        %v4937 = vmul.f32 %v4893, %v853
        %v4938 = vmul.f32 %v4900, %v853
        %v4939 = vmul.f32 %v4907, %v853
        %v4940 = vmul.f32 %v4914, %v853
        %v4941 = vmul.f32 %v4921, %v853
        %v4942 = vmul.f32 %v4928, %v853
        %v4943 = vmul.f32 %v4935, %v853
        %v4944 = vadd.f32 %v4936, 1e-05
        %v4945 = vadd.f32 %v4937, 1e-05
        %v4946 = vadd.f32 %v4938, 1e-05
        %v4947 = vadd.f32 %v4939, 1e-05
        %v4948 = vadd.f32 %v4940, 1e-05
        %v4949 = vadd.f32 %v4941, 1e-05
        %v4950 = vadd.f32 %v4942, 1e-05
        %v4951 = vadd.f32 %v4943, 1e-05
        %v4952 = vrsqrt.pop %v4944
        %v4953 = vrsqrt.pop %v4945
        %v4954 = vrsqrt.pop %v4946
        %v4955 = vrsqrt.pop %v4947
        %v4956 = vrsqrt.pop %v4948
        %v4957 = vrsqrt.pop %v4949
        %v4958 = vrsqrt.pop %v4950
        %v4959 = vrsqrt.pop %v4951
        %v4960 = vmul.f32 %v4864, %v4952
        %v4961 = vmul.f32 %v4865, %v4953
        %v4962 = vmul.f32 %v4866, %v4954
        %v4963 = vmul.f32 %v4867, %v4955
        %v4964 = vmul.f32 %v4868, %v4956
        %v4965 = vmul.f32 %v4869, %v4957
        %v4966 = vmul.f32 %v4870, %v4958
        %v4967 = vmul.f32 %v4871, %v4959
        %v4968 = vld [vmem:[%s419] sm:$0xff]
        %v4970 = vlaneseq
        %v4971 = vshrl.u32 %v4970, 7
        %v4972 = vsub.s32 0, %v4971
        %v4973 = vrot.slane %v4968, %v4972
        %v4974 = vlaneseq
        %v4975 = vshrl.u32 %v4974, 7
        %v4976 = vsub.s32 1, %v4975
        %v4977 = vrot.slane %v4968, %v4976
        %v4978 = vlaneseq
        %v4979 = vshrl.u32 %v4978, 7
        %v4980 = vsub.s32 2, %v4979
        %v4981 = vrot.slane %v4968, %v4980
        %v4982 = vlaneseq
        %v4983 = vshrl.u32 %v4982, 7
        %v4984 = vsub.s32 3, %v4983
        %v4985 = vrot.slane %v4968, %v4984
        %v4986 = vlaneseq
        %v4987 = vshrl.u32 %v4986, 7
        %v4988 = vsub.s32 4, %v4987
        %v4989 = vrot.slane %v4968, %v4988
        %v4990 = vlaneseq
        %v4991 = vshrl.u32 %v4990, 7
        %v4992 = vsub.s32 5, %v4991
        %v4993 = vrot.slane %v4968, %v4992
        %v4994 = vlaneseq
        %v4995 = vshrl.u32 %v4994, 7
        %v4996 = vsub.s32 6, %v4995
        %v4997 = vrot.slane %v4968, %v4996
        %v4998 = vlaneseq
        %v4999 = vshrl.u32 %v4998, 7
        %v5000 = vsub.s32 7, %v4999
        %v5001 = vrot.slane %v4968, %v5000
        %v5010 = vmul.f32 %v4960, %v4973
        %v5011 = vmul.f32 %v4961, %v4977
        %v5012 = vmul.f32 %v4962, %v4981
        %v5013 = vmul.f32 %v4963, %v4985
        %v5014 = vmul.f32 %v4964, %v4989
        %v5015 = vmul.f32 %v4965, %v4993
        %v5016 = vmul.f32 %v4966, %v4997
        %v5017 = vmul.f32 %v4967, %v5001
        %v5018 = vld [vmem:[%s428] sm:$0xff]
        %v5020 = vlaneseq
        %v5021 = vshrl.u32 %v5020, 7
        %v5022 = vsub.s32 0, %v5021
        %v5023 = vrot.slane %v5018, %v5022
        %v5024 = vlaneseq
        %v5025 = vshrl.u32 %v5024, 7
        %v5026 = vsub.s32 1, %v5025
        %v5027 = vrot.slane %v5018, %v5026
        %v5028 = vlaneseq
        %v5029 = vshrl.u32 %v5028, 7
        %v5030 = vsub.s32 2, %v5029
        %v5031 = vrot.slane %v5018, %v5030
        %v5032 = vlaneseq
        %v5033 = vshrl.u32 %v5032, 7
        %v5034 = vsub.s32 3, %v5033
        %v5035 = vrot.slane %v5018, %v5034
        %v5036 = vlaneseq
        %v5037 = vshrl.u32 %v5036, 7
        %v5038 = vsub.s32 4, %v5037
        %v5039 = vrot.slane %v5018, %v5038
        %v5040 = vlaneseq
        %v5041 = vshrl.u32 %v5040, 7
        %v5042 = vsub.s32 5, %v5041
        %v5043 = vrot.slane %v5018, %v5042
        %v5044 = vlaneseq
        %v5045 = vshrl.u32 %v5044, 7
        %v5046 = vsub.s32 6, %v5045
        %v5047 = vrot.slane %v5018, %v5046
        %v5048 = vlaneseq
        %v5049 = vshrl.u32 %v5048, 7
        %v5050 = vsub.s32 7, %v5049
        %v5051 = vrot.slane %v5018, %v5050
        %v5060 = vadd.f32 %v5010, %v5023
        %v5061 = vadd.f32 %v5011, %v5027
        %v5062 = vadd.f32 %v5012, %v5031
        %v5063 = vadd.f32 %v5013, %v5035
        %v5064 = vadd.f32 %v5014, %v5039
        %v5065 = vadd.f32 %v5015, %v5043
        %v5066 = vadd.f32 %v5016, %v5047
        %v5067 = vadd.f32 %v5017, %v5051
        %v5068 = vmax.f32 %v5060, 0.0
        %v5069 = vmax.f32 %v5061, 0.0
        %v5070 = vmax.f32 %v5062, 0.0
        %v5071 = vmax.f32 %v5063, 0.0
        %v5072 = vmax.f32 %v5064, 0.0
        %v5073 = vmax.f32 %v5065, 0.0
        %v5074 = vmax.f32 %v5066, 0.0
        %v5075 = vmax.f32 %v5067, 0.0
        %v5076 = vpack.c.bf16 %v5068, %v5068
        %v5077 = vpack.c.bf16 %v5069, %v5069
        %v5078 = vpack.c.bf16 %v5070, %v5070
        %v5079 = vpack.c.bf16 %v5071, %v5071
        %v5080 = vpack.c.bf16 %v5072, %v5072
        %v5081 = vpack.c.bf16 %v5073, %v5073
        %v5082 = vpack.c.bf16 %v5074, %v5074
        %v5083 = vpack.c.bf16 %v5075, %v5075
        %v5092 = vcombine.low %v5076, %v5077
        %v5093 = vcombine.low %v5078, %v5079
        %v5095 = vunpack.c.l.s4 1983009808
        %v5096 = vunpack.c.0.s8 %v5095
        %v5097 = vlaneseq
        %v5098 = vshrl.u32 %v5097, 7
        %v5099 = vsub.s32 %v5096, %v5098
        %v5100 = vrot.slane %v5092, %v5099
        %v5102 = vunpack.c.l.s4 1983009808
        %v5103 = vunpack.c.0.s8 %v5102
        %v5104 = vlaneseq
        %v5105 = vshrl.u32 %v5104, 7
        %v5106 = vsub.s32 %v5103, %v5105
        %v5107 = vrot.slane %v5093, %v5106
        %v5108 = vcombine.low %v5100, %v5107
        %v5109 = vcombine.low %v5080, %v5081
        %v5110 = vcombine.low %v5082, %v5083
        %v5112 = vunpack.c.l.s4 1983009808
        %v5113 = vunpack.c.0.s8 %v5112
        %v5114 = vlaneseq
        %v5115 = vshrl.u32 %v5114, 7
        %v5116 = vsub.s32 %v5113, %v5115
        %v5117 = vrot.slane %v5109, %v5116
        %v5119 = vunpack.c.l.s4 1983009808
        %v5120 = vunpack.c.0.s8 %v5119
        %v5121 = vlaneseq
        %v5122 = vshrl.u32 %v5121, 7
        %v5123 = vsub.s32 %v5120, %v5122
        %v5124 = vrot.slane %v5110, %v5123
        %v5125 = vcombine.low %v5117, %v5124
        %5128 = vst [vmem:[%s486] sm:$0xff] %v5108
        %5129 = vst [vmem:[%s486 + $0x8] sm:$0xff] %v5125
        %s5130 = smul.u32 8, %s22
        %p5131 = scmp.lt.s32.totalorder %s5130, 15
        %s5132 = scalar_select %p5131, %s5130, 15
        %s5133 = smul.addr %s5132, 2
        %s5134 = scalar_lea.vmem %s9, %s5133
        // Predicated region
        $region81: #{generator_forward.3} parent=55 // pred_check
          %p5135 = pneg %p249
        $region82: #{generator_forward.3} parent=55 // pred_check_branch
          %5137 = sbr.rel (%p5135) target = $region84
        $region83: #{generator_forward.3} parent=55 // pred_region
          %s5138 = smul.u32 8, %s22
        $region84: #{generator_forward.3} parent=55 // pred_fallthru
          _
      $region56: #{generator_forward.3} parent=5 // pred_fallthru
        _
      %p5139 = scmp.le.s32.totalorder 2, %s17
      // Predicated region
      $region85: #{generator_forward.3} parent=5 // pred_check
        %p5140 = pneg %p5139
      $region86: #{generator_forward.3} parent=5 // pred_check_branch
        %5142 = sbr.rel (%p5140) target = $region88
      $region87: #{generator_forward.3} parent=5 // pred_region
        %s5143 = ssub.s32 %s17, 2
        // Predicated region
        $region89: #{generator_forward.3} parent=87 // pred_check
          %p5144 = pneg %p255
        $region90: #{generator_forward.3} parent=87 // pred_check_branch
          %5146 = sbr.rel (%p5144) target = $region92
        $region91: #{generator_forward.3} parent=87 // pred_region
          %s5147 = smul.u32 8, %s23
          %p5148 = scmp.lt.s32.totalorder %s5147, 15
          %s5149 = scalar_select %p5148, %s5147, 15
          %s5150 = smul.addr %s5149, 2
          %s5151 = scalar_lea.vmem %s9, %s5150
        $region92: #{generator_forward.3} parent=87 // pred_fallthru
          _
      $region88: #{generator_forward.3} parent=5 // pred_fallthru
        _
    $region6: #{generator_forward.3} parent=1 // loop_footer
      %s21 = sadd.s32 1, %s17
    $region7: #{generator_forward.3} parent=1 // loop_footer_branch
      %16 = sbr.rel target = $region3
    $region8: #{generator_forward.3} parent=1 // loop_exit
      _
    %5152 = vsyncpa [#allocation3], 1
    %s5153 = scalar_lea.sflag [#allocation3], 1
    %5154 = vsyncpa %s5153, 1
    %5155 = vsyncpa [#allocation5], 1

// kernel: generator_forward.4
$region0: #{generator_forward.4}
  #allocation0 [shape = 'u32[]', space=smem, size = 0x4, offset = 0x4, fixed_abs, tag = 'smem constant byte address 0x4 - core index']
  #allocation1 [shape = 'u32[144,128]{1,0:T(1,128)}', space=vmem, size = 0x12000, scoped, tag = 'internal scratch']
  %s0 = inlined_call_operand.vmem [shape: bf16[4,64,512], index: 0, kind: input, shape index: {}]
  %s1 = inlined_call_operand.vmem [shape: bf16[4,512,64], index: 1, kind: input, shape index: {}]
  %s2 = inlined_call_operand.vmem [shape: f32[1,64], index: 2, kind: input, shape index: {}]
  %s3 = inlined_call_operand.vmem [shape: bf16[4,64,64], index: 3, kind: output, shape index: {}]
  %s4 = sld [smem:[#allocation0]]
  $region45: #{generator_forward.4} parent=0
    _
  %s6 = ssub.s32 1, %s4
  %s7 = scalar_select 0, %s6, %s4
  loop: start=0, step=1, limit=6
  $region2: #{generator_forward.4} parent=0 // loop_pre_header
    _
  $region3: #{generator_forward.4} parent=0 // loop_header
    %s9 = sphi 0, %s13
    %p10 = scmp.ge.s32.totalorder %s9, 6
    %s16 = sphi 0, %s28
    %s17 = sphi 0, %s24
    %s18 = sphi 0, %s16
    %s19 = sphi 0, %s17
    %s20 = sphi 0, %s18
    %s21 = sphi 0, %s19
    %s33 = sphi 0, %s35
    %s36 = sphi 0, %s33
    %s37 = sphi 0, %s36
    %s53 = sphi 0, %s37
    %s59 = sphi 0, %s61
    %s62 = sphi 0, %s59
    %s63 = sphi 0, %s62
    %s79 = sphi 0, %s63
    %s83 = sphi 0, %s83
    %s85 = sphi 0, %s83
    %s86 = sphi 0, %s85
    %s100 = sphi 0, %s86
    %s108 = sphi 0, %s110
    %s111 = sphi 0, %s108
    %s112 = sphi 0, %s111
    %s128 = sphi 0, %s112
  $region4: #{generator_forward.4} parent=0 // loop_header_branch
    %12 = sbr.rel (%p10) target = $region8
  $region5: #{generator_forward.4} parent=0 // loop_body
    %s14 = ssub.s32 %s9, 1
    %s15 = ssub.s32 %s9, 2
    %s22 = sadd.s32 1, %s17
    %p23 = scmp.ge.s32.totalorder %s22, 1
    %s24 = scalar_select %p23, 0, %s22
    %s25 = sadd.s32 1, %s16
    %s26 = scalar_select %p23, %s25, %s16
    %p27 = scmp.ge.s32.totalorder %s26, 4
    %s28 = scalar_select %p27, 0, %s26
    %s29 = ssub.s32 %s16, %s28
    %s30 = ssub.s32 %s17, %s24
    %s31 = sor.u32 %s29, %s30
    %p32 = scmp.eq.s32.totalorder %s31, 0
    %s34 = sadd.s32 %s33, 1
    %s35 = scalar_select %p32, %s33, %s34
    %p38 = pneg %p32
    %p39 = scmp.eq.s32.totalorder %s9, 3
    %p40 = por %p38, %p39
    %p41 = scmp.ne.s32.totalorder %s33, %s36
    %p42 = scmp.eq.s32.totalorder %s9, 0
    %p43 = por %p41, %p42
    %p44 = scmp.ne.s32.totalorder %s33, %s36
    %p45 = scmp.eq.s32.totalorder %s14, 3
    %p46 = por %p44, %p45
    %p47 = scmp.ne.s32.totalorder %s36, %s37
    %p48 = scmp.eq.s32.totalorder %s14, 0
    %p49 = por %p47, %p48
    %p50 = scmp.ne.s32.totalorder %s36, %s37
    %p51 = scmp.eq.s32.totalorder %s15, 3
    %p52 = por %p50, %p51
    %p54 = scmp.ne.s32.totalorder %s37, %s53
    %p55 = scmp.eq.s32.totalorder %s15, 0
    %p56 = por %p54, %p55
    %s57 = ssub.s32 %s16, %s28
    %p58 = scmp.eq.s32.totalorder %s57, 0
    %s60 = sadd.s32 %s59, 1
    %s61 = scalar_select %p58, %s59, %s60
    %p64 = pneg %p58
    %p65 = scmp.eq.s32.totalorder %s9, 3
    %p66 = por %p64, %p65
    %p67 = scmp.ne.s32.totalorder %s59, %s62
    %p68 = scmp.eq.s32.totalorder %s9, 0
    %p69 = por %p67, %p68
    %p70 = scmp.ne.s32.totalorder %s59, %s62
    %p71 = scmp.eq.s32.totalorder %s14, 3
    %p72 = por %p70, %p71
    %p73 = scmp.ne.s32.totalorder %s62, %s63
    %p74 = scmp.eq.s32.totalorder %s14, 0
    %p75 = por %p73, %p74
    %p76 = scmp.ne.s32.totalorder %s62, %s63
    %p77 = scmp.eq.s32.totalorder %s15, 3
    %p78 = por %p76, %p77
    %p80 = scmp.ne.s32.totalorder %s63, %s79
    %p81 = scmp.eq.s32.totalorder %s15, 0
    %p82 = por %p80, %p81
    %s84 = sadd.s32 %s83, 1
    %p87 = scmp.eq.s32.totalorder %s9, 3
    %p88 = scmp.ne.s32.totalorder %s83, %s85
    %p89 = scmp.eq.s32.totalorder %s9, 0
    %p90 = por %p88, %p89
    %p91 = scmp.ne.s32.totalorder %s83, %s85
    %p92 = scmp.eq.s32.totalorder %s14, 3
    %p93 = por %p91, %p92
    %p94 = scmp.ne.s32.totalorder %s85, %s86
    %p95 = scmp.eq.s32.totalorder %s14, 0
    %p96 = por %p94, %p95
    %p97 = scmp.ne.s32.totalorder %s85, %s86
    %p98 = scmp.eq.s32.totalorder %s15, 3
    %p99 = por %p97, %p98
    %p101 = scmp.ne.s32.totalorder %s86, %s100
    %p102 = scmp.eq.s32.totalorder %s15, 0
    %p103 = por %p101, %p102
    %s104 = ssub.s32 %s16, %s28
    %s105 = ssub.s32 %s17, %s24
    %s106 = sor.u32 %s104, %s105
    %p107 = scmp.eq.s32.totalorder %s106, 0
    %s109 = sadd.s32 %s108, 1
    %s110 = scalar_select %p107, %s108, %s109
    %p113 = pneg %p107
    %p114 = scmp.eq.s32.totalorder %s9, 3
    %p115 = por %p113, %p114
    %p116 = scmp.ne.s32.totalorder %s108, %s111
    %p117 = scmp.eq.s32.totalorder %s9, 0
    %p118 = por %p116, %p117
    %p119 = scmp.ne.s32.totalorder %s108, %s111
    %p120 = scmp.eq.s32.totalorder %s14, 3
    %p121 = por %p119, %p120
    %p122 = scmp.ne.s32.totalorder %s111, %s112
    %p123 = scmp.eq.s32.totalorder %s14, 0
    %p124 = por %p122, %p123
    %p125 = scmp.ne.s32.totalorder %s111, %s112
    %p126 = scmp.eq.s32.totalorder %s15, 3
    %p127 = por %p125, %p126
    %p129 = scmp.ne.s32.totalorder %s112, %s128
    %p130 = scmp.eq.s32.totalorder %s15, 0
    %p131 = por %p129, %p130
    %p132 = scmp.le.s32.totalorder 1, %s9
    %p133 = scmp.lt.s32.totalorder %s9, 5
    %p134 = pnand %p132, %p133
    %p135 = pneg %p134
    // Predicated region
    $region9: #{generator_forward.4} parent=5 // pred_check
      _
    $region10: #{generator_forward.4} parent=5 // pred_check_branch
      %137 = sbr.rel (%p134) target = $region12
    $region11: #{generator_forward.4} parent=5 // pred_region
      %s138 = ssub.s32 %s9, 1
      // Predicated region
      $region13: #{generator_forward.4} parent=11 // pred_check
        %p139 = pneg %p96
      $region14: #{generator_forward.4} parent=11 // pred_check_branch
        %141 = sbr.rel (%p139) target = $region16
      $region15: #{generator_forward.4} parent=11 // pred_region
        _
      $region16: #{generator_forward.4} parent=11 // pred_fallthru
        _
    $region12: #{generator_forward.4} parent=5 // pred_fallthru
      _
    %p142 = scmp.lt.s32.totalorder %s9, 4
    // Predicated region
    $region17: #{generator_forward.4} parent=5 // pred_check
      %p143 = pneg %p142
    $region18: #{generator_forward.4} parent=5 // pred_check_branch
      %145 = sbr.rel (%p143) target = $region20
    $region19: #{generator_forward.4} parent=5 // pred_region
      // Predicated region
      $region21: #{generator_forward.4} parent=19 // pred_check
        %p146 = pneg %p43
      $region22: #{generator_forward.4} parent=19 // pred_check_branch
        %148 = sbr.rel (%p146) target = $region24
      $region23: #{generator_forward.4} parent=19 // pred_region
        %s149 = smul.u32 8, %s17
        %p150 = scmp.lt.s32.totalorder %s16, 3
        %s151 = scalar_select %p150, %s16, 3
        %p152 = scmp.lt.s32.totalorder %s149, 7
        %s153 = scalar_select %p152, %s149, 7
        %s154 = smul.addr %s153, 4
        %s155 = smul.addr %s151, 32
        %s156 = sadd.s32 %s154, %s155
        %s157 = smul.addr %s156, 4
        %s158 = scalar_lea.vmem %s0, %s157
        %s159 = smul.u32 8, %s17
      $region24: #{generator_forward.4} parent=19 // pred_fallthru
        _
      // Predicated region
      $region25: #{generator_forward.4} parent=19 // pred_check
        %p160 = pneg %p69
      $region26: #{generator_forward.4} parent=19 // pred_check_branch
        %162 = sbr.rel (%p160) target = $region28
      $region27: #{generator_forward.4} parent=19 // pred_region
        %p163 = scmp.lt.s32.totalorder %s16, 3
        %s164 = scalar_select %p163, %s16, 3
        %s165 = smul.addr %s164, 64
        %s166 = smul.addr %s165, 4
        %s167 = scalar_lea.vmem %s1, %s166
      $region28: #{generator_forward.4} parent=19 // pred_fallthru
        _
    $region20: #{generator_forward.4} parent=5 // pred_fallthru
      _
    %p168 = scmp.le.s32.totalorder 1, %s9
    %p169 = scmp.lt.s32.totalorder %s9, 5
    %p170 = pnand %p168, %p169
    %p171 = pneg %p170
    // Predicated region
    $region29: #{generator_forward.4} parent=5 // pred_check
      _
    $region30: #{generator_forward.4} parent=5 // pred_check_branch
      %173 = sbr.rel (%p170) target = $region32
    $region31: #{generator_forward.4} parent=5 // pred_region
      %s174 = ssub.s32 %s9, 1
      %s175 = smul.u32 8, %s19
      %p176 = scmp.lt.s32.totalorder %s18, 3
      %s177 = scalar_select %p176, %s18, 3
      %p178 = scmp.lt.s32.totalorder %s175, 7
      %s179 = scalar_select %p178, %s175, 7
      %s180 = smul.addr %s179, 4
      %s181 = smul.addr %s177, 32
      %s182 = sadd.s32 %s180, %s181
      %s183 = smul.addr %s182, 4
      %s184 = scalar_lea.vmem %s0, %s183
      %p185 = pneg %p49
      %p186 = pneg %p46
      %p187 = scmp.lt.s32.totalorder %s18, 3
      %s188 = scalar_select %p187, %s18, 3
      %s189 = smul.addr %s188, 64
      %s190 = smul.addr %s189, 4
      %s191 = scalar_lea.vmem %s1, %s190
      %p192 = pneg %p75
      %p193 = pneg %p72
      %p194 = pneg %p96
      %p195 = pneg %p93
      %p196 = pneg %p124
      %p197 = pneg %p121
      %s198 = smul.u32 8, %s19
      %p199 = scmp.lt.s32.totalorder %s18, 3
      %s200 = scalar_select %p199, %s18, 3
      %p201 = scmp.lt.s32.totalorder %s198, 7
      %s202 = scalar_select %p201, %s198, 7
      %s203 = smul.addr %s200, 8
      %s204 = sadd.s32 %s202, %s203
      %s205 = smul.addr %s204, 4
      %s206 = scalar_lea.vmem %s3, %s205
      %s207 = smul.u32 8, %s19
      %p208 = scmp.lt.s32.totalorder %s18, 3
      %s209 = scalar_select %p208, %s18, 3
      %p210 = scmp.lt.s32.totalorder %s207, 7
      %s211 = scalar_select %p210, %s207, 7
      %s212 = smul.addr %s211, 4
      %s213 = smul.addr %s209, 32
      %s214 = sadd.s32 %s212, %s213
      %s215 = smul.addr %s214, 4
      %s216 = scalar_lea.vmem %s0, %s215
      %s217 = smul.u32 8, %s19
      %p218 = scmp.lt.s32.totalorder %s18, 3
      %s219 = scalar_select %p218, %s18, 3
      %s220 = smul.addr %s219, 64
      %s221 = smul.addr %s220, 4
      %s222 = scalar_lea.vmem %s1, %s221
      %s223 = smul.u32 8, %s19
      %p224 = scmp.lt.s32.totalorder %s18, 3
      %s225 = scalar_select %p224, %s18, 3
      %p226 = scmp.lt.s32.totalorder %s223, 7
      %s227 = scalar_select %p226, %s223, 7
      %s228 = smul.addr %s225, 8
      %s229 = sadd.s32 %s227, %s228
      %s230 = smul.addr %s229, 4
      %s231 = scalar_lea.vmem %s3, %s230
      %s232 = smul.u32 8, %s19
      %v234 = vld [vmem:[%s216] sm:$0xff]
      %v235 = vld [vmem:[%s216 + $0x8] sm:$0xff]
      %v236 = vld [vmem:[%s216 + $0x10] sm:$0xff]
      %v237 = vld [vmem:[%s216 + $0x18] sm:$0xff]
      %v238 = vld [vmem:[%s216 + $0x20] sm:$0xff]
      %v239 = vld [vmem:[%s216 + $0x28] sm:$0xff]
      %v240 = vld [vmem:[%s216 + $0x30] sm:$0xff]
      %v241 = vld [vmem:[%s216 + $0x38] sm:$0xff]
      %v242 = vld [vmem:[%s216 + $0x40] sm:$0xff]
      %v243 = vld [vmem:[%s216 + $0x48] sm:$0xff]
      %v244 = vld [vmem:[%s216 + $0x50] sm:$0xff]
      %v245 = vld [vmem:[%s216 + $0x58] sm:$0xff]
      %v246 = vld [vmem:[%s216 + $0x60] sm:$0xff]
      %v247 = vld [vmem:[%s216 + $0x68] sm:$0xff]
      %v248 = vld [vmem:[%s216 + $0x70] sm:$0xff]
      %v249 = vld [vmem:[%s216 + $0x78] sm:$0xff]
      %v250 = vld [vmem:[%s222] sm:$0xf]
      %v251 = vld [vmem:[%s222 + $0x4] sm:$0xf]
      %v252 = vld [vmem:[%s222 + $0x8] sm:$0xf]
      %v253 = vld [vmem:[%s222 + $0xc] sm:$0xf]
      %v254 = vld [vmem:[%s222 + $0x10] sm:$0xf]
      %v255 = vld [vmem:[%s222 + $0x14] sm:$0xf]
      %v256 = vld [vmem:[%s222 + $0x18] sm:$0xf]
      %v257 = vld [vmem:[%s222 + $0x1c] sm:$0xf]
      %v258 = vld [vmem:[%s222 + $0x20] sm:$0xf]
      %v259 = vld [vmem:[%s222 + $0x24] sm:$0xf]
      %v260 = vld [vmem:[%s222 + $0x28] sm:$0xf]
      %v261 = vld [vmem:[%s222 + $0x2c] sm:$0xf]
      %v262 = vld [vmem:[%s222 + $0x30] sm:$0xf]
      %v263 = vld [vmem:[%s222 + $0x34] sm:$0xf]
      %v264 = vld [vmem:[%s222 + $0x38] sm:$0xf]
      %v265 = vld [vmem:[%s222 + $0x3c] sm:$0xf]
      %v266 = vld [vmem:[%s222 + $0x40] sm:$0xf]
      %v267 = vld [vmem:[%s222 + $0x44] sm:$0xf]
      %v268 = vld [vmem:[%s222 + $0x48] sm:$0xf]
      %v269 = vld [vmem:[%s222 + $0x4c] sm:$0xf]
      %v270 = vld [vmem:[%s222 + $0x50] sm:$0xf]
      %v271 = vld [vmem:[%s222 + $0x54] sm:$0xf]
      %v272 = vld [vmem:[%s222 + $0x58] sm:$0xf]
      %v273 = vld [vmem:[%s222 + $0x5c] sm:$0xf]
      %v274 = vld [vmem:[%s222 + $0x60] sm:$0xf]
      %v275 = vld [vmem:[%s222 + $0x64] sm:$0xf]
      %v276 = vld [vmem:[%s222 + $0x68] sm:$0xf]
      %v277 = vld [vmem:[%s222 + $0x6c] sm:$0xf]
      %v278 = vld [vmem:[%s222 + $0x70] sm:$0xf]
      %v279 = vld [vmem:[%s222 + $0x74] sm:$0xf]
      %v280 = vld [vmem:[%s222 + $0x78] sm:$0xf]
      %v281 = vld [vmem:[%s222 + $0x7c] sm:$0xf]
      %v282 = vld [vmem:[%s222 + $0x80] sm:$0xf]
      %v283 = vld [vmem:[%s222 + $0x84] sm:$0xf]
      %v284 = vld [vmem:[%s222 + $0x88] sm:$0xf]
      %v285 = vld [vmem:[%s222 + $0x8c] sm:$0xf]
      %v286 = vld [vmem:[%s222 + $0x90] sm:$0xf]
      %v287 = vld [vmem:[%s222 + $0x94] sm:$0xf]
      %v288 = vld [vmem:[%s222 + $0x98] sm:$0xf]
      %v289 = vld [vmem:[%s222 + $0x9c] sm:$0xf]
      %v290 = vld [vmem:[%s222 + $0xa0] sm:$0xf]
      %v291 = vld [vmem:[%s222 + $0xa4] sm:$0xf]
      %v292 = vld [vmem:[%s222 + $0xa8] sm:$0xf]
      %v293 = vld [vmem:[%s222 + $0xac] sm:$0xf]
      %v294 = vld [vmem:[%s222 + $0xb0] sm:$0xf]
      %v295 = vld [vmem:[%s222 + $0xb4] sm:$0xf]
      %v296 = vld [vmem:[%s222 + $0xb8] sm:$0xf]
      %v297 = vld [vmem:[%s222 + $0xbc] sm:$0xf]
      %v298 = vld [vmem:[%s222 + $0xc0] sm:$0xf]
      %v299 = vld [vmem:[%s222 + $0xc4] sm:$0xf]
      %v300 = vld [vmem:[%s222 + $0xc8] sm:$0xf]
      %v301 = vld [vmem:[%s222 + $0xcc] sm:$0xf]
      %v302 = vld [vmem:[%s222 + $0xd0] sm:$0xf]
      %v303 = vld [vmem:[%s222 + $0xd4] sm:$0xf]
      %v304 = vld [vmem:[%s222 + $0xd8] sm:$0xf]
      %v305 = vld [vmem:[%s222 + $0xdc] sm:$0xf]
      %v306 = vld [vmem:[%s222 + $0xe0] sm:$0xf]
      %v307 = vld [vmem:[%s222 + $0xe4] sm:$0xf]
      %v308 = vld [vmem:[%s222 + $0xe8] sm:$0xf]
      %v309 = vld [vmem:[%s222 + $0xec] sm:$0xf]
      %v310 = vld [vmem:[%s222 + $0xf0] sm:$0xf]
      %v311 = vld [vmem:[%s222 + $0xf4] sm:$0xf]
      %v312 = vld [vmem:[%s222 + $0xf8] sm:$0xf]
      %v313 = vld [vmem:[%s222 + $0xfc] sm:$0xf]
      %v314 = vld [vmem:[%s2] sm:$0x1]
      %v316 = vlaneseq
      %v317 = vshrl.u32 %v316, 7
      %v318 = vsub.s32 0, %v317
      %v319 = vrot.slane %v314, %v318
      %v337 = vunpack.c.l.b16 %v234
      %v338 = vunpack.c.h.b16 %v234
      %v339 = vunpack.c.l.b16 %v235
      %v340 = vunpack.c.h.b16 %v235
      %v341 = vunpack.c.l.b16 %v236
      %v342 = vunpack.c.h.b16 %v236
      %v343 = vunpack.c.l.b16 %v237
      %v344 = vunpack.c.h.b16 %v237
      %v345 = vunpack.c.l.b16 %v238
      %v346 = vunpack.c.h.b16 %v238
      %v347 = vunpack.c.l.b16 %v239
      %v348 = vunpack.c.h.b16 %v239
      %v349 = vunpack.c.l.b16 %v240
      %v350 = vunpack.c.h.b16 %v240
      %v351 = vunpack.c.l.b16 %v241
      %v352 = vunpack.c.h.b16 %v241
      %v353 = vunpack.c.l.b16 %v242
      %v354 = vunpack.c.h.b16 %v242
      %v355 = vunpack.c.l.b16 %v243
      %v356 = vunpack.c.h.b16 %v243
      %v357 = vunpack.c.l.b16 %v244
      %v358 = vunpack.c.h.b16 %v244
      %v359 = vunpack.c.l.b16 %v245
      %v360 = vunpack.c.h.b16 %v245
      %v361 = vunpack.c.l.b16 %v246
      %v362 = vunpack.c.h.b16 %v246
      %v363 = vunpack.c.l.b16 %v247
      %v364 = vunpack.c.h.b16 %v247
      %v365 = vunpack.c.l.b16 %v248
      %v366 = vunpack.c.h.b16 %v248
      %v367 = vunpack.c.l.b16 %v249
      %v368 = vunpack.c.h.b16 %v249
      %v369 = vpack.c.b16 %v341, %v337
      %v370 = vpack.c.b16 %v342, %v338
      %v371 = vpack.c.b16 %v343, %v339
      %v372 = vpack.c.b16 %v344, %v340
      %v373 = vpack.c.b16 %v349, %v345
      %v374 = vpack.c.b16 %v350, %v346
      %v375 = vpack.c.b16 %v351, %v347
      %v376 = vpack.c.b16 %v352, %v348
      %v377 = vpack.c.b16 %v357, %v353
      %v378 = vpack.c.b16 %v358, %v354
      %v379 = vpack.c.b16 %v359, %v355
      %v380 = vpack.c.b16 %v360, %v356
      %v381 = vpack.c.b16 %v365, %v361
      %v382 = vpack.c.b16 %v366, %v362
      %v383 = vpack.c.b16 %v367, %v363
      %v384 = vpack.c.b16 %v368, %v364
      %v465 = vunpack.c.l.b16 %v250
      %v466 = vunpack.c.l.b16 %v251
      %v467 = vunpack.c.l.b16 %v252
      %v468 = vunpack.c.l.b16 %v253
      %v469 = vunpack.c.l.b16 %v254
      %v470 = vunpack.c.l.b16 %v255
      %v471 = vunpack.c.l.b16 %v256
      %v472 = vunpack.c.l.b16 %v257
      %v473 = vunpack.c.l.b16 %v258
      %v474 = vunpack.c.l.b16 %v259
      %v475 = vunpack.c.l.b16 %v260
      %v476 = vunpack.c.l.b16 %v261
      %v477 = vunpack.c.l.b16 %v262
      %v478 = vunpack.c.l.b16 %v263
      %v479 = vunpack.c.l.b16 %v264
      %v480 = vunpack.c.l.b16 %v265
      %v481 = vunpack.c.l.b16 %v266
      %v482 = vunpack.c.l.b16 %v267
      %v483 = vunpack.c.l.b16 %v268
      %v484 = vunpack.c.l.b16 %v269
      %v485 = vunpack.c.l.b16 %v270
      %v486 = vunpack.c.l.b16 %v271
      %v487 = vunpack.c.l.b16 %v272
      %v488 = vunpack.c.l.b16 %v273
      %v489 = vunpack.c.l.b16 %v274
      %v490 = vunpack.c.l.b16 %v275
      %v491 = vunpack.c.l.b16 %v276
      %v492 = vunpack.c.l.b16 %v277
      %v493 = vunpack.c.l.b16 %v278
      %v494 = vunpack.c.l.b16 %v279
      %v495 = vunpack.c.l.b16 %v280
      %v496 = vunpack.c.l.b16 %v281
      %v497 = vunpack.c.l.b16 %v282
      %v498 = vunpack.c.l.b16 %v283
      %v499 = vunpack.c.l.b16 %v284
      %v500 = vunpack.c.l.b16 %v285
      %v501 = vunpack.c.l.b16 %v286
      %v502 = vunpack.c.l.b16 %v287
      %v503 = vunpack.c.l.b16 %v288
      %v504 = vunpack.c.l.b16 %v289
      %v505 = vunpack.c.l.b16 %v290
      %v506 = vunpack.c.l.b16 %v291
      %v507 = vunpack.c.l.b16 %v292
      %v508 = vunpack.c.l.b16 %v293
      %v509 = vunpack.c.l.b16 %v294
      %v510 = vunpack.c.l.b16 %v295
      %v511 = vunpack.c.l.b16 %v296
      %v512 = vunpack.c.l.b16 %v297
      %v513 = vunpack.c.l.b16 %v298
      %v514 = vunpack.c.l.b16 %v299
      %v515 = vunpack.c.l.b16 %v300
      %v516 = vunpack.c.l.b16 %v301
      %v517 = vunpack.c.l.b16 %v302
      %v518 = vunpack.c.l.b16 %v303
      %v519 = vunpack.c.l.b16 %v304
      %v520 = vunpack.c.l.b16 %v305
      %v521 = vunpack.c.l.b16 %v306
      %v522 = vunpack.c.l.b16 %v307
      %v523 = vunpack.c.l.b16 %v308
      %v524 = vunpack.c.l.b16 %v309
      %v525 = vunpack.c.l.b16 %v310
      %v526 = vunpack.c.l.b16 %v311
      %v527 = vunpack.c.l.b16 %v312
      %v528 = vunpack.c.l.b16 %v313
      %v529 = vpack.c.b16 %v466, %v465
      %v530 = vpack.c.b16 %v468, %v467
      %v531 = vpack.c.b16 %v470, %v469
      %v532 = vpack.c.b16 %v472, %v471
      %v533 = vpack.c.b16 %v474, %v473
      %v534 = vpack.c.b16 %v476, %v475
      %v535 = vpack.c.b16 %v478, %v477
      %v536 = vpack.c.b16 %v480, %v479
      %v537 = vpack.c.b16 %v482, %v481
      %v538 = vpack.c.b16 %v484, %v483
      %v539 = vpack.c.b16 %v486, %v485
      %v540 = vpack.c.b16 %v488, %v487
      %v541 = vpack.c.b16 %v490, %v489
      %v542 = vpack.c.b16 %v492, %v491
      %v543 = vpack.c.b16 %v494, %v493
      %v544 = vpack.c.b16 %v496, %v495
      %v545 = vpack.c.b16 %v498, %v497
      %v546 = vpack.c.b16 %v500, %v499
      %v547 = vpack.c.b16 %v502, %v501
      %v548 = vpack.c.b16 %v504, %v503
      %v549 = vpack.c.b16 %v506, %v505
      %v550 = vpack.c.b16 %v508, %v507
      %v551 = vpack.c.b16 %v510, %v509
      %v552 = vpack.c.b16 %v512, %v511
      %v553 = vpack.c.b16 %v514, %v513
      %v554 = vpack.c.b16 %v516, %v515
      %v555 = vpack.c.b16 %v518, %v517
      %v556 = vpack.c.b16 %v520, %v519
      %v557 = vpack.c.b16 %v522, %v521
      %v558 = vpack.c.b16 %v524, %v523
      %v559 = vpack.c.b16 %v526, %v525
      %v560 = vpack.c.b16 %v528, %v527
      %593 = vmatprep.subr.bf16.mxu0 0
      %594 = vmatpush1.bf16.msra.mxu0 %v529
      %595 = vmatprep.subr.bf16.mxu0 0
      %596 = vmatpush1.bf16.msra.mxu0 %v530
      %597 = vmatprep.subr.bf16.mxu0 0
      %598 = vmatpush1.bf16.msra.mxu0 %v531
      %599 = vmatprep.subr.bf16.mxu0 0
      %600 = vmatpush1.bf16.msra.mxu0 %v532
      %601 = vmatprep.subr.bf16.mxu0 0
      %602 = vmatpush1.bf16.msra.mxu0 %v533
      %603 = vmatprep.subr.bf16.mxu0 0
      %604 = vmatpush1.bf16.msra.mxu0 %v534
      %605 = vmatprep.subr.bf16.mxu0 0
      %606 = vmatpush1.bf16.msra.mxu0 %v535
      %607 = vmatprep.subr.bf16.mxu0 0
      %608 = vmatpush1.bf16.msra.mxu0 %v536
      %609 = vmatprep.subr.bf16.mxu0 0
      %610 = vmatpush1.bf16.msra.mxu0 %v537
      %611 = vmatprep.subr.bf16.mxu0 0
      %612 = vmatpush1.bf16.msra.mxu0 %v538
      %613 = vmatprep.subr.bf16.mxu0 0
      %614 = vmatpush1.bf16.msra.mxu0 %v539
      %615 = vmatprep.subr.bf16.mxu0 0
      %616 = vmatpush1.bf16.msra.mxu0 %v540
      %617 = vmatprep.subr.bf16.mxu0 0
      %618 = vmatpush1.bf16.msra.mxu0 %v541
      %619 = vmatprep.subr.bf16.mxu0 0
      %620 = vmatpush1.bf16.msra.mxu0 %v542
      %621 = vmatprep.subr.bf16.mxu0 0
      %622 = vmatpush1.bf16.msra.mxu0 %v543
      %623 = vmatprep.subr.bf16.mxu0 0
      %624 = vmatpush1.bf16.msra.mxu0 %v544
      %625 = vmatprep.mubr.bf16.mxu0 %v370
      %626 = vmatmul.mubr.bf16.gmra.mrb[0].mxu0 %v369
      %v627 = vpop.f32.mrb[0].mxu0
      %v628 = vadd.f32 %v319, %v627
      %v629 = vpop.f32.mrb[0].mxu0
      %v630 = vpop.f32.mrb[0].mxu0
      %v631 = vadd.f32 %v319, %v630
      %v632 = vpop.f32.mrb[0].mxu0
      %633 = vmatprep.mubr.bf16.mxu0 %v374
      %634 = vmatmul.mubr.bf16.gmra.mrb[0].mxu0 %v373
      %v635 = vpop.f32.mrb[0].mxu0
      %v636 = vadd.f32 %v319, %v635
      %v637 = vpop.f32.mrb[0].mxu0
      %v638 = vpop.f32.mrb[0].mxu0
      %v639 = vadd.f32 %v319, %v638
      %v640 = vpop.f32.mrb[0].mxu0
      %641 = vmatprep.mubr.bf16.mxu0 %v378
      %642 = vmatmul.mubr.bf16.gmra.mrb[0].mxu0 %v377
      %v643 = vpop.f32.mrb[0].mxu0
      %v644 = vadd.f32 %v319, %v643
      %v645 = vpop.f32.mrb[0].mxu0
      %v646 = vpop.f32.mrb[0].mxu0
      %v647 = vadd.f32 %v319, %v646
      %v648 = vpop.f32.mrb[0].mxu0
      %649 = vmatprep.mubr.bf16.mxu0 %v382
      %650 = vmatmul.mubr.bf16.gmra.mrb[0].mxu0 %v381
      %v651 = vpop.f32.mrb[0].mxu0
      %v652 = vadd.f32 %v319, %v651
      %v653 = vpop.f32.mrb[0].mxu0
      %v654 = vpop.f32.mrb[0].mxu0
      %v655 = vadd.f32 %v319, %v654
      %v656 = vpop.f32.mrb[0].mxu0
      %657 = vdwg.mxu0
      %658 = vmatprep.subr.bf16.mxu0 0
      %659 = vmatpush1.bf16.msra.mxu0 %v545
      %660 = vmatprep.subr.bf16.mxu0 0
      %661 = vmatpush1.bf16.msra.mxu0 %v546
      %662 = vmatprep.subr.bf16.mxu0 0
      %663 = vmatpush1.bf16.msra.mxu0 %v547
      %664 = vmatprep.subr.bf16.mxu0 0
      %665 = vmatpush1.bf16.msra.mxu0 %v548
      %666 = vmatprep.subr.bf16.mxu0 0
      %667 = vmatpush1.bf16.msra.mxu0 %v549
      %668 = vmatprep.subr.bf16.mxu0 0
      %669 = vmatpush1.bf16.msra.mxu0 %v550
      %670 = vmatprep.subr.bf16.mxu0 0
      %671 = vmatpush1.bf16.msra.mxu0 %v551
      %672 = vmatprep.subr.bf16.mxu0 0
      %673 = vmatpush1.bf16.msra.mxu0 %v552
      %674 = vmatprep.subr.bf16.mxu0 0
      %675 = vmatpush1.bf16.msra.mxu0 %v553
      %676 = vmatprep.subr.bf16.mxu0 0
      %677 = vmatpush1.bf16.msra.mxu0 %v554
      %678 = vmatprep.subr.bf16.mxu0 0
      %679 = vmatpush1.bf16.msra.mxu0 %v555
      %680 = vmatprep.subr.bf16.mxu0 0
      %681 = vmatpush1.bf16.msra.mxu0 %v556
      %682 = vmatprep.subr.bf16.mxu0 0
      %683 = vmatpush1.bf16.msra.mxu0 %v557
      %684 = vmatprep.subr.bf16.mxu0 0
      %685 = vmatpush1.bf16.msra.mxu0 %v558
      %686 = vmatprep.subr.bf16.mxu0 0
      %687 = vmatpush1.bf16.msra.mxu0 %v559
      %688 = vmatprep.subr.bf16.mxu0 0
      %689 = vmatpush1.bf16.msra.mxu0 %v560
      %690 = vmatprep.mubr.bf16.mxu0 %v372
      %691 = vmatmul.mubr.bf16.gmra.mrb[0].mxu0 %v371
      %v692 = vpop.f32.mrb[0].mxu0
      %v693 = vadd.f32 %v628, %v692
      %v694 = vpop.f32.mrb[0].mxu0
      %v695 = vpop.f32.mrb[0].mxu0
      %v696 = vadd.f32 %v631, %v695
      %v697 = vpop.f32.mrb[0].mxu0
      %698 = vmatprep.mubr.bf16.mxu0 %v376
      %699 = vmatmul.mubr.bf16.gmra.mrb[0].mxu0 %v375
      %v700 = vpop.f32.mrb[0].mxu0
      %v701 = vadd.f32 %v636, %v700
      %v702 = vpop.f32.mrb[0].mxu0
      %v703 = vpop.f32.mrb[0].mxu0
      %v704 = vadd.f32 %v639, %v703
      %v705 = vpop.f32.mrb[0].mxu0
      %706 = vmatprep.mubr.bf16.mxu0 %v380
      %707 = vmatmul.mubr.bf16.gmra.mrb[0].mxu0 %v379
      %v708 = vpop.f32.mrb[0].mxu0
      %v709 = vadd.f32 %v644, %v708
      %v710 = vpop.f32.mrb[0].mxu0
      %v711 = vpop.f32.mrb[0].mxu0
      %v712 = vadd.f32 %v647, %v711
      %v713 = vpop.f32.mrb[0].mxu0
      %714 = vmatprep.mubr.bf16.mxu0 %v384
      %715 = vmatmul.mubr.bf16.gmra.mrb[0].mxu0 %v383
      %v716 = vpop.f32.mrb[0].mxu0
      %v717 = vadd.f32 %v652, %v716
      %v718 = vpop.f32.mrb[0].mxu0
      %v719 = vpop.f32.mrb[0].mxu0
      %v720 = vadd.f32 %v655, %v719
      %v721 = vpop.f32.mrb[0].mxu0
      %722 = vdwg.mxu0
      %v723 = vpack.c.bf16 %v696, %v693
      %v724 = vpack.c.bf16 %v704, %v701
      %v725 = vpack.c.bf16 %v712, %v709
      %v726 = vpack.c.bf16 %v720, %v717
      %v731 = vunpack.c.l.b16 %v723
      %v732 = vunpack.c.h.b16 %v723
      %v733 = vunpack.c.l.b16 %v724
      %v734 = vunpack.c.h.b16 %v724
      %v735 = vunpack.c.l.b16 %v725
      %v736 = vunpack.c.h.b16 %v725
      %v737 = vunpack.c.l.b16 %v726
      %v738 = vunpack.c.h.b16 %v726
      %v739 = vpack.c.b16 %v731, %v731
      %v740 = vpack.c.b16 %v732, %v732
      %v741 = vpack.c.b16 %v733, %v733
      %v742 = vpack.c.b16 %v734, %v734
      %v743 = vpack.c.b16 %v735, %v735
      %v744 = vpack.c.b16 %v736, %v736
      %v745 = vpack.c.b16 %v737, %v737
      %v746 = vpack.c.b16 %v738, %v738
      %vm755 = vcmask 519168
      %756 = vst.msk [vmem:[%s231] sm:$0xf] %vm755, %v739
      %757 = vst.msk [vmem:[%s231 + $0x4] sm:$0xf] %vm755, %v740
      %758 = vst.msk [vmem:[%s231 + $0x8] sm:$0xf] %vm755, %v741
      %759 = vst.msk [vmem:[%s231 + $0xc] sm:$0xf] %vm755, %v742
      %760 = vst.msk [vmem:[%s231 + $0x10] sm:$0xf] %vm755, %v743
      %761 = vst.msk [vmem:[%s231 + $0x14] sm:$0xf] %vm755, %v744
      %762 = vst.msk [vmem:[%s231 + $0x18] sm:$0xf] %vm755, %v745
      %763 = vst.msk [vmem:[%s231 + $0x1c] sm:$0xf] %vm755, %v746
      %s764 = smul.u32 8, %s19
      %p765 = scmp.lt.s32.totalorder %s18, 3
      %s766 = scalar_select %p765, %s18, 3
      %p767 = scmp.lt.s32.totalorder %s764, 7
      %s768 = scalar_select %p767, %s764, 7
      %s769 = smul.addr %s766, 8
      %s770 = sadd.s32 %s768, %s769
      %s771 = smul.addr %s770, 4
      %s772 = scalar_lea.vmem %s3, %s771
      // Predicated region
      $region33: #{generator_forward.4} parent=31 // pred_check
        %p773 = pneg %p121
      $region34: #{generator_forward.4} parent=31 // pred_check_branch
        %775 = sbr.rel (%p773) target = $region36
      $region35: #{generator_forward.4} parent=31 // pred_region
        %s776 = smul.u32 8, %s19
      $region36: #{generator_forward.4} parent=31 // pred_fallthru
        _
    $region32: #{generator_forward.4} parent=5 // pred_fallthru
      _
    %p777 = scmp.le.s32.totalorder 2, %s9
    // Predicated region
    $region37: #{generator_forward.4} parent=5 // pred_check
      %p778 = pneg %p777
    $region38: #{generator_forward.4} parent=5 // pred_check_branch
      %780 = sbr.rel (%p778) target = $region40
    $region39: #{generator_forward.4} parent=5 // pred_region
      %s781 = ssub.s32 %s9, 2
      // Predicated region
      $region41: #{generator_forward.4} parent=39 // pred_check
        %p782 = pneg %p127
      $region42: #{generator_forward.4} parent=39 // pred_check_branch
        %784 = sbr.rel (%p782) target = $region44
      $region43: #{generator_forward.4} parent=39 // pred_region
        %s785 = smul.u32 8, %s21
        %p786 = scmp.lt.s32.totalorder %s20, 3
        %s787 = scalar_select %p786, %s20, 3
        %p788 = scmp.lt.s32.totalorder %s785, 7
        %s789 = scalar_select %p788, %s785, 7
        %s790 = smul.addr %s787, 8
        %s791 = sadd.s32 %s789, %s790
        %s792 = smul.addr %s791, 4
        %s793 = scalar_lea.vmem %s3, %s792
      $region44: #{generator_forward.4} parent=39 // pred_fallthru
        _
    $region40: #{generator_forward.4} parent=5 // pred_fallthru
      _
  $region6: #{generator_forward.4} parent=0 // loop_footer
    %s13 = sadd.s32 1, %s9
  $region7: #{generator_forward.4} parent=0 // loop_footer_branch
    %8 = sbr.rel target = $region3
  $region8: #{generator_forward.4} parent=0 // loop_exit
    _

// kernel: generator_forward.5
$region0: #{generator_forward.5}
  #allocation0 [shape = 'u32[]', space=smem, size = 0x4, offset = 0x4, fixed_abs, tag = 'smem constant byte address 0x4 - core index']
  #allocation1 [shape = 'u32[144,128]{1,0:T(1,128)}', space=vmem, size = 0x12000, scoped, tag = 'internal scratch']
  #allocation2 [shape = 'f32[1,1]{1,0:T(1,128)S(1)}', space=vmem, size = 0x200, scoped, tag = 'scoped memory for generator_forward.5']
  %s0 = inlined_call_operand.vmem [shape: bf16[4,256,256], index: 0, kind: input, shape index: {}]
  %s1 = inlined_call_operand.vmem [shape: bf16[4,1,256], index: 1, kind: input, shape index: {}]
  %s2 = inlined_call_operand.<no memory space> [shape: f32[1,1], index: 2, kind: input, shape index: {}]
  %s3 = inlined_call_operand.vmem [shape: f32[4,1,256], index: 3, kind: output, shape index: {}]
  %s4 = sld [smem:[#allocation0]]
  $region45: #{generator_forward.5} parent=0
    _
  %s6 = ssub.s32 1, %s4
  %s7 = scalar_select 0, %s6, %s4
  %v8 = vstv %s2
  %9 = vst [vmem:[#allocation2] sm:$0x1] %v8
  loop: start=0, step=1, limit=6
  $region2: #{generator_forward.5} parent=0 // loop_pre_header
    _
  $region3: #{generator_forward.5} parent=0 // loop_header
    %s11 = sphi 0, %s15
    %p12 = scmp.ge.s32.totalorder %s11, 6
    %s18 = sphi 0, %s30
    %s19 = sphi 0, %s26
    %s20 = sphi 0, %s18
    %s21 = sphi 0, %s19
    %s22 = sphi 0, %s20
    %s23 = sphi 0, %s21
    %s35 = sphi 0, %s37
    %s38 = sphi 0, %s35
    %s39 = sphi 0, %s38
    %s55 = sphi 0, %s39
    %s61 = sphi 0, %s63
    %s64 = sphi 0, %s61
    %s65 = sphi 0, %s64
    %s81 = sphi 0, %s65
    %s85 = sphi 0, %s85
    %s87 = sphi 0, %s85
    %s88 = sphi 0, %s87
    %s102 = sphi 0, %s88
    %s110 = sphi 0, %s112
    %s113 = sphi 0, %s110
    %s114 = sphi 0, %s113
    %s130 = sphi 0, %s114
  $region4: #{generator_forward.5} parent=0 // loop_header_branch
    %14 = sbr.rel (%p12) target = $region8
  $region5: #{generator_forward.5} parent=0 // loop_body
    %s16 = ssub.s32 %s11, 1
    %s17 = ssub.s32 %s11, 2
    %s24 = sadd.s32 1, %s19
    %p25 = scmp.ge.s32.totalorder %s24, 1
    %s26 = scalar_select %p25, 0, %s24
    %s27 = sadd.s32 1, %s18
    %s28 = scalar_select %p25, %s27, %s18
    %p29 = scmp.ge.s32.totalorder %s28, 4
    %s30 = scalar_select %p29, 0, %s28
    %s31 = ssub.s32 %s18, %s30
    %s32 = ssub.s32 %s19, %s26
    %s33 = sor.u32 %s31, %s32
    %p34 = scmp.eq.s32.totalorder %s33, 0
    %s36 = sadd.s32 %s35, 1
    %s37 = scalar_select %p34, %s35, %s36
    %p40 = pneg %p34
    %p41 = scmp.eq.s32.totalorder %s11, 3
    %p42 = por %p40, %p41
    %p43 = scmp.ne.s32.totalorder %s35, %s38
    %p44 = scmp.eq.s32.totalorder %s11, 0
    %p45 = por %p43, %p44
    %p46 = scmp.ne.s32.totalorder %s35, %s38
    %p47 = scmp.eq.s32.totalorder %s16, 3
    %p48 = por %p46, %p47
    %p49 = scmp.ne.s32.totalorder %s38, %s39
    %p50 = scmp.eq.s32.totalorder %s16, 0
    %p51 = por %p49, %p50
    %p52 = scmp.ne.s32.totalorder %s38, %s39
    %p53 = scmp.eq.s32.totalorder %s17, 3
    %p54 = por %p52, %p53
    %p56 = scmp.ne.s32.totalorder %s39, %s55
    %p57 = scmp.eq.s32.totalorder %s17, 0
    %p58 = por %p56, %p57
    %s59 = ssub.s32 %s18, %s30
    %p60 = scmp.eq.s32.totalorder %s59, 0
    %s62 = sadd.s32 %s61, 1
    %s63 = scalar_select %p60, %s61, %s62
    %p66 = pneg %p60
    %p67 = scmp.eq.s32.totalorder %s11, 3
    %p68 = por %p66, %p67
    %p69 = scmp.ne.s32.totalorder %s61, %s64
    %p70 = scmp.eq.s32.totalorder %s11, 0
    %p71 = por %p69, %p70
    %p72 = scmp.ne.s32.totalorder %s61, %s64
    %p73 = scmp.eq.s32.totalorder %s16, 3
    %p74 = por %p72, %p73
    %p75 = scmp.ne.s32.totalorder %s64, %s65
    %p76 = scmp.eq.s32.totalorder %s16, 0
    %p77 = por %p75, %p76
    %p78 = scmp.ne.s32.totalorder %s64, %s65
    %p79 = scmp.eq.s32.totalorder %s17, 3
    %p80 = por %p78, %p79
    %p82 = scmp.ne.s32.totalorder %s65, %s81
    %p83 = scmp.eq.s32.totalorder %s17, 0
    %p84 = por %p82, %p83
    %s86 = sadd.s32 %s85, 1
    %p89 = scmp.eq.s32.totalorder %s11, 3
    %p90 = scmp.ne.s32.totalorder %s85, %s87
    %p91 = scmp.eq.s32.totalorder %s11, 0
    %p92 = por %p90, %p91
    %p93 = scmp.ne.s32.totalorder %s85, %s87
    %p94 = scmp.eq.s32.totalorder %s16, 3
    %p95 = por %p93, %p94
    %p96 = scmp.ne.s32.totalorder %s87, %s88
    %p97 = scmp.eq.s32.totalorder %s16, 0
    %p98 = por %p96, %p97
    %p99 = scmp.ne.s32.totalorder %s87, %s88
    %p100 = scmp.eq.s32.totalorder %s17, 3
    %p101 = por %p99, %p100
    %p103 = scmp.ne.s32.totalorder %s88, %s102
    %p104 = scmp.eq.s32.totalorder %s17, 0
    %p105 = por %p103, %p104
    %s106 = ssub.s32 %s18, %s30
    %s107 = ssub.s32 %s19, %s26
    %s108 = sor.u32 %s106, %s107
    %p109 = scmp.eq.s32.totalorder %s108, 0
    %s111 = sadd.s32 %s110, 1
    %s112 = scalar_select %p109, %s110, %s111
    %p115 = pneg %p109
    %p116 = scmp.eq.s32.totalorder %s11, 3
    %p117 = por %p115, %p116
    %p118 = scmp.ne.s32.totalorder %s110, %s113
    %p119 = scmp.eq.s32.totalorder %s11, 0
    %p120 = por %p118, %p119
    %p121 = scmp.ne.s32.totalorder %s110, %s113
    %p122 = scmp.eq.s32.totalorder %s16, 3
    %p123 = por %p121, %p122
    %p124 = scmp.ne.s32.totalorder %s113, %s114
    %p125 = scmp.eq.s32.totalorder %s16, 0
    %p126 = por %p124, %p125
    %p127 = scmp.ne.s32.totalorder %s113, %s114
    %p128 = scmp.eq.s32.totalorder %s17, 3
    %p129 = por %p127, %p128
    %p131 = scmp.ne.s32.totalorder %s114, %s130
    %p132 = scmp.eq.s32.totalorder %s17, 0
    %p133 = por %p131, %p132
    %p134 = scmp.le.s32.totalorder 1, %s11
    %p135 = scmp.lt.s32.totalorder %s11, 5
    %p136 = pnand %p134, %p135
    %p137 = pneg %p136
    // Predicated region
    $region9: #{generator_forward.5} parent=5 // pred_check
      _
    $region10: #{generator_forward.5} parent=5 // pred_check_branch
      %139 = sbr.rel (%p136) target = $region12
    $region11: #{generator_forward.5} parent=5 // pred_region
      %s140 = ssub.s32 %s11, 1
      // Predicated region
      $region13: #{generator_forward.5} parent=11 // pred_check
        %p141 = pneg %p98
      $region14: #{generator_forward.5} parent=11 // pred_check_branch
        %143 = sbr.rel (%p141) target = $region16
      $region15: #{generator_forward.5} parent=11 // pred_region
        _
      $region16: #{generator_forward.5} parent=11 // pred_fallthru
        _
    $region12: #{generator_forward.5} parent=5 // pred_fallthru
      _
    %p144 = scmp.lt.s32.totalorder %s11, 4
    // Predicated region
    $region17: #{generator_forward.5} parent=5 // pred_check
      %p145 = pneg %p144
    $region18: #{generator_forward.5} parent=5 // pred_check_branch
      %147 = sbr.rel (%p145) target = $region20
    $region19: #{generator_forward.5} parent=5 // pred_region
      // Predicated region
      $region21: #{generator_forward.5} parent=19 // pred_check
        %p148 = pneg %p45
      $region22: #{generator_forward.5} parent=19 // pred_check_branch
        %150 = sbr.rel (%p148) target = $region24
      $region23: #{generator_forward.5} parent=19 // pred_region
        %s151 = smul.u32 2, %s19
        %p152 = scmp.lt.s32.totalorder %s18, 3
        %s153 = scalar_select %p152, %s18, 3
        %p154 = scmp.lt.s32.totalorder %s151, 1
        %s155 = scalar_select %p154, %s151, 1
        %s156 = smul.addr %s153, 64
        %s157 = sadd.s32 %s155, %s156
        %s158 = smul.addr %s157, 4
        %s159 = scalar_lea.vmem %s0, %s158
        %s160 = smul.u32 2, %s19
      $region24: #{generator_forward.5} parent=19 // pred_fallthru
        _
      // Predicated region
      $region25: #{generator_forward.5} parent=19 // pred_check
        %p161 = pneg %p71
      $region26: #{generator_forward.5} parent=19 // pred_check_branch
        %163 = sbr.rel (%p161) target = $region28
      $region27: #{generator_forward.5} parent=19 // pred_region
        %p164 = scmp.lt.s32.totalorder %s18, 3
        %s165 = scalar_select %p164, %s18, 3
        %s166 = smul.addr %s165, 2
        %s167 = scalar_lea.vmem %s1, %s166
      $region28: #{generator_forward.5} parent=19 // pred_fallthru
        _
    $region20: #{generator_forward.5} parent=5 // pred_fallthru
      _
    %p168 = scmp.le.s32.totalorder 1, %s11
    %p169 = scmp.lt.s32.totalorder %s11, 5
    %p170 = pnand %p168, %p169
    %p171 = pneg %p170
    // Predicated region
    $region29: #{generator_forward.5} parent=5 // pred_check
      _
    $region30: #{generator_forward.5} parent=5 // pred_check_branch
      %173 = sbr.rel (%p170) target = $region32
    $region31: #{generator_forward.5} parent=5 // pred_region
      %s174 = ssub.s32 %s11, 1
      %s175 = smul.u32 2, %s21
      %p176 = scmp.lt.s32.totalorder %s20, 3
      %s177 = scalar_select %p176, %s20, 3
      %p178 = scmp.lt.s32.totalorder %s175, 1
      %s179 = scalar_select %p178, %s175, 1
      %s180 = smul.addr %s177, 64
      %s181 = sadd.s32 %s179, %s180
      %s182 = smul.addr %s181, 4
      %s183 = scalar_lea.vmem %s0, %s182
      %p184 = pneg %p51
      %p185 = pneg %p48
      %p186 = scmp.lt.s32.totalorder %s20, 3
      %s187 = scalar_select %p186, %s20, 3
      %s188 = smul.addr %s187, 2
      %s189 = scalar_lea.vmem %s1, %s188
      %p190 = pneg %p77
      %p191 = pneg %p74
      %p192 = pneg %p98
      %p193 = pneg %p95
      %p194 = pneg %p126
      %p195 = pneg %p123
      %s196 = smul.u32 2, %s21
      %p197 = scmp.lt.s32.totalorder %s20, 3
      %s198 = scalar_select %p197, %s20, 3
      %p199 = scmp.lt.s32.totalorder %s196, 1
      %s200 = scalar_select %p199, %s196, 1
      %s201 = smul.addr %s198, 2
      %s202 = sadd.s32 %s200, %s201
      %s203 = scalar_lea.vmem %s3, %s202
      %s204 = smul.u32 2, %s21
      %p205 = scmp.lt.s32.totalorder %s20, 3
      %s206 = scalar_select %p205, %s20, 3
      %p207 = scmp.lt.s32.totalorder %s204, 1
      %s208 = scalar_select %p207, %s204, 1
      %s209 = smul.addr %s206, 64
      %s210 = sadd.s32 %s208, %s209
      %s211 = smul.addr %s210, 4
      %s212 = scalar_lea.vmem %s0, %s211
      %s213 = smul.u32 2, %s21
      %p214 = scmp.lt.s32.totalorder %s20, 3
      %s215 = scalar_select %p214, %s20, 3
      %s216 = smul.addr %s215, 2
      %s217 = scalar_lea.vmem %s1, %s216
      %s218 = smul.u32 2, %s21
      %p219 = scmp.lt.s32.totalorder %s20, 3
      %s220 = scalar_select %p219, %s20, 3
      %p221 = scmp.lt.s32.totalorder %s218, 1
      %s222 = scalar_select %p221, %s218, 1
      %s223 = smul.addr %s220, 2
      %s224 = sadd.s32 %s222, %s223
      %s225 = scalar_lea.vmem %s3, %s224
      %s226 = smul.u32 2, %s21
      %v227 = vld [vmem:[%s217] sm:$0x3]
      %v228 = vld [vmem:[%s212] sm:$0xff]
      %v229 = vld [vmem:[%s212 + $0x8] sm:$0xff]
      %v230 = vld [vmem:[%s212 + $0x10] sm:$0xff]
      %v231 = vld [vmem:[%s212 + $0x18] sm:$0xff]
      %v232 = vld [vmem:[%s212 + $0x20] sm:$0xff]
      %v233 = vld [vmem:[%s212 + $0x28] sm:$0xff]
      %v234 = vld [vmem:[%s212 + $0x30] sm:$0xff]
      %v235 = vld [vmem:[%s212 + $0x38] sm:$0xff]
      %v236 = vld [vmem:[%s212 + $0x40] sm:$0xff]
      %v237 = vld [vmem:[%s212 + $0x48] sm:$0xff]
      %v238 = vld [vmem:[%s212 + $0x50] sm:$0xff]
      %v239 = vld [vmem:[%s212 + $0x58] sm:$0xff]
      %v240 = vld [vmem:[%s212 + $0x60] sm:$0xff]
      %v241 = vld [vmem:[%s212 + $0x68] sm:$0xff]
      %v242 = vld [vmem:[%s212 + $0x70] sm:$0xff]
      %v243 = vld [vmem:[%s212 + $0x78] sm:$0xff]
      %v244 = vld [vmem:[%s212 + $0x80] sm:$0xff]
      %v245 = vld [vmem:[%s212 + $0x88] sm:$0xff]
      %v246 = vld [vmem:[%s212 + $0x90] sm:$0xff]
      %v247 = vld [vmem:[%s212 + $0x98] sm:$0xff]
      %v248 = vld [vmem:[%s212 + $0xa0] sm:$0xff]
      %v249 = vld [vmem:[%s212 + $0xa8] sm:$0xff]
      %v250 = vld [vmem:[%s212 + $0xb0] sm:$0xff]
      %v251 = vld [vmem:[%s212 + $0xb8] sm:$0xff]
      %v252 = vld [vmem:[%s212 + $0xc0] sm:$0xff]
      %v253 = vld [vmem:[%s212 + $0xc8] sm:$0xff]
      %v254 = vld [vmem:[%s212 + $0xd0] sm:$0xff]
      %v255 = vld [vmem:[%s212 + $0xd8] sm:$0xff]
      %v256 = vld [vmem:[%s212 + $0xe0] sm:$0xff]
      %v257 = vld [vmem:[%s212 + $0xe8] sm:$0xff]
      %v258 = vld [vmem:[%s212 + $0xf0] sm:$0xff]
      %v259 = vld [vmem:[%s212 + $0xf8] sm:$0xff]
      %v260 = vld [vmem:[#allocation2] sm:$0x1]
      %262 = vset.pattern.permute.xlu0 0
      %263 = vperm.xlu0 %262, %v260
      %v264 = vpop.permute.xlu0 %263
      %v266 = vlaneseq
      %v267 = vshrl.u32 %v266, 7
      %v268 = vsub.s32 0, %v267
      %v269 = vrot.slane %v264, %v268
      %v272 = vunpack.c.l.s4 1966171168
      %v273 = vunpack.c.0.s8 %v272
      %v274 = vlaneseq
      %v275 = vshrl.u32 %v274, 7
      %v276 = vsub.s32 %v273, %v275
      %v277 = vrot.slane %v227, %v276
      %v278 = vcombine.high %v277, %v277
      %v280 = vunpack.c.l.s4 1966171168
      %v281 = vunpack.c.0.s8 %v280
      %v282 = vlaneseq
      %v283 = vshrl.u32 %v282, 7
      %v284 = vsub.s32 %v281, %v283
      %v285 = vrot.slane %v277, %v284
      %v287 = vunpack.c.l.s4 1966171168
      %v288 = vunpack.c.0.s8 %v287
      %v289 = vlaneseq
      %v290 = vshrl.u32 %v289, 7
      %v291 = vsub.s32 %v288, %v290
      %v292 = vrot.slane %v278, %v291
      %v327 = vunpack.c.l.b16 %v228
      %v328 = vunpack.c.h.b16 %v228
      %v329 = vunpack.c.l.b16 %v229
      %v330 = vunpack.c.h.b16 %v229
      %v331 = vunpack.c.l.b16 %v230
      %v332 = vunpack.c.h.b16 %v230
      %v333 = vunpack.c.l.b16 %v231
      %v334 = vunpack.c.h.b16 %v231
      %v335 = vunpack.c.l.b16 %v232
      %v336 = vunpack.c.h.b16 %v232
      %v337 = vunpack.c.l.b16 %v233
      %v338 = vunpack.c.h.b16 %v233
      %v339 = vunpack.c.l.b16 %v234
      %v340 = vunpack.c.h.b16 %v234
      %v341 = vunpack.c.l.b16 %v235
      %v342 = vunpack.c.h.b16 %v235
      %v343 = vunpack.c.l.b16 %v236
      %v344 = vunpack.c.h.b16 %v236
      %v345 = vunpack.c.l.b16 %v237
      %v346 = vunpack.c.h.b16 %v237
      %v347 = vunpack.c.l.b16 %v238
      %v348 = vunpack.c.h.b16 %v238
      %v349 = vunpack.c.l.b16 %v239
      %v350 = vunpack.c.h.b16 %v239
      %v351 = vunpack.c.l.b16 %v240
      %v352 = vunpack.c.h.b16 %v240
      %v353 = vunpack.c.l.b16 %v241
      %v354 = vunpack.c.h.b16 %v241
      %v355 = vunpack.c.l.b16 %v242
      %v356 = vunpack.c.h.b16 %v242
      %v357 = vunpack.c.l.b16 %v243
      %v358 = vunpack.c.h.b16 %v243
      %v359 = vunpack.c.l.b16 %v244
      %v360 = vunpack.c.h.b16 %v244
      %v361 = vunpack.c.l.b16 %v245
      %v362 = vunpack.c.h.b16 %v245
      %v363 = vunpack.c.l.b16 %v246
      %v364 = vunpack.c.h.b16 %v246
      %v365 = vunpack.c.l.b16 %v247
      %v366 = vunpack.c.h.b16 %v247
      %v367 = vunpack.c.l.b16 %v248
      %v368 = vunpack.c.h.b16 %v248
      %v369 = vunpack.c.l.b16 %v249
      %v370 = vunpack.c.h.b16 %v249
      %v371 = vunpack.c.l.b16 %v250
      %v372 = vunpack.c.h.b16 %v250
      %v373 = vunpack.c.l.b16 %v251
      %v374 = vunpack.c.h.b16 %v251
      %v375 = vunpack.c.l.b16 %v252
      %v376 = vunpack.c.h.b16 %v252
      %v377 = vunpack.c.l.b16 %v253
      %v378 = vunpack.c.h.b16 %v253
      %v379 = vunpack.c.l.b16 %v254
      %v380 = vunpack.c.h.b16 %v254
      %v381 = vunpack.c.l.b16 %v255
      %v382 = vunpack.c.h.b16 %v255
      %v383 = vunpack.c.l.b16 %v256
      %v384 = vunpack.c.h.b16 %v256
      %v385 = vunpack.c.l.b16 %v257
      %v386 = vunpack.c.h.b16 %v257
      %v387 = vunpack.c.l.b16 %v258
      %v388 = vunpack.c.h.b16 %v258
      %v389 = vunpack.c.l.b16 %v259
      %v390 = vunpack.c.h.b16 %v259
      %v391 = vpack.c.b16 %v329, %v327
      %v392 = vpack.c.b16 %v330, %v328
      %v393 = vpack.c.b16 %v333, %v331
      %v394 = vpack.c.b16 %v334, %v332
      %v395 = vpack.c.b16 %v337, %v335
      %v396 = vpack.c.b16 %v338, %v336
      %v397 = vpack.c.b16 %v341, %v339
      %v398 = vpack.c.b16 %v342, %v340
      %v399 = vpack.c.b16 %v345, %v343
      %v400 = vpack.c.b16 %v346, %v344
      %v401 = vpack.c.b16 %v349, %v347
      %v402 = vpack.c.b16 %v350, %v348
      %v403 = vpack.c.b16 %v353, %v351
      %v404 = vpack.c.b16 %v354, %v352
      %v405 = vpack.c.b16 %v357, %v355
      %v406 = vpack.c.b16 %v358, %v356
      %v407 = vpack.c.b16 %v361, %v359
      %v408 = vpack.c.b16 %v362, %v360
      %v409 = vpack.c.b16 %v365, %v363
      %v410 = vpack.c.b16 %v366, %v364
      %v411 = vpack.c.b16 %v369, %v367
      %v412 = vpack.c.b16 %v370, %v368
      %v413 = vpack.c.b16 %v373, %v371
      %v414 = vpack.c.b16 %v374, %v372
      %v415 = vpack.c.b16 %v377, %v375
      %v416 = vpack.c.b16 %v378, %v376
      %v417 = vpack.c.b16 %v381, %v379
      %v418 = vpack.c.b16 %v382, %v380
      %v419 = vpack.c.b16 %v385, %v383
      %v420 = vpack.c.b16 %v386, %v384
      %v421 = vpack.c.b16 %v389, %v387
      %v422 = vpack.c.b16 %v390, %v388
      %455 = vmatprep.subr.bf16.mxu0 %v392
      %456 = vmatpush1.bf16.msra.mxu0 %v391
      %457 = vmatprep.subr.bf16.mxu0 %v394
      %458 = vmatpush1.bf16.msra.mxu0 %v393
      %459 = vmatprep.subr.bf16.mxu0 %v396
      %460 = vmatpush1.bf16.msra.mxu0 %v395
      %461 = vmatprep.subr.bf16.mxu0 %v398
      %462 = vmatpush1.bf16.msra.mxu0 %v397
      %463 = vmatprep.subr.bf16.mxu0 %v400
      %464 = vmatpush1.bf16.msra.mxu0 %v399
      %465 = vmatprep.subr.bf16.mxu0 %v402
      %466 = vmatpush1.bf16.msra.mxu0 %v401
      %467 = vmatprep.subr.bf16.mxu0 %v404
      %468 = vmatpush1.bf16.msra.mxu0 %v403
      %469 = vmatprep.subr.bf16.mxu0 %v406
      %470 = vmatpush1.bf16.msra.mxu0 %v405
      %471 = vmatprep.subr.bf16.mxu0 %v408
      %472 = vmatpush1.bf16.msra.mxu0 %v407
      %473 = vmatprep.subr.bf16.mxu0 %v410
      %474 = vmatpush1.bf16.msra.mxu0 %v409
      %475 = vmatprep.subr.bf16.mxu0 %v412
      %476 = vmatpush1.bf16.msra.mxu0 %v411
      %477 = vmatprep.subr.bf16.mxu0 %v414
      %478 = vmatpush1.bf16.msra.mxu0 %v413
      %479 = vmatprep.subr.bf16.mxu0 %v416
      %480 = vmatpush1.bf16.msra.mxu0 %v415
      %481 = vmatprep.subr.bf16.mxu0 %v418
      %482 = vmatpush1.bf16.msra.mxu0 %v417
      %483 = vmatprep.subr.bf16.mxu0 %v420
      %484 = vmatpush1.bf16.msra.mxu0 %v419
      %485 = vmatprep.subr.bf16.mxu0 %v422
      %486 = vmatpush1.bf16.msra.mxu0 %v421
      %487 = vmatprep.mubr.bf16.mxu0 %v292
      %488 = vmatmul.mubr.bf16.gmra.mrb[0].mxu0 %v285
      %v489 = vpop.f32.mrb[0].mxu0
      %v490 = vadd.f32 %v269, %v489
      %v491 = vpop.f32.mrb[0].mxu0
      %v492 = vadd.f32 %v269, %v491
      %v493 = vpop.f32.mrb[0].mxu0
      %v494 = vpop.f32.mrb[0].mxu0
      %495 = vdwg.mxu0
      %v496 = vtanh.pop %v490
      %v497 = vtanh.pop %v492
      %v500 = vcombine.low %v496, %v497
      %v502 = vunpack.c.l.s4 1966171168
      %v503 = vunpack.c.0.s8 %v502
      %v504 = vlaneseq
      %v505 = vshrl.u32 %v504, 7
      %v506 = vsub.s32 %v503, %v505
      %v507 = vrot.slane %v500, %v506
      %v509 = vunpack.c.l.s4 1966171168
      %v510 = vunpack.c.0.s8 %v509
      %v511 = vlaneseq
      %v512 = vshrl.u32 %v511, 7
      %v513 = vsub.s32 %v510, %v512
      %v514 = vrot.slane %v507, %v513
      %v516 = vlaneseq
      %vm517 = vcmp.ge.s32.totalorder %v516, 0
      %vm518 = vcmp.lt.s32.totalorder %v516, 256
      %vm519 = vmand %vm517, %vm518
      %520 = vst.msk [vmem:[%s225] sm:$0x3] %vm519, %v514
      %s521 = smul.u32 2, %s21
      %p522 = scmp.lt.s32.totalorder %s20, 3
      %s523 = scalar_select %p522, %s20, 3
      %p524 = scmp.lt.s32.totalorder %s521, 1
      %s525 = scalar_select %p524, %s521, 1
      %s526 = smul.addr %s523, 2
      %s527 = sadd.s32 %s525, %s526
      %s528 = scalar_lea.vmem %s3, %s527
      // Predicated region
      $region33: #{generator_forward.5} parent=31 // pred_check
        %p529 = pneg %p123
      $region34: #{generator_forward.5} parent=31 // pred_check_branch
        %531 = sbr.rel (%p529) target = $region36
      $region35: #{generator_forward.5} parent=31 // pred_region
        %s532 = smul.u32 2, %s21
      $region36: #{generator_forward.5} parent=31 // pred_fallthru
        _
    $region32: #{generator_forward.5} parent=5 // pred_fallthru
      _
    %p533 = scmp.le.s32.totalorder 2, %s11
    // Predicated region
    $region37: #{generator_forward.5} parent=5 // pred_check
      %p534 = pneg %p533
    $region38: #{generator_forward.5} parent=5 // pred_check_branch
      %536 = sbr.rel (%p534) target = $region40
    $region39: #{generator_forward.5} parent=5 // pred_region
      %s537 = ssub.s32 %s11, 2
      // Predicated region
      $region41: #{generator_forward.5} parent=39 // pred_check
        %p538 = pneg %p129
      $region42: #{generator_forward.5} parent=39 // pred_check_branch
        %540 = sbr.rel (%p538) target = $region44
      $region43: #{generator_forward.5} parent=39 // pred_region
        %s541 = smul.u32 2, %s23
        %p542 = scmp.lt.s32.totalorder %s22, 3
        %s543 = scalar_select %p542, %s22, 3
        %p544 = scmp.lt.s32.totalorder %s541, 1
        %s545 = scalar_select %p544, %s541, 1
        %s546 = smul.addr %s543, 2
        %s547 = sadd.s32 %s545, %s546
        %s548 = scalar_lea.vmem %s3, %s547
      $region44: #{generator_forward.5} parent=39 // pred_fallthru
        _
    $region40: #{generator_forward.5} parent=5 // pred_fallthru
      _
  $region6: #{generator_forward.5} parent=0 // loop_footer
    %s15 = sadd.s32 1, %s11
  $region7: #{generator_forward.5} parent=0 // loop_footer_branch
    %10 = sbr.rel target = $region3
  $region8: #{generator_forward.5} parent=0 // loop_exit
    _

</llo_original>
